<compile_context>
chip_gen: v5e
topology: v5e:2x2
jax: 0.10.0
libtpu: 0.0.40
codegen_flags: <defaults>
</compile_context>

<pallas_src>
import math

import jax
import jax.numpy as jnp
from jax import lax
from jax.experimental import pallas as pl
from jax.experimental.pallas import tpu as pltpu

W_DTYPE = jnp.bfloat16   # MXU operand dtype (accumulation stays f32)
LANE = 128
NEG_INF = -1e9


def _round_up(x, m):
    return ((x + m - 1) // m) * m


# ----------------------------- in-kernel helpers -----------------------------

def _rms(x):
    """T5 LayerNorm without the weight (weight is folded into the next matmul)."""
    var = jnp.mean(x * x, axis=-1, keepdims=True)
    return x * lax.rsqrt(var + 1e-6)


def _softmax(s):
    """Exact row softmax (exact normalization keeps greedy argmax parity)."""
    s = s - jnp.max(s, axis=-1, keepdims=True)
    p = jnp.exp(s)
    return p / jnp.sum(p, axis=-1, keepdims=True)


def _mm(a, w):
    """bf16 x bf16 MXU matmul with f32 accumulation (w is pre-cast to bf16)."""
    return jnp.dot(a.astype(W_DTYPE), w, preferred_element_type=jnp.float32)


# ----------------------------- encoder kernel -----------------------------
# All encoder layers + final RMSNorm + cross-attention K/V projections fused.
# Grid over batch ("parallel") -> per-program shapes have no batch dim.

def _make_encoder_kernel(cfg, Lsrc):
    D, H, dk, nL = cfg["d_model"], cfg["n_heads"], cfg["d_kv"], cfg["n_layers"]
    inner = H * dk

    def heads_attn(q_all, k_all, v_all, bias):
        outs = []
        for h in range(H):
            q = q_all[:, h * dk:(h + 1) * dk]
            k = k_all[:, h * dk:(h + 1) * dk]
            v = v_all[:, h * dk:(h + 1) * dk]
            s = jnp.einsum('qd,kd->qk', q.astype(W_DTYPE), k.astype(W_DTYPE),
                           preferred_element_type=jnp.float32)
            s = s + bias[h]                       # T5: no 1/sqrt(d); additive rel-pos bias
            p = _softmax(s)
            outs.append(jnp.einsum('qk,kd->qd', p.astype(W_DTYPE), v.astype(W_DTYPE),
                                   preferred_element_type=jnp.float32))
        return jnp.concatenate(outs, axis=-1)      # (Lsrc, inner) -> single O-proj matmul

    def kernel(x_ref, bias_ref, wqkv_ref, wo_ref, wi_ref, wof_ref, wckv_ref, ckv_ref):
        x = x_ref[...].reshape(Lsrc, D)            # squeeze leading batch-1
        bias = bias_ref[...]
        for li in range(nL):
            qkv = _mm(_rms(x), wqkv_ref[li])       # ln1 folded into wqkv
            o = heads_attn(qkv[:, :inner], qkv[:, inner:2 * inner],
                           qkv[:, 2 * inner:3 * inner], bias)
            x = x + _mm(o, wo_ref[li])
            hid = jnp.maximum(_mm(_rms(x), wi_ref[li]), 0.0)   # ln2 folded into wi; ReLU FF
            x = x + _mm(hid, wof_ref[li])
        nf = _rms(x)                               # encoder final LN folded into wckv
        for li in range(nL):
            ckv_ref[li] = _mm(nf, wckv_ref[li])[None]          # (1, Lsrc, 2*inner)

    return kernel


def encoder_call(x_emb, enc_bias, prep, cfg):
    B, Lsrc, D = x_emb.shape
    nL, H, dk = cfg["n_layers"], cfg["n_heads"], cfg["d_kv"]
    inner = H * dk
    full = lambda a: pl.BlockSpec(a.shape, lambda b, _nd=a.ndim: (0,) * _nd)
    return pl.pallas_call(
        _make_encoder_kernel(cfg, Lsrc),
        out_shape=jax.ShapeDtypeStruct((nL, B, Lsrc, 2 * inner), jnp.float32),
        grid_spec=pltpu.PrefetchScalarGridSpec(
            num_scalar_prefetch=0,
            grid=(B,),
            in_specs=[
                pl.BlockSpec((1, Lsrc, D), lambda b: (b, 0, 0)),
                full(enc_bias),
                full(prep["enc_wqkv"]), full(prep["enc_wo"]),
                full(prep["enc_wi"]), full(prep["enc_wof"]),
                full(prep["wckv"]),
            ],
            out_specs=pl.BlockSpec((nL, 1, Lsrc, 2 * inner), lambda b: (0, b, 0, 0)),
        ),
        compiler_params=pltpu.CompilerParams(dimension_semantics=("parallel",)),
    )(x_emb, enc_bias, prep["enc_wqkv"], prep["enc_wo"],
      prep["enc_wi"], prep["enc_wof"], prep["wckv"])


# ----------------------------- fused greedy-decode kernel -----------------------------
# grid=(Ldec,) "arbitrary".  Each step: all decoder layers + lm_head + argmax +
# next-token embedding; the embedded prefix lives in a persistent VMEM scratch.

def _make_decode_kernel(cfg, B, Lsrc):
    D, H, dk, nL = cfg["d_model"], cfg["n_heads"], cfg["d_kv"], cfg["n_layers"]
    inner = H * dk
    Ldec = cfg["max_len_sent"]
    v_pad = _round_up(cfg["dec_vocab"], LANE)
    start_id = cfg["start_id"]

    def mha(q_all, kv, bias):
        """q_all:(B*Ldec, inner) f32; kv:(B, Lk, 2*inner) f32; bias:(H,Ldec,Lk)|None."""
        outs = []
        for h in range(H):
            q = q_all[:, h * dk:(h + 1) * dk].reshape(B, Ldec, dk)
            k = kv[:, :, h * dk:(h + 1) * dk]
            v = kv[:, :, inner + h * dk: inner + (h + 1) * dk]
            s = jnp.einsum('bqd,bkd->bqk', q.astype(W_DTYPE), k.astype(W_DTYPE),
                           preferred_element_type=jnp.float32)
            if bias is not None:
                s = s + bias[h][None]
            p = _softmax(s)
            o = jnp.einsum('bqk,bkd->bqd', p.astype(W_DTYPE), v.astype(W_DTYPE),
                           preferred_element_type=jnp.float32)
            outs.append(o.reshape(B * Ldec, dk))
        return jnp.concatenate(outs, axis=-1)      # (B*Ldec, inner)

    def kernel(bias_ref, ckv_ref, emb_ref, wqkv_ref, wos_ref, wqc_ref, woc_ref,
               wi_ref, wof_ref, lmw_ref, lmb_ref, distr_ref, pred_ref, xd_ref):
        s = pl.program_id(0)

        @pl.when(s == 0)
        def _init():
            xd_ref[...] = jnp.zeros_like(xd_ref)
            for b in range(B):                     # position 0 = start-token embedding
                xd_ref[pl.ds(b * Ldec, 1), :] = emb_ref[pl.ds(start_id, 1), :]

        bias = bias_ref[...]
        x = xd_ref[...]                            # (B*Ldec, D) embedded prefix (padded)
        for li in range(nL):
            # causal self-attention (rel-pos + causal mask baked into `bias`)
            qkv = _mm(_rms(x), wqkv_ref[li])       # ln1 folded
            kv_self = jnp.concatenate(
                [qkv[:, inner:2 * inner].reshape(B, Ldec, inner),
                 qkv[:, 2 * inner:3 * inner].reshape(B, Ldec, inner)], axis=-1)
            o = mha(qkv[:, :inner], kv_self, bias)
            x = x + _mm(o, wos_ref[li])
            # cross-attention on pre-projected encoder K/V (no bias in T5 cross-attn)
            qc = _mm(_rms(x), wqc_ref[li])         # ln2 folded
            o = mha(qc, ckv_ref[li], None)
            x = x + _mm(o, woc_ref[li])
            # feed-forward (ReLU)
            hid = jnp.maximum(_mm(_rms(x), wi_ref[li]), 0.0)   # ln3 folded
            x = x + _mm(hid, wof_ref[li])

        # select decode position s for every batch row via a 0/1 selector matmul
        row = lax.broadcasted_iota(jnp.int32, (B, B * Ldec), 0)
        col = lax.broadcasted_iota(jnp.int32, (B, B * Ldec), 1)
        sel = (col == row * Ldec + s).astype(jnp.float32)
        h_last = jnp.dot(sel, x, preferred_element_type=jnp.float32)        # (B, D)

        # decoder final RMSNorm (+ d_model**-0.5 rescale) folded into lm_w
        logits = _mm(_rms(h_last), lmw_ref[...]) + lmb_ref[...]             # (B, v_pad)
        distr_ref[...] = logits[None]                                       # lane-dense store

        # greedy argmax over lanes (padded vocab lanes sit at -1e9 via lm_b)
        lane = lax.broadcasted_iota(jnp.int32, (B, v_pad), 1)
        mx = jnp.max(logits, axis=-1, keepdims=True)
        tok = jnp.min(jnp.where(logits == mx, lane, v_pad), axis=-1, keepdims=True)
        pred_ref[...] = tok.reshape(1, B, 1)

        # append next token's embedding to the running prefix (one-hot gather on MXU)
        @pl.when(s + 1 < Ldec)
        def _advance():
            onehot = (lane == tok).astype(jnp.float32)                      # (B, v_pad)
            nxt = jnp.dot(onehot, emb_ref[...], preferred_element_type=jnp.float32)
            for b in range(B):
                xd_ref[pl.ds(b * Ldec + s + 1, 1), :] = nxt[b:b + 1, :]

    return kernel


def decode_call(ckv, self_bias, prep, cfg, B, Lsrc):
    D = cfg["d_model"]
    Ldec = cfg["max_len_sent"]
    v_pad = prep["lm_w"].shape[1]
    full = lambda a: pl.BlockSpec(a.shape, lambda s, _nd=a.ndim: (0,) * _nd)
    args = (self_bias, ckv, prep["dec_embed_pad"],
            prep["dec_wqkv"], prep["dec_wos"], prep["dec_wqc"], prep["dec_woc"],
            prep["dec_wi"], prep["dec_wof"], prep["lm_w"], prep["lm_b"])
    distr, pred = pl.pallas_call(
        _make_decode_kernel(cfg, B, Lsrc),
        out_shape=(jax.ShapeDtypeStruct((Ldec, B, v_pad), jnp.float32),
                   jax.ShapeDtypeStruct((Ldec, B, 1), jnp.int32)),
        grid_spec=pltpu.PrefetchScalarGridSpec(
            num_scalar_prefetch=0,
            grid=(Ldec,),
            in_specs=[full(a) for a in args],
            out_specs=[pl.BlockSpec((1, B, v_pad), lambda s: (s, 0, 0)),
                       pl.BlockSpec((1, B, 1), lambda s: (s, 0, 0))],
            scratch_shapes=[pltpu.VMEM((B * Ldec, D), jnp.float32)],
        ),
        compiler_params=pltpu.CompilerParams(dimension_semantics=("arbitrary",)),
    )(*args)
    return distr, pred


# ----------------------------- model configuration -----------------------------

CFG = dict(
    enc_vocab=50, dec_vocab=40,
    d_model=32, d_kv=16, n_heads=2, d_ff=64, n_layers=1,
    num_buckets=32, max_distance=128,
    max_len_sent=4, start_id=1,
)


def _dense(key, shape, scale=0.05):
    return scale * jax.random.normal(key, shape, dtype=jnp.float32)


def init_params(key, cfg):
    d, dk, h, dff = cfg["d_model"], cfg["d_kv"], cfg["n_heads"], cfg["d_ff"]
    inner = h * dk
    keys = iter(jax.random.split(key, 256))
    p = {
        "enc_embed": _dense(next(keys), (cfg["enc_vocab"], d)),   # resized encoder embedding
        "dec_embed": _dense(next(keys), (cfg["dec_vocab"], d)),   # new decoder input embedding
        "lm_w": _dense(next(keys), (d, cfg["dec_vocab"])),        # new output Linear (with bias)
        "lm_b": _dense(next(keys), (cfg["dec_vocab"],)),
        "enc_final_ln": jnp.ones((d,), jnp.float32),
        "dec_final_ln": jnp.ones((d,), jnp.float32),
        "enc_layers": [],
        "dec_layers": [],
    }
    for li in range(cfg["n_layers"]):
        layer = {
            "ln1": jnp.ones((d,), jnp.float32),
            "q": _dense(next(keys), (d, inner)), "k": _dense(next(keys), (d, inner)),
            "v": _dense(next(keys), (d, inner)), "o": _dense(next(keys), (inner, d)),
            "ln2": jnp.ones((d,), jnp.float32),
            "wi": _dense(next(keys), (d, dff)), "wo": _dense(next(keys), (dff, d)),
        }
        if li == 0:
            layer["rel_bias"] = _dense(next(keys), (cfg["num_buckets"], h))
        p["enc_layers"].append(layer)
    for li in range(cfg["n_layers"]):
        layer = {
            "ln1": jnp.ones((d,), jnp.float32),
            "sq": _dense(next(keys), (d, inner)), "sk": _dense(next(keys), (d, inner)),
            "sv": _dense(next(keys), (d, inner)), "so": _dense(next(keys), (inner, d)),
            "ln2": jnp.ones((d,), jnp.float32),
            "cq": _dense(next(keys), (d, inner)), "ck": _dense(next(keys), (d, inner)),
            "cv": _dense(next(keys), (d, inner)), "co": _dense(next(keys), (inner, d)),
            "ln3": jnp.ones((d,), jnp.float32),
            "wi": _dense(next(keys), (d, dff)), "wo": _dense(next(keys), (dff, d)),
        }
        if li == 0:
            layer["rel_bias"] = _dense(next(keys), (cfg["num_buckets"], h))
        p["dec_layers"].append(layer)
    return p


def prepare_params(p, cfg):
    """One-time weight prep: QKV concat, LN folding, 128-lane padding, bf16 cast."""
    d, h, dk, dff = cfg["d_model"], cfg["n_heads"], cfg["d_kv"], cfg["d_ff"]
    inner = h * dk
    dff_pad = _round_up(dff, LANE)
    qkv_pad = _round_up(3 * inner, LANE)
    v_pad = _round_up(cfg["dec_vocab"], LANE)
    # TODO(synk): at real T5 sizes (d_model>=512, vocab~32k) tile lm_head/d_ff over the
    # N dimension with a BlockSpec grid (256-multiple tiles) and vmem_limit_bytes for
    # v7x's 64 MiB VMEM; the fully-resident layout here is sized for this toy config.

    def pad_cols(w, n): return jnp.pad(w, ((0, 0), (0, n - w.shape[1])))
    def pad_rows(w, n): return jnp.pad(w, ((0, n - w.shape[0]), (0, 0)))
    def fold(ln, w): return ln[:, None] * w          # fold RMSNorm weight into next matmul

    enc_wqkv, enc_wo, enc_wi, enc_wof = [], [], [], []
    for l in p["enc_layers"]:
        wqkv = jnp.concatenate([l["q"], l["k"], l["v"]], axis=1)
        enc_wqkv.append(pad_cols(fold(l["ln1"], wqkv), qkv_pad))
        enc_wo.append(l["o"])
        enc_wi.append(pad_cols(fold(l["ln2"], l["wi"]), dff_pad))
        enc_wof.append(pad_rows(l["wo"], dff_pad))

    dec_wqkv, dec_wos, dec_wqc, dec_woc, dec_wi, dec_wof, wckv = [], [], [], [], [], [], []
    for l in p["dec_layers"]:
        wqkv = jnp.concatenate([l["sq"], l["sk"], l["sv"]], axis=1)
        dec_wqkv.append(pad_cols(fold(l["ln1"], wqkv), qkv_pad))
        dec_wos.append(l["so"])
        dec_wqc.append(fold(l["ln2"], l["cq"]))
        dec_woc.append(l["co"])
        dec_wi.append(pad_cols(fold(l["ln3"], l["wi"]), dff_pad))
        dec_wof.append(pad_rows(l["wo"], dff_pad))
        wckv.append(fold(p["enc_final_ln"],
                         jnp.concatenate([l["ck"], l["cv"]], axis=1)))

    # HF T5 applies the d_model**-0.5 rescale before lm_head when tie_word_embeddings
    # (default True in the pretrained config, unchanged by set_output_embeddings).
    scale = cfg["d_model"] ** -0.5
    lm_w = pad_cols(fold(p["dec_final_ln"] * scale, p["lm_w"]), v_pad)
    lm_b = jnp.full((1, v_pad), NEG_INF, jnp.float32)
    lm_b = lm_b.at[0, :cfg["dec_vocab"]].set(p["lm_b"])   # pad lanes stay -1e9 (argmax-safe)

    stack_bf16 = lambda ws: jnp.stack(ws).astype(W_DTYPE)
    return {
        "enc_embed": p["enc_embed"],
        "dec_embed_pad": pad_rows(p["dec_embed"], v_pad),          # rows padded for one-hot gather
        "enc_rel_bias": p["enc_layers"][0]["rel_bias"],
        "dec_rel_bias": p["dec_layers"][0]["rel_bias"],
        "enc_wqkv": stack_bf16(enc_wqkv), "enc_wo": stack_bf16(enc_wo),
        "enc_wi": stack_bf16(enc_wi), "enc_wof": stack_bf16(enc_wof),
        "wckv": stack_bf16(wckv),
        "dec_wqkv": stack_bf16(dec_wqkv), "dec_wos": stack_bf16(dec_wos),
        "dec_wqc": stack_bf16(dec_wqc), "dec_woc": stack_bf16(dec_woc),
        "dec_wi": stack_bf16(dec_wi), "dec_wof": stack_bf16(dec_wof),
        "lm_w": lm_w.astype(W_DTYPE), "lm_b": lm_b,
    }


# ----------------------------- XLA glue: relative-position bias -----------------------------

def _relative_position_bucket(rel_pos, bidirectional, num_buckets, max_distance):
    ret = jnp.zeros_like(rel_pos)
    if bidirectional:
        num_buckets //= 2
        ret = ret + (rel_pos > 0).astype(jnp.int32) * num_buckets
        rel_pos = jnp.abs(rel_pos)
    else:
        rel_pos = -jnp.minimum(rel_pos, 0)
    max_exact = num_buckets // 2
    is_small = rel_pos < max_exact
    safe = jnp.maximum(rel_pos, 1).astype(jnp.float32)
    large = max_exact + (
        jnp.log(safe / max_exact) / math.log(max_distance / max_exact)
        * (num_buckets - max_exact)
    ).astype(jnp.int32)
    large = jnp.minimum(large, num_buckets - 1)
    return ret + jnp.where(is_small, rel_pos, large)


def compute_rel_bias(table, lq, lk, bidirectional, cfg):
    ctx = jnp.arange(lq)[:, None]
    mem = jnp.arange(lk)[None, :]
    buckets = _relative_position_bucket(mem - ctx, bidirectional,
                                        cfg["num_buckets"], cfg["max_distance"])
    return table[buckets].transpose(2, 0, 1)        # (H, Lq, Lk)


# ----------------------------- Seq2SeqT5.forward equivalent -----------------------------

def make_forward(cfg):
    Ldec = cfg["max_len_sent"]
    V = cfg["dec_vocab"]

    def forward(prep, input_tensor):
        B, Lsrc = input_tensor.shape
        # ---- encoder runs ONCE (fused with final LN + cross K/V projection) ----
        x = prep["enc_embed"][input_tensor]                               # (B, Lsrc, D)
        enc_bias = compute_rel_bias(prep["enc_rel_bias"], Lsrc, Lsrc, True, cfg)
        ckv = encoder_call(x, enc_bias, prep, cfg)                        # (nL, B, Lsrc, 2*inner)

        # decoder self-attn bias (rel-pos + causal mask), shared by all steps
        pos = compute_rel_bias(prep["dec_rel_bias"], Ldec, Ldec, False, cfg)
        causal = jnp.tril(jnp.ones((Ldec, Ldec), jnp.float32))
        self_bias = pos + (1.0 - causal)[None] * NEG_INF

        # ---- whole greedy decode loop fused into ONE pallas_call ----
        distr, pred = decode_call(ckv, self_bias, prep, cfg, B, Lsrc)
        return pred[:, :, 0], distr[:, :, :V]                             # (Ldec,B), (Ldec,B,V)

    return jax.jit(forward)


def seq2seq_t5_forward(forward_fn, prep, input_tensor, cfg):
    """Returns (pred_tokens, distr_step) lists like the PyTorch module."""
    pred_arr, distr_arr = forward_fn(prep, input_tensor)
    n = cfg["max_len_sent"]
    pred_tokens = [pred_arr[i] for i in range(n)]
    distr_step = [distr_arr[i] for i in range(n)]
    return pred_tokens, distr_step
    # TODO(synk): training_step / validation_step (CrossEntropyLoss + Adafactor) are
    # optimizer/backward logic, not part of the forward kernels.
    # TODO(synk): an explicit self-attention KV cache is skipped: with max_len_sent=4
    # the fused padded/causally-masked decode is cheaper than cache bookkeeping.


if __name__ == "__main__":
    key = jax.random.PRNGKey(0)
    k_param, k_data = jax.random.split(key)
    params = init_params(k_param, CFG)
    prep = prepare_params(params, CFG)          # LN folding / padding / bf16 cast, hoisted

    batch, src_len = 2, 8
    input_tensor = jax.random.randint(k_data, (batch, src_len), 0, CFG["enc_vocab"],
                                      dtype=jnp.int32)

    forward_fn = make_forward(CFG)
    pred_tokens, distr_step = seq2seq_t5_forward(forward_fn, prep, input_tensor, CFG)
    jax.block_until_ready(pred_tokens)
    jax.block_until_ready(distr_step)

    assert len(pred_tokens) == CFG["max_len_sent"]
    assert len(distr_step) == CFG["max_len_sent"]
    assert pred_tokens[0].shape == (batch,)
    assert distr_step[0].shape == (batch, CFG["dec_vocab"])
    assert bool(jnp.all(jnp.isfinite(distr_step[0])))
    print("KERNEL_OK")
</pallas_src>

<mosaic_0001>
module attributes {stable_mosaic.version = 11 : i64} {
  func.func @kernel(%arg0: i32, %arg1: memref<1x8x32xf32, #tpu.memory_space<vmem>>, %arg2: memref<2x8x8xf32, #tpu.memory_space<vmem>>, %arg3: memref<1x32x128xbf16, #tpu.memory_space<vmem>>, %arg4: memref<1x32x32xbf16, #tpu.memory_space<vmem>>, %arg5: memref<1x32x128xbf16, #tpu.memory_space<vmem>>, %arg6: memref<1x128x32xbf16, #tpu.memory_space<vmem>>, %arg7: memref<1x32x64xbf16, #tpu.memory_space<vmem>>, %arg8: memref<1x1x8x64xf32, #tpu.memory_space<vmem>>) attributes {dimension_semantics = [#tpu.dimension_semantics<parallel>], iteration_bounds = array<i64: 2>, scalar_prefetch = 0 : i64, scratch_operands = 0 : i64, tpu.core_type = #tpu.core_type<tc>, window_params = [{transform_indices = @transform_0, window_bounds = array<i64: 1, 8, 32>}, {pipeline_mode = #tpu.pipeline_mode<synchronous>, transform_indices = @transform_1, window_bounds = array<i64: 2, 8, 8>}, {pipeline_mode = #tpu.pipeline_mode<synchronous>, transform_indices = @transform_2, window_bounds = array<i64: 1, 32, 128>}, {pipeline_mode = #tpu.pipeline_mode<synchronous>, transform_indices = @transform_3, window_bounds = array<i64: 1, 32, 32>}, {pipeline_mode = #tpu.pipeline_mode<synchronous>, transform_indices = @transform_4, window_bounds = array<i64: 1, 32, 128>}, {pipeline_mode = #tpu.pipeline_mode<synchronous>, transform_indices = @transform_5, window_bounds = array<i64: 1, 128, 32>}, {pipeline_mode = #tpu.pipeline_mode<synchronous>, transform_indices = @transform_6, window_bounds = array<i64: 1, 32, 64>}, {transform_indices = @transform_7, window_bounds = array<i64: 1, 1, 8, 64>}]} {
    %c0 = arith.constant 0 : index
    %c0_0 = arith.constant 0 : index
    %c0_1 = arith.constant 0 : index
    %0 = vector.load %arg1[%c0, %c0_0, %c0_1] : memref<1x8x32xf32, #tpu.memory_space<vmem>>, vector<1x8x32xf32>
    %1 = vector.shape_cast %0 : vector<1x8x32xf32> to vector<8x32xf32>
    %c0_2 = arith.constant 0 : index
    %c0_3 = arith.constant 0 : index
    %c0_4 = arith.constant 0 : index
    %2 = vector.load %arg2[%c0_2, %c0_3, %c0_4] : memref<2x8x8xf32, #tpu.memory_space<vmem>>, vector<2x8x8xf32>
    %3 = arith.mulf %1, %1 : vector<8x32xf32>
    %cst = arith.constant dense<0.000000e+00> : vector<8xf32>
    %4 = vector.multi_reduction <add>, %3, %cst [1] : vector<8x32xf32> to vector<8xf32>
    %5 = vector.shape_cast %4 : vector<8xf32> to vector<8x1xf32>
    %cst_5 = arith.constant 3.200000e+01 : f32
    %6 = vector.broadcast %cst_5 : f32 to vector<8x1xf32>
    %7 = arith.divf %5, %6 : vector<8x1xf32>
    %cst_6 = arith.constant 9.99999997E-7 : f32
    %8 = vector.broadcast %cst_6 : f32 to vector<8x1xf32>
    %9 = arith.addf %7, %8 : vector<8x1xf32>
    %10 = math.rsqrt %9 : vector<8x1xf32>
    %11 = vector.broadcast %10 : vector<8x1xf32> to vector<8x32xf32>
    %12 = arith.mulf %1, %11 : vector<8x32xf32>
    %c0_7 = arith.constant 0 : index
    %c0_8 = arith.constant 0 : index
    %c0_9 = arith.constant 0 : index
    %13 = vector.load %arg3[%c0_7, %c0_8, %c0_9] : memref<1x32x128xbf16, #tpu.memory_space<vmem>>, vector<1x32x128xbf16>
    %14 = vector.shape_cast %13 : vector<1x32x128xbf16> to vector<32x128xbf16>
    %15 = arith.truncf %12 : vector<8x32xf32> to vector<8x32xbf16>
    %cst_10 = arith.constant dense<0.000000e+00> : vector<8x128xf32>
    %16 = tpu.matmul %15, %14, %cst_10 {dimension_numbers = #tpu.dot_dimension_numbers<[1], [0], [0], [1], [0, 0, 1, 1], [], []>} : vector<8x32xbf16>, vector<32x128xbf16>, vector<8x128xf32> -> vector<8x128xf32>
    %17 = vector.extract_strided_slice %16 {offsets = [0, 0], sizes = [8, 32], strides = [1, 1]} : vector<8x128xf32> to vector<8x32xf32>
    %18 = vector.extract_strided_slice %16 {offsets = [0, 32], sizes = [8, 32], strides = [1, 1]} : vector<8x128xf32> to vector<8x32xf32>
    %19 = vector.extract_strided_slice %16 {offsets = [0, 64], sizes = [8, 32], strides = [1, 1]} : vector<8x128xf32> to vector<8x32xf32>
    %20 = vector.extract_strided_slice %17 {offsets = [0, 0], sizes = [8, 16], strides = [1, 1]} : vector<8x32xf32> to vector<8x16xf32>
    %21 = vector.extract_strided_slice %18 {offsets = [0, 0], sizes = [8, 16], strides = [1, 1]} : vector<8x32xf32> to vector<8x16xf32>
    %22 = vector.extract_strided_slice %19 {offsets = [0, 0], sizes = [8, 16], strides = [1, 1]} : vector<8x32xf32> to vector<8x16xf32>
    %23 = arith.truncf %20 : vector<8x16xf32> to vector<8x16xbf16>
    %24 = arith.truncf %21 : vector<8x16xf32> to vector<8x16xbf16>
    "tpu.trace_start"() <{level = 10 : i32, message = "qd,kd->qk"}> : () -> ()
    %cst_11 = arith.constant dense<0.000000e+00> : vector<8x8xf32>
    %25 = tpu.matmul %23, %24, %cst_11 {dimension_numbers = #tpu.dot_dimension_numbers<[1], [1], [0], [0], [0, 0, 1, 0], [], []>} : vector<8x16xbf16>, vector<8x16xbf16>, vector<8x8xf32> -> vector<8x8xf32>
    "tpu.trace_stop"() : () -> ()
    %26 = vector.extract_strided_slice %2 {offsets = [0, 0, 0], sizes = [1, 8, 8], strides = [1, 1, 1]} : vector<2x8x8xf32> to vector<1x8x8xf32>
    %27 = vector.shape_cast %26 : vector<1x8x8xf32> to vector<8x8xf32>
    %28 = arith.addf %25, %27 : vector<8x8xf32>
    %cst_12 = arith.constant dense<0xFF800000> : vector<8xf32>
    %29 = vector.multi_reduction <maximumf>, %28, %cst_12 [1] : vector<8x8xf32> to vector<8xf32>
    %30 = vector.shape_cast %29 : vector<8xf32> to vector<8x1xf32>
    %31 = vector.broadcast %30 : vector<8x1xf32> to vector<8x8xf32>
    %32 = arith.subf %28, %31 : vector<8x8xf32>
    %33 = math.exp %32 : vector<8x8xf32>
    %cst_13 = arith.constant dense<0.000000e+00> : vector<8xf32>
    %34 = vector.multi_reduction <add>, %33, %cst_13 [1] : vector<8x8xf32> to vector<8xf32>
    %35 = vector.shape_cast %34 : vector<8xf32> to vector<8x1xf32>
    %36 = vector.broadcast %35 : vector<8x1xf32> to vector<8x8xf32>
    %37 = arith.divf %33, %36 : vector<8x8xf32>
    %38 = arith.truncf %37 : vector<8x8xf32> to vector<8x8xbf16>
    %39 = arith.truncf %22 : vector<8x16xf32> to vector<8x16xbf16>
    "tpu.trace_start"() <{level = 10 : i32, message = "qk,kd->qd"}> : () -> ()
    %cst_14 = arith.constant dense<0.000000e+00> : vector<8x16xf32>
    %40 = tpu.matmul %38, %39, %cst_14 {dimension_numbers = #tpu.dot_dimension_numbers<[1], [0], [0], [1], [0, 0, 1, 1], [], []>} : vector<8x8xbf16>, vector<8x16xbf16>, vector<8x16xf32> -> vector<8x16xf32>
    "tpu.trace_stop"() : () -> ()
    %41 = vector.extract_strided_slice %17 {offsets = [0, 16], sizes = [8, 16], strides = [1, 1]} : vector<8x32xf32> to vector<8x16xf32>
    %42 = vector.extract_strided_slice %18 {offsets = [0, 16], sizes = [8, 16], strides = [1, 1]} : vector<8x32xf32> to vector<8x16xf32>
    %43 = vector.extract_strided_slice %19 {offsets = [0, 16], sizes = [8, 16], strides = [1, 1]} : vector<8x32xf32> to vector<8x16xf32>
    %44 = arith.truncf %41 : vector<8x16xf32> to vector<8x16xbf16>
    %45 = arith.truncf %42 : vector<8x16xf32> to vector<8x16xbf16>
    "tpu.trace_start"() <{level = 10 : i32, message = "qd,kd->qk"}> : () -> ()
    %cst_15 = arith.constant dense<0.000000e+00> : vector<8x8xf32>
    %46 = tpu.matmul %44, %45, %cst_15 {dimension_numbers = #tpu.dot_dimension_numbers<[1], [1], [0], [0], [0, 0, 1, 0], [], []>} : vector<8x16xbf16>, vector<8x16xbf16>, vector<8x8xf32> -> vector<8x8xf32>
    "tpu.trace_stop"() : () -> ()
    %47 = vector.extract_strided_slice %2 {offsets = [1, 0, 0], sizes = [1, 8, 8], strides = [1, 1, 1]} : vector<2x8x8xf32> to vector<1x8x8xf32>
    %48 = vector.shape_cast %47 : vector<1x8x8xf32> to vector<8x8xf32>
    %49 = arith.addf %46, %48 : vector<8x8xf32>
    %cst_16 = arith.constant dense<0xFF800000> : vector<8xf32>
    %50 = vector.multi_reduction <maximumf>, %49, %cst_16 [1] : vector<8x8xf32> to vector<8xf32>
    %51 = vector.shape_cast %50 : vector<8xf32> to vector<8x1xf32>
    %52 = vector.broadcast %51 : vector<8x1xf32> to vector<8x8xf32>
    %53 = arith.subf %49, %52 : vector<8x8xf32>
    %54 = math.exp %53 : vector<8x8xf32>
    %cst_17 = arith.constant dense<0.000000e+00> : vector<8xf32>
    %55 = vector.multi_reduction <add>, %54, %cst_17 [1] : vector<8x8xf32> to vector<8xf32>
    %56 = vector.shape_cast %55 : vector<8xf32> to vector<8x1xf32>
    %57 = vector.broadcast %56 : vector<8x1xf32> to vector<8x8xf32>
    %58 = arith.divf %54, %57 : vector<8x8xf32>
    %59 = arith.truncf %58 : vector<8x8xf32> to vector<8x8xbf16>
    %60 = arith.truncf %43 : vector<8x16xf32> to vector<8x16xbf16>
    "tpu.trace_start"() <{level = 10 : i32, message = "qk,kd->qd"}> : () -> ()
    %cst_18 = arith.constant dense<0.000000e+00> : vector<8x16xf32>
    %61 = tpu.matmul %59, %60, %cst_18 {dimension_numbers = #tpu.dot_dimension_numbers<[1], [0], [0], [1], [0, 0, 1, 1], [], []>} : vector<8x8xbf16>, vector<8x16xbf16>, vector<8x16xf32> -> vector<8x16xf32>
    "tpu.trace_stop"() : () -> ()
    %62 = tpu.concatenate %40, %61 in 1 : vector<8x16xf32>, vector<8x16xf32> -> vector<8x32xf32>
    %c0_19 = arith.constant 0 : index
    %c0_20 = arith.constant 0 : index
    %c0_21 = arith.constant 0 : index
    %63 = vector.load %arg4[%c0_19, %c0_20, %c0_21] : memref<1x32x32xbf16, #tpu.memory_space<vmem>>, vector<1x32x32xbf16>
    %64 = vector.shape_cast %63 : vector<1x32x32xbf16> to vector<32x32xbf16>
    %65 = arith.truncf %62 : vector<8x32xf32> to vector<8x32xbf16>
    %cst_22 = arith.constant dense<0.000000e+00> : vector<8x32xf32>
    %66 = tpu.matmul %65, %64, %cst_22 {dimension_numbers = #tpu.dot_dimension_numbers<[1], [0], [0], [1], [0, 0, 1, 1], [], []>} : vector<8x32xbf16>, vector<32x32xbf16>, vector<8x32xf32> -> vector<8x32xf32>
    %67 = arith.addf %1, %66 : vector<8x32xf32>
    %68 = arith.mulf %67, %67 : vector<8x32xf32>
    %cst_23 = arith.constant dense<0.000000e+00> : vector<8xf32>
    %69 = vector.multi_reduction <add>, %68, %cst_23 [1] : vector<8x32xf32> to vector<8xf32>
    %70 = vector.shape_cast %69 : vector<8xf32> to vector<8x1xf32>
    %cst_24 = arith.constant 3.200000e+01 : f32
    %71 = vector.broadcast %cst_24 : f32 to vector<8x1xf32>
    %72 = arith.divf %70, %71 : vector<8x1xf32>
    %cst_25 = arith.constant 9.99999997E-7 : f32
    %73 = vector.broadcast %cst_25 : f32 to vector<8x1xf32>
    %74 = arith.addf %72, %73 : vector<8x1xf32>
    %75 = math.rsqrt %74 : vector<8x1xf32>
    %76 = vector.broadcast %75 : vector<8x1xf32> to vector<8x32xf32>
    %77 = arith.mulf %67, %76 : vector<8x32xf32>
    %c0_26 = arith.constant 0 : index
    %c0_27 = arith.constant 0 : index
    %c0_28 = arith.constant 0 : index
    %78 = vector.load %arg5[%c0_26, %c0_27, %c0_28] : memref<1x32x128xbf16, #tpu.memory_space<vmem>>, vector<1x32x128xbf16>
    %79 = vector.shape_cast %78 : vector<1x32x128xbf16> to vector<32x128xbf16>
    %80 = arith.truncf %77 : vector<8x32xf32> to vector<8x32xbf16>
    %cst_29 = arith.constant dense<0.000000e+00> : vector<8x128xf32>
    %81 = tpu.matmul %80, %79, %cst_29 {dimension_numbers = #tpu.dot_dimension_numbers<[1], [0], [0], [1], [0, 0, 1, 1], [], []>} : vector<8x32xbf16>, vector<32x128xbf16>, vector<8x128xf32> -> vector<8x128xf32>
    %cst_30 = arith.constant 0.000000e+00 : f32
    %82 = vector.broadcast %cst_30 : f32 to vector<8x128xf32>
    %83 = arith.maximumf %81, %82 : vector<8x128xf32>
    %c0_31 = arith.constant 0 : index
    %c0_32 = arith.constant 0 : index
    %c0_33 = arith.constant 0 : index
    %84 = vector.load %arg6[%c0_31, %c0_32, %c0_33] : memref<1x128x32xbf16, #tpu.memory_space<vmem>>, vector<1x128x32xbf16>
    %85 = vector.shape_cast %84 : vector<1x128x32xbf16> to vector<128x32xbf16>
    %86 = arith.truncf %83 : vector<8x128xf32> to vector<8x128xbf16>
    %cst_34 = arith.constant dense<0.000000e+00> : vector<8x32xf32>
    %87 = tpu.matmul %86, %85, %cst_34 {dimension_numbers = #tpu.dot_dimension_numbers<[1], [0], [0], [1], [0, 0, 1, 1], [], []>} : vector<8x128xbf16>, vector<128x32xbf16>, vector<8x32xf32> -> vector<8x32xf32>
    %88 = arith.addf %67, %87 : vector<8x32xf32>
    %89 = arith.mulf %88, %88 : vector<8x32xf32>
    %cst_35 = arith.constant dense<0.000000e+00> : vector<8xf32>
    %90 = vector.multi_reduction <add>, %89, %cst_35 [1] : vector<8x32xf32> to vector<8xf32>
    %91 = vector.shape_cast %90 : vector<8xf32> to vector<8x1xf32>
    %cst_36 = arith.constant 3.200000e+01 : f32
    %92 = vector.broadcast %cst_36 : f32 to vector<8x1xf32>
    %93 = arith.divf %91, %92 : vector<8x1xf32>
    %cst_37 = arith.constant 9.99999997E-7 : f32
    %94 = vector.broadcast %cst_37 : f32 to vector<8x1xf32>
    %95 = arith.addf %93, %94 : vector<8x1xf32>
    %96 = math.rsqrt %95 : vector<8x1xf32>
    %97 = vector.broadcast %96 : vector<8x1xf32> to vector<8x32xf32>
    %98 = arith.mulf %88, %97 : vector<8x32xf32>
    %c0_38 = arith.constant 0 : index
    %c0_39 = arith.constant 0 : index
    %c0_40 = arith.constant 0 : index
    %99 = vector.load %arg7[%c0_38, %c0_39, %c0_40] : memref<1x32x64xbf16, #tpu.memory_space<vmem>>, vector<1x32x64xbf16>
    %100 = vector.shape_cast %99 : vector<1x32x64xbf16> to vector<32x64xbf16>
    %101 = arith.truncf %98 : vector<8x32xf32> to vector<8x32xbf16>
    %cst_41 = arith.constant dense<0.000000e+00> : vector<8x64xf32>
    %102 = tpu.matmul %101, %100, %cst_41 {dimension_numbers = #tpu.dot_dimension_numbers<[1], [0], [0], [1], [0, 0, 1, 1], [], []>} : vector<8x32xbf16>, vector<32x64xbf16>, vector<8x64xf32> -> vector<8x64xf32>
    %103 = vector.shape_cast %102 : vector<8x64xf32> to vector<1x8x64xf32>
    %c0_42 = arith.constant 0 : index
    %c0_43 = arith.constant 0 : index
    %c0_44 = arith.constant 0 : index
    %c0_45 = arith.constant 0 : index
    %104 = vector.load %arg8[%c0_42, %c0_43, %c0_44, %c0_45] : memref<1x1x8x64xf32, #tpu.memory_space<vmem>>, vector<1x1x8x64xf32>
    %105 = vector.shape_cast %104 : vector<1x1x8x64xf32> to vector<1x8x64xf32>
    %106 = vector.shape_cast %103 : vector<1x8x64xf32> to vector<1x1x8x64xf32>
    tpu.vector_store %arg8[%c0_42, %c0_43, %c0_44, %c0_45], %106 {strides = array<i32>} : memref<1x1x8x64xf32, #tpu.memory_space<vmem>>, vector<1x1x8x64xf32>,
    return
  }
  func.func @transform_0(%arg0: i32) -> (i32, i32, i32) {
    %c0_i32 = arith.constant 0 : i32
    %c0_i32_0 = arith.constant 0 : i32
    %c0_i32_1 = arith.constant 0 : i32
    return %arg0, %c0_i32, %c0_i32_0 : i32, i32, i32
  }
  func.func @transform_1(%arg0: i32) -> (i32, i32, i32) {
    %c0_i32 = arith.constant 0 : i32
    %c0_i32_0 = arith.constant 0 : i32
    %c0_i32_1 = arith.constant 0 : i32
    %c0_i32_2 = arith.constant 0 : i32
    return %c0_i32, %c0_i32_0, %c0_i32_1 : i32, i32, i32
  }
  func.func @transform_2(%arg0: i32) -> (i32, i32, i32) {
    %c0_i32 = arith.constant 0 : i32
    %c0_i32_0 = arith.constant 0 : i32
    %c0_i32_1 = arith.constant 0 : i32
    %c0_i32_2 = arith.constant 0 : i32
    return %c0_i32, %c0_i32_0, %c0_i32_1 : i32, i32, i32
  }
  func.func @transform_3(%arg0: i32) -> (i32, i32, i32) {
    %c0_i32 = arith.constant 0 : i32
    %c0_i32_0 = arith.constant 0 : i32
    %c0_i32_1 = arith.constant 0 : i32
    %c0_i32_2 = arith.constant 0 : i32
    return %c0_i32, %c0_i32_0, %c0_i32_1 : i32, i32, i32
  }
  func.func @transform_4(%arg0: i32) -> (i32, i32, i32) {
    %c0_i32 = arith.constant 0 : i32
    %c0_i32_0 = arith.constant 0 : i32
    %c0_i32_1 = arith.constant 0 : i32
    %c0_i32_2 = arith.constant 0 : i32
    return %c0_i32, %c0_i32_0, %c0_i32_1 : i32, i32, i32
  }
  func.func @transform_5(%arg0: i32) -> (i32, i32, i32) {
    %c0_i32 = arith.constant 0 : i32
    %c0_i32_0 = arith.constant 0 : i32
    %c0_i32_1 = arith.constant 0 : i32
    %c0_i32_2 = arith.constant 0 : i32
    return %c0_i32, %c0_i32_0, %c0_i32_1 : i32, i32, i32
  }
  func.func @transform_6(%arg0: i32) -> (i32, i32, i32) {
    %c0_i32 = arith.constant 0 : i32
    %c0_i32_0 = arith.constant 0 : i32
    %c0_i32_1 = arith.constant 0 : i32
    %c0_i32_2 = arith.constant 0 : i32
    return %c0_i32, %c0_i32_0, %c0_i32_1 : i32, i32, i32
  }
  func.func @transform_7(%arg0: i32) -> (i32, i32, i32, i32) {
    %c0_i32 = arith.constant 0 : i32
    %c0_i32_0 = arith.constant 0 : i32
    %c0_i32_1 = arith.constant 0 : i32
    %c0_i32_2 = arith.constant 0 : i32
    return %c0_i32, %arg0, %c0_i32_0, %c0_i32_1 : i32, i32, i32, i32
  }
}

module attributes {stable_mosaic.version = 11 : i64} {
  func.func @kernel(%arg0: i32, %arg1: memref<2x4x4xf32, #tpu.memory_space<vmem>>, %arg2: memref<1x2x8x64xf32, #tpu.memory_space<vmem>>, %arg3: memref<128x32xf32, #tpu.memory_space<vmem>>, %arg4: memref<1x32x128xbf16, #tpu.memory_space<vmem>>, %arg5: memref<1x32x32xbf16, #tpu.memory_space<vmem>>, %arg6: memref<1x32x32xbf16, #tpu.memory_space<vmem>>, %arg7: memref<1x32x32xbf16, #tpu.memory_space<vmem>>, %arg8: memref<1x32x128xbf16, #tpu.memory_space<vmem>>, %arg9: memref<1x128x32xbf16, #tpu.memory_space<vmem>>, %arg10: memref<32x128xbf16, #tpu.memory_space<vmem>>, %arg11: memref<1x128xf32, #tpu.memory_space<vmem>>, %arg12: memref<1x2x128xf32, #tpu.memory_space<vmem>>, %arg13: memref<1x2x1xi32, #tpu.memory_space<vmem>>, %arg14: memref<8x32xf32, #tpu.memory_space<vmem>>) attributes {dimension_semantics = [#tpu.dimension_semantics<arbitrary>], iteration_bounds = array<i64: 4>, scalar_prefetch = 0 : i64, scratch_operands = 1 : i64, tpu.core_type = #tpu.core_type<tc>, window_params = [{pipeline_mode = #tpu.pipeline_mode<synchronous>, transform_indices = @transform_0, window_bounds = array<i64: 2, 4, 4>}, {pipeline_mode = #tpu.pipeline_mode<synchronous>, transform_indices = @transform_1, window_bounds = array<i64: 1, 2, 8, 64>}, {pipeline_mode = #tpu.pipeline_mode<synchronous>, transform_indices = @transform_2, window_bounds = array<i64: 128, 32>}, {pipeline_mode = #tpu.pipeline_mode<synchronous>, transform_indices = @transform_3, window_bounds = array<i64: 1, 32, 128>}, {pipeline_mode = #tpu.pipeline_mode<synchronous>, transform_indices = @transform_4, window_bounds = array<i64: 1, 32, 32>}, {pipeline_mode = #tpu.pipeline_mode<synchronous>, transform_indices = @transform_5, window_bounds = array<i64: 1, 32, 32>}, {pipeline_mode = #tpu.pipeline_mode<synchronous>, transform_indices = @transform_6, window_bounds = array<i64: 1, 32, 32>}, {pipeline_mode = #tpu.pipeline_mode<synchronous>, transform_indices = @transform_7, window_bounds = array<i64: 1, 32, 128>}, {pipeline_mode = #tpu.pipeline_mode<synchronous>, transform_indices = @transform_8, window_bounds = array<i64: 1, 128, 32>}, {pipeline_mode = #tpu.pipeline_mode<synchronous>, transform_indices = @transform_9, window_bounds = array<i64: 32, 128>}, {pipeline_mode = #tpu.pipeline_mode<synchronous>, transform_indices = @transform_10, window_bounds = array<i64: 1, 128>}, {transform_indices = @transform_11, window_bounds = array<i64: 1, 2, 128>}, {transform_indices = @transform_12, window_bounds = array<i64: 1, 2, 1>}]} {
    %c0_i32 = arith.constant 0 : i32
    %0 = arith.cmpi eq, %arg0, %c0_i32 : i32
    %1 = arith.extui %0 : i1 to i32
    %c0_i32_0 = arith.constant 0 : i32
    %2 = arith.cmpi ne, %1, %c0_i32_0 : i32
    scf.if %2 {
      %cst_77 = arith.constant 0.000000e+00 : f32
      %207 = vector.broadcast %cst_77 : f32 to vector<8x32xf32>
      %c0_78 = arith.constant 0 : index
      %c0_79 = arith.constant 0 : index
      %208 = vector.load %arg14[%c0_78, %c0_79] : memref<8x32xf32, #tpu.memory_space<vmem>>, vector<8x32xf32>
      tpu.vector_store %arg14[%c0_78, %c0_79], %207 {strides = array<i32>} : memref<8x32xf32, #tpu.memory_space<vmem>>, vector<8x32xf32>,
      %c1 = arith.constant 1 : index
      %c0_80 = arith.constant 0 : index
      %209 = vector.load %arg3[%c1, %c0_80] : memref<128x32xf32, #tpu.memory_space<vmem>>, vector<1x32xf32>
      %c0_81 = arith.constant 0 : index
      %c0_82 = arith.constant 0 : index
      %210 = vector.load %arg14[%c0_81, %c0_82] : memref<8x32xf32, #tpu.memory_space<vmem>>, vector<1x32xf32>
      tpu.vector_store %arg14[%c0_81, %c0_82], %209 {strides = array<i32>} : memref<8x32xf32, #tpu.memory_space<vmem>>, vector<1x32xf32>,
      %c1_83 = arith.constant 1 : index
      %c0_84 = arith.constant 0 : index
      %211 = vector.load %arg3[%c1_83, %c0_84] : memref<128x32xf32, #tpu.memory_space<vmem>>, vector<1x32xf32>
      %c4 = arith.constant 4 : index
      %c0_85 = arith.constant 0 : index
      %212 = vector.load %arg14[%c4, %c0_85] : memref<8x32xf32, #tpu.memory_space<vmem>>, vector<1x32xf32>
      tpu.vector_store %arg14[%c4, %c0_85], %211 {strides = array<i32>} : memref<8x32xf32, #tpu.memory_space<vmem>>, vector<1x32xf32>,
    } else {
    }
    %c0 = arith.constant 0 : index
    %c0_1 = arith.constant 0 : index
    %c0_2 = arith.constant 0 : index
    %3 = vector.load %arg1[%c0, %c0_1, %c0_2] : memref<2x4x4xf32, #tpu.memory_space<vmem>>, vector<2x4x4xf32>
    %c0_3 = arith.constant 0 : index
    %c0_4 = arith.constant 0 : index
    %4 = vector.load %arg14[%c0_3, %c0_4] : memref<8x32xf32, #tpu.memory_space<vmem>>, vector<8x32xf32>
    %5 = arith.mulf %4, %4 : vector<8x32xf32>
    %cst = arith.constant dense<0.000000e+00> : vector<8xf32>
    %6 = vector.multi_reduction <add>, %5, %cst [1] : vector<8x32xf32> to vector<8xf32>
    %7 = vector.shape_cast %6 : vector<8xf32> to vector<8x1xf32>
    %cst_5 = arith.constant 3.200000e+01 : f32
    %8 = vector.broadcast %cst_5 : f32 to vector<8x1xf32>
    %9 = arith.divf %7, %8 : vector<8x1xf32>
    %cst_6 = arith.constant 9.99999997E-7 : f32
    %10 = vector.broadcast %cst_6 : f32 to vector<8x1xf32>
    %11 = arith.addf %9, %10 : vector<8x1xf32>
    %12 = math.rsqrt %11 : vector<8x1xf32>
    %13 = vector.broadcast %12 : vector<8x1xf32> to vector<8x32xf32>
    %14 = arith.mulf %4, %13 : vector<8x32xf32>
    %c0_7 = arith.constant 0 : index
    %c0_8 = arith.constant 0 : index
    %c0_9 = arith.constant 0 : index
    %15 = vector.load %arg4[%c0_7, %c0_8, %c0_9] : memref<1x32x128xbf16, #tpu.memory_space<vmem>>, vector<1x32x128xbf16>
    %16 = vector.shape_cast %15 : vector<1x32x128xbf16> to vector<32x128xbf16>
    %17 = arith.truncf %14 : vector<8x32xf32> to vector<8x32xbf16>
    %cst_10 = arith.constant dense<0.000000e+00> : vector<8x128xf32>
    %18 = tpu.matmul %17, %16, %cst_10 {dimension_numbers = #tpu.dot_dimension_numbers<[1], [0], [0], [1], [0, 0, 1, 1], [], []>} : vector<8x32xbf16>, vector<32x128xbf16>, vector<8x128xf32> -> vector<8x128xf32>
    %19 = vector.extract_strided_slice %18 {offsets = [0, 32], sizes = [8, 32], strides = [1, 1]} : vector<8x128xf32> to vector<8x32xf32>
    %20 = vector.shape_cast %19 : vector<8x32xf32> to vector<2x4x32xf32>
    %21 = vector.extract_strided_slice %18 {offsets = [0, 64], sizes = [8, 32], strides = [1, 1]} : vector<8x128xf32> to vector<8x32xf32>
    %22 = vector.shape_cast %21 : vector<8x32xf32> to vector<2x4x32xf32>
    %23 = tpu.concatenate %20, %22 in 2 : vector<2x4x32xf32>, vector<2x4x32xf32> -> vector<2x4x64xf32>
    %24 = vector.extract_strided_slice %18 {offsets = [0, 0], sizes = [8, 32], strides = [1, 1]} : vector<8x128xf32> to vector<8x32xf32>
    %25 = vector.extract_strided_slice %24 {offsets = [0, 0], sizes = [8, 16], strides = [1, 1]} : vector<8x32xf32> to vector<8x16xf32>
    %26 = vector.shape_cast %25 : vector<8x16xf32> to vector<2x4x16xf32>
    %27 = vector.extract_strided_slice %23 {offsets = [0, 0, 0], sizes = [2, 4, 16], strides = [1, 1, 1]} : vector<2x4x64xf32> to vector<2x4x16xf32>
    %28 = vector.extract_strided_slice %23 {offsets = [0, 0, 32], sizes = [2, 4, 16], strides = [1, 1, 1]} : vector<2x4x64xf32> to vector<2x4x16xf32>
    %29 = arith.truncf %26 : vector<2x4x16xf32> to vector<2x4x16xbf16>
    %30 = arith.truncf %27 : vector<2x4x16xf32> to vector<2x4x16xbf16>
    "tpu.trace_start"() <{level = 10 : i32, message = "bqd,bkd->bqk"}> : () -> ()
    %cst_11 = arith.constant dense<0.000000e+00> : vector<2x4x4xf32>
    %31 = tpu.matmul %29, %30, %cst_11 {dimension_numbers = #tpu.dot_dimension_numbers<[2], [2], [1], [1], [0, 0, 0, 1, 1, 1], [0], [0]>} : vector<2x4x16xbf16>, vector<2x4x16xbf16>, vector<2x4x4xf32> -> vector<2x4x4xf32>
    "tpu.trace_stop"() : () -> ()
    %32 = vector.extract_strided_slice %3 {offsets = [0, 0, 0], sizes = [1, 4, 4], strides = [1, 1, 1]} : vector<2x4x4xf32> to vector<1x4x4xf32>
    %33 = vector.shape_cast %32 : vector<1x4x4xf32> to vector<4x4xf32>
    %34 = vector.shape_cast %33 : vector<4x4xf32> to vector<1x4x4xf32>
    %35 = vector.broadcast %34 : vector<1x4x4xf32> to vector<2x4x4xf32>
    %36 = arith.addf %31, %35 : vector<2x4x4xf32>
    %cst_12 = arith.constant dense<0xFF800000> : vector<2x4xf32>
    %37 = vector.multi_reduction <maximumf>, %36, %cst_12 [2] : vector<2x4x4xf32> to vector<2x4xf32>
    %38 = vector.shape_cast %37 : vector<2x4xf32> to vector<2x4x1xf32>
    %39 = vector.broadcast %38 : vector<2x4x1xf32> to vector<2x4x4xf32>
    %40 = arith.subf %36, %39 : vector<2x4x4xf32>
    %41 = math.exp %40 : vector<2x4x4xf32>
    %cst_13 = arith.constant dense<0.000000e+00> : vector<2x4xf32>
    %42 = vector.multi_reduction <add>, %41, %cst_13 [2] : vector<2x4x4xf32> to vector<2x4xf32>
    %43 = vector.shape_cast %42 : vector<2x4xf32> to vector<2x4x1xf32>
    %44 = vector.broadcast %43 : vector<2x4x1xf32> to vector<2x4x4xf32>
    %45 = arith.divf %41, %44 : vector<2x4x4xf32>
    %46 = arith.truncf %45 : vector<2x4x4xf32> to vector<2x4x4xbf16>
    %47 = arith.truncf %28 : vector<2x4x16xf32> to vector<2x4x16xbf16>
    "tpu.trace_start"() <{level = 10 : i32, message = "bqk,bkd->bqd"}> : () -> ()
    %cst_14 = arith.constant dense<0.000000e+00> : vector<2x4x16xf32>
    %48 = tpu.matmul %46, %47, %cst_14 {dimension_numbers = #tpu.dot_dimension_numbers<[2], [1], [1], [2], [0, 0, 0, 1, 1, 2], [0], [0]>} : vector<2x4x4xbf16>, vector<2x4x16xbf16>, vector<2x4x16xf32> -> vector<2x4x16xf32>
    "tpu.trace_stop"() : () -> ()
    %49 = vector.shape_cast %48 : vector<2x4x16xf32> to vector<8x16xf32>
    %50 = vector.extract_strided_slice %24 {offsets = [0, 16], sizes = [8, 16], strides = [1, 1]} : vector<8x32xf32> to vector<8x16xf32>
    %51 = vector.shape_cast %50 : vector<8x16xf32> to vector<2x4x16xf32>
    %52 = vector.extract_strided_slice %23 {offsets = [0, 0, 16], sizes = [2, 4, 16], strides = [1, 1, 1]} : vector<2x4x64xf32> to vector<2x4x16xf32>
    %53 = vector.extract_strided_slice %23 {offsets = [0, 0, 48], sizes = [2, 4, 16], strides = [1, 1, 1]} : vector<2x4x64xf32> to vector<2x4x16xf32>
    %54 = arith.truncf %51 : vector<2x4x16xf32> to vector<2x4x16xbf16>
    %55 = arith.truncf %52 : vector<2x4x16xf32> to vector<2x4x16xbf16>
    "tpu.trace_start"() <{level = 10 : i32, message = "bqd,bkd->bqk"}> : () -> ()
    %cst_15 = arith.constant dense<0.000000e+00> : vector<2x4x4xf32>
    %56 = tpu.matmul %54, %55, %cst_15 {dimension_numbers = #tpu.dot_dimension_numbers<[2], [2], [1], [1], [0, 0, 0, 1, 1, 1], [0], [0]>} : vector<2x4x16xbf16>, vector<2x4x16xbf16>, vector<2x4x4xf32> -> vector<2x4x4xf32>
    "tpu.trace_stop"() : () -> ()
    %57 = vector.extract_strided_slice %3 {offsets = [1, 0, 0], sizes = [1, 4, 4], strides = [1, 1, 1]} : vector<2x4x4xf32> to vector<1x4x4xf32>
    %58 = vector.shape_cast %57 : vector<1x4x4xf32> to vector<4x4xf32>
    %59 = vector.shape_cast %58 : vector<4x4xf32> to vector<1x4x4xf32>
    %60 = vector.broadcast %59 : vector<1x4x4xf32> to vector<2x4x4xf32>
    %61 = arith.addf %56, %60 : vector<2x4x4xf32>
    %cst_16 = arith.constant dense<0xFF800000> : vector<2x4xf32>
    %62 = vector.multi_reduction <maximumf>, %61, %cst_16 [2] : vector<2x4x4xf32> to vector<2x4xf32>
    %63 = vector.shape_cast %62 : vector<2x4xf32> to vector<2x4x1xf32>
    %64 = vector.broadcast %63 : vector<2x4x1xf32> to vector<2x4x4xf32>
    %65 = arith.subf %61, %64 : vector<2x4x4xf32>
    %66 = math.exp %65 : vector<2x4x4xf32>
    %cst_17 = arith.constant dense<0.000000e+00> : vector<2x4xf32>
    %67 = vector.multi_reduction <add>, %66, %cst_17 [2] : vector<2x4x4xf32> to vector<2x4xf32>
    %68 = vector.shape_cast %67 : vector<2x4xf32> to vector<2x4x1xf32>
    %69 = vector.broadcast %68 : vector<2x4x1xf32> to vector<2x4x4xf32>
    %70 = arith.divf %66, %69 : vector<2x4x4xf32>
    %71 = arith.truncf %70 : vector<2x4x4xf32> to vector<2x4x4xbf16>
    %72 = arith.truncf %53 : vector<2x4x16xf32> to vector<2x4x16xbf16>
    "tpu.trace_start"() <{level = 10 : i32, message = "bqk,bkd->bqd"}> : () -> ()
    %cst_18 = arith.constant dense<0.000000e+00> : vector<2x4x16xf32>
    %73 = tpu.matmul %71, %72, %cst_18 {dimension_numbers = #tpu.dot_dimension_numbers<[2], [1], [1], [2], [0, 0, 0, 1, 1, 2], [0], [0]>} : vector<2x4x4xbf16>, vector<2x4x16xbf16>, vector<2x4x16xf32> -> vector<2x4x16xf32>
    "tpu.trace_stop"() : () -> ()
    %74 = vector.shape_cast %73 : vector<2x4x16xf32> to vector<8x16xf32>
    %75 = tpu.concatenate %49, %74 in 1 : vector<8x16xf32>, vector<8x16xf32> -> vector<8x32xf32>
    %c0_19 = arith.constant 0 : index
    %c0_20 = arith.constant 0 : index
    %c0_21 = arith.constant 0 : index
    %76 = vector.load %arg5[%c0_19, %c0_20, %c0_21] : memref<1x32x32xbf16, #tpu.memory_space<vmem>>, vector<1x32x32xbf16>
    %77 = vector.shape_cast %76 : vector<1x32x32xbf16> to vector<32x32xbf16>
    %78 = arith.truncf %75 : vector<8x32xf32> to vector<8x32xbf16>
    %cst_22 = arith.constant dense<0.000000e+00> : vector<8x32xf32>
    %79 = tpu.matmul %78, %77, %cst_22 {dimension_numbers = #tpu.dot_dimension_numbers<[1], [0], [0], [1], [0, 0, 1, 1], [], []>} : vector<8x32xbf16>, vector<32x32xbf16>, vector<8x32xf32> -> vector<8x32xf32>
    %80 = arith.addf %4, %79 : vector<8x32xf32>
    %81 = arith.mulf %80, %80 : vector<8x32xf32>
    %cst_23 = arith.constant dense<0.000000e+00> : vector<8xf32>
    %82 = vector.multi_reduction <add>, %81, %cst_23 [1] : vector<8x32xf32> to vector<8xf32>
    %83 = vector.shape_cast %82 : vector<8xf32> to vector<8x1xf32>
    %cst_24 = arith.constant 3.200000e+01 : f32
    %84 = vector.broadcast %cst_24 : f32 to vector<8x1xf32>
    %85 = arith.divf %83, %84 : vector<8x1xf32>
    %cst_25 = arith.constant 9.99999997E-7 : f32
    %86 = vector.broadcast %cst_25 : f32 to vector<8x1xf32>
    %87 = arith.addf %85, %86 : vector<8x1xf32>
    %88 = math.rsqrt %87 : vector<8x1xf32>
    %89 = vector.broadcast %88 : vector<8x1xf32> to vector<8x32xf32>
    %90 = arith.mulf %80, %89 : vector<8x32xf32>
    %c0_26 = arith.constant 0 : index
    %c0_27 = arith.constant 0 : index
    %c0_28 = arith.constant 0 : index
    %91 = vector.load %arg6[%c0_26, %c0_27, %c0_28] : memref<1x32x32xbf16, #tpu.memory_space<vmem>>, vector<1x32x32xbf16>
    %92 = vector.shape_cast %91 : vector<1x32x32xbf16> to vector<32x32xbf16>
    %93 = arith.truncf %90 : vector<8x32xf32> to vector<8x32xbf16>
    %cst_29 = arith.constant dense<0.000000e+00> : vector<8x32xf32>
    %94 = tpu.matmul %93, %92, %cst_29 {dimension_numbers = #tpu.dot_dimension_numbers<[1], [0], [0], [1], [0, 0, 1, 1], [], []>} : vector<8x32xbf16>, vector<32x32xbf16>, vector<8x32xf32> -> vector<8x32xf32>
    %c0_30 = arith.constant 0 : index
    %c0_31 = arith.constant 0 : index
    %c0_32 = arith.constant 0 : index
    %c0_33 = arith.constant 0 : index
    %95 = vector.load %arg2[%c0_30, %c0_31, %c0_32, %c0_33] : memref<1x2x8x64xf32, #tpu.memory_space<vmem>>, vector<1x2x8x64xf32>
    %96 = vector.shape_cast %95 : vector<1x2x8x64xf32> to vector<2x8x64xf32>
    %97 = vector.extract_strided_slice %94 {offsets = [0, 0], sizes = [8, 16], strides = [1, 1]} : vector<8x32xf32> to vector<8x16xf32>
    %98 = vector.shape_cast %97 : vector<8x16xf32> to vector<2x4x16xf32>
    %99 = vector.extract_strided_slice %96 {offsets = [0, 0, 0], sizes = [2, 8, 16], strides = [1, 1, 1]} : vector<2x8x64xf32> to vector<2x8x16xf32>
    %100 = vector.extract_strided_slice %96 {offsets = [0, 0, 32], sizes = [2, 8, 16], strides = [1, 1, 1]} : vector<2x8x64xf32> to vector<2x8x16xf32>
    %101 = arith.truncf %98 : vector<2x4x16xf32> to vector<2x4x16xbf16>
    %102 = arith.truncf %99 : vector<2x8x16xf32> to vector<2x8x16xbf16>
    "tpu.trace_start"() <{level = 10 : i32, message = "bqd,bkd->bqk"}> : () -> ()
    %cst_34 = arith.constant dense<0.000000e+00> : vector<2x4x8xf32>
    %103 = tpu.matmul %101, %102, %cst_34 {dimension_numbers = #tpu.dot_dimension_numbers<[2], [2], [1], [1], [0, 0, 0, 1, 1, 1], [0], [0]>} : vector<2x4x16xbf16>, vector<2x8x16xbf16>, vector<2x4x8xf32> -> vector<2x4x8xf32>
    "tpu.trace_stop"() : () -> ()
    %cst_35 = arith.constant dense<0xFF800000> : vector<2x4xf32>
    %104 = vector.multi_reduction <maximumf>, %103, %cst_35 [2] : vector<2x4x8xf32> to vector<2x4xf32>
    %105 = vector.shape_cast %104 : vector<2x4xf32> to vector<2x4x1xf32>
    %106 = vector.broadcast %105 : vector<2x4x1xf32> to vector<2x4x8xf32>
    %107 = arith.subf %103, %106 : vector<2x4x8xf32>
    %108 = math.exp %107 : vector<2x4x8xf32>
    %cst_36 = arith.constant dense<0.000000e+00> : vector<2x4xf32>
    %109 = vector.multi_reduction <add>, %108, %cst_36 [2] : vector<2x4x8xf32> to vector<2x4xf32>
    %110 = vector.shape_cast %109 : vector<2x4xf32> to vector<2x4x1xf32>
    %111 = vector.broadcast %110 : vector<2x4x1xf32> to vector<2x4x8xf32>
    %112 = arith.divf %108, %111 : vector<2x4x8xf32>
    %113 = arith.truncf %112 : vector<2x4x8xf32> to vector<2x4x8xbf16>
    %114 = arith.truncf %100 : vector<2x8x16xf32> to vector<2x8x16xbf16>
    "tpu.trace_start"() <{level = 10 : i32, message = "bqk,bkd->bqd"}> : () -> ()
    %cst_37 = arith.constant dense<0.000000e+00> : vector<2x4x16xf32>
    %115 = tpu.matmul %113, %114, %cst_37 {dimension_numbers = #tpu.dot_dimension_numbers<[2], [1], [1], [2], [0, 0, 0, 1, 1, 2], [0], [0]>} : vector<2x4x8xbf16>, vector<2x8x16xbf16>, vector<2x4x16xf32> -> vector<2x4x16xf32>
    "tpu.trace_stop"() : () -> ()
    %116 = vector.shape_cast %115 : vector<2x4x16xf32> to vector<8x16xf32>
    %117 = vector.extract_strided_slice %94 {offsets = [0, 16], sizes = [8, 16], strides = [1, 1]} : vector<8x32xf32> to vector<8x16xf32>
    %118 = vector.shape_cast %117 : vector<8x16xf32> to vector<2x4x16xf32>
    %119 = vector.extract_strided_slice %96 {offsets = [0, 0, 16], sizes = [2, 8, 16], strides = [1, 1, 1]} : vector<2x8x64xf32> to vector<2x8x16xf32>
    %120 = vector.extract_strided_slice %96 {offsets = [0, 0, 48], sizes = [2, 8, 16], strides = [1, 1, 1]} : vector<2x8x64xf32> to vector<2x8x16xf32>
    %121 = arith.truncf %118 : vector<2x4x16xf32> to vector<2x4x16xbf16>
    %122 = arith.truncf %119 : vector<2x8x16xf32> to vector<2x8x16xbf16>
    "tpu.trace_start"() <{level = 10 : i32, message = "bqd,bkd->bqk"}> : () -> ()
    %cst_38 = arith.constant dense<0.000000e+00> : vector<2x4x8xf32>
    %123 = tpu.matmul %121, %122, %cst_38 {dimension_numbers = #tpu.dot_dimension_numbers<[2], [2], [1], [1], [0, 0, 0, 1, 1, 1], [0], [0]>} : vector<2x4x16xbf16>, vector<2x8x16xbf16>, vector<2x4x8xf32> -> vector<2x4x8xf32>
    "tpu.trace_stop"() : () -> ()
    %cst_39 = arith.constant dense<0xFF800000> : vector<2x4xf32>
    %124 = vector.multi_reduction <maximumf>, %123, %cst_39 [2] : vector<2x4x8xf32> to vector<2x4xf32>
    %125 = vector.shape_cast %124 : vector<2x4xf32> to vector<2x4x1xf32>
    %126 = vector.broadcast %125 : vector<2x4x1xf32> to vector<2x4x8xf32>
    %127 = arith.subf %123, %126 : vector<2x4x8xf32>
    %128 = math.exp %127 : vector<2x4x8xf32>
    %cst_40 = arith.constant dense<0.000000e+00> : vector<2x4xf32>
    %129 = vector.multi_reduction <add>, %128, %cst_40 [2] : vector<2x4x8xf32> to vector<2x4xf32>
    %130 = vector.shape_cast %129 : vector<2x4xf32> to vector<2x4x1xf32>
    %131 = vector.broadcast %130 : vector<2x4x1xf32> to vector<2x4x8xf32>
    %132 = arith.divf %128, %131 : vector<2x4x8xf32>
    %133 = arith.truncf %132 : vector<2x4x8xf32> to vector<2x4x8xbf16>
    %134 = arith.truncf %120 : vector<2x8x16xf32> to vector<2x8x16xbf16>
    "tpu.trace_start"() <{level = 10 : i32, message = "bqk,bkd->bqd"}> : () -> ()
    %cst_41 = arith.constant dense<0.000000e+00> : vector<2x4x16xf32>
    %135 = tpu.matmul %133, %134, %cst_41 {dimension_numbers = #tpu.dot_dimension_numbers<[2], [1], [1], [2], [0, 0, 0, 1, 1, 2], [0], [0]>} : vector<2x4x8xbf16>, vector<2x8x16xbf16>, vector<2x4x16xf32> -> vector<2x4x16xf32>
    "tpu.trace_stop"() : () -> ()
    %136 = vector.shape_cast %135 : vector<2x4x16xf32> to vector<8x16xf32>
    %137 = tpu.concatenate %116, %136 in 1 : vector<8x16xf32>, vector<8x16xf32> -> vector<8x32xf32>
    %c0_42 = arith.constant 0 : index
    %c0_43 = arith.constant 0 : index
    %c0_44 = arith.constant 0 : index
    %138 = vector.load %arg7[%c0_42, %c0_43, %c0_44] : memref<1x32x32xbf16, #tpu.memory_space<vmem>>, vector<1x32x32xbf16>
    %139 = vector.shape_cast %138 : vector<1x32x32xbf16> to vector<32x32xbf16>
    %140 = arith.truncf %137 : vector<8x32xf32> to vector<8x32xbf16>
    %cst_45 = arith.constant dense<0.000000e+00> : vector<8x32xf32>
    %141 = tpu.matmul %140, %139, %cst_45 {dimension_numbers = #tpu.dot_dimension_numbers<[1], [0], [0], [1], [0, 0, 1, 1], [], []>} : vector<8x32xbf16>, vector<32x32xbf16>, vector<8x32xf32> -> vector<8x32xf32>
    %142 = arith.addf %80, %141 : vector<8x32xf32>
    %143 = arith.mulf %142, %142 : vector<8x32xf32>
    %cst_46 = arith.constant dense<0.000000e+00> : vector<8xf32>
    %144 = vector.multi_reduction <add>, %143, %cst_46 [1] : vector<8x32xf32> to vector<8xf32>
    %145 = vector.shape_cast %144 : vector<8xf32> to vector<8x1xf32>
    %cst_47 = arith.constant 3.200000e+01 : f32
    %146 = vector.broadcast %cst_47 : f32 to vector<8x1xf32>
    %147 = arith.divf %145, %146 : vector<8x1xf32>
    %cst_48 = arith.constant 9.99999997E-7 : f32
    %148 = vector.broadcast %cst_48 : f32 to vector<8x1xf32>
    %149 = arith.addf %147, %148 : vector<8x1xf32>
    %150 = math.rsqrt %149 : vector<8x1xf32>
    %151 = vector.broadcast %150 : vector<8x1xf32> to vector<8x32xf32>
    %152 = arith.mulf %142, %151 : vector<8x32xf32>
    %c0_49 = arith.constant 0 : index
    %c0_50 = arith.constant 0 : index
    %c0_51 = arith.constant 0 : index
    %153 = vector.load %arg8[%c0_49, %c0_50, %c0_51] : memref<1x32x128xbf16, #tpu.memory_space<vmem>>, vector<1x32x128xbf16>
    %154 = vector.shape_cast %153 : vector<1x32x128xbf16> to vector<32x128xbf16>
    %155 = arith.truncf %152 : vector<8x32xf32> to vector<8x32xbf16>
    %cst_52 = arith.constant dense<0.000000e+00> : vector<8x128xf32>
    %156 = tpu.matmul %155, %154, %cst_52 {dimension_numbers = #tpu.dot_dimension_numbers<[1], [0], [0], [1], [0, 0, 1, 1], [], []>} : vector<8x32xbf16>, vector<32x128xbf16>, vector<8x128xf32> -> vector<8x128xf32>
    %cst_53 = arith.constant 0.000000e+00 : f32
    %157 = vector.broadcast %cst_53 : f32 to vector<8x128xf32>
    %158 = arith.maximumf %156, %157 : vector<8x128xf32>
    %c0_54 = arith.constant 0 : index
    %c0_55 = arith.constant 0 : index
    %c0_56 = arith.constant 0 : index
    %159 = vector.load %arg9[%c0_54, %c0_55, %c0_56] : memref<1x128x32xbf16, #tpu.memory_space<vmem>>, vector<1x128x32xbf16>
    %160 = vector.shape_cast %159 : vector<1x128x32xbf16> to vector<128x32xbf16>
    %161 = arith.truncf %158 : vector<8x128xf32> to vector<8x128xbf16>
    %cst_57 = arith.constant dense<0.000000e+00> : vector<8x32xf32>
    %162 = tpu.matmul %161, %160, %cst_57 {dimension_numbers = #tpu.dot_dimension_numbers<[1], [0], [0], [1], [0, 0, 1, 1], [], []>} : vector<8x128xbf16>, vector<128x32xbf16>, vector<8x32xf32> -> vector<8x32xf32>
    %163 = arith.addf %142, %162 : vector<8x32xf32>
    %164 = tpu.iota {dimensions = array<i32: 0>} : vector<2x8xi32>
    %165 = tpu.iota {dimensions = array<i32: 1>} : vector<2x8xi32>
    %c4_i32 = arith.constant 4 : i32
    %166 = vector.broadcast %c4_i32 : i32 to vector<2x8xi32>
    %167 = arith.muli %164, %166 : vector<2x8xi32>
    %168 = vector.broadcast %arg0 : i32 to vector<2x8xi32>
    %169 = arith.addi %167, %168 : vector<2x8xi32>
    %170 = arith.cmpi eq, %165, %169 : vector<2x8xi32>
    %171 = arith.extui %170 : vector<2x8xi1> to vector<2x8xi32>
    %172 = arith.sitofp %171 : vector<2x8xi32> to vector<2x8xf32>
    %cst_58 = arith.constant dense<0.000000e+00> : vector<2x32xf32>
    %173 = tpu.matmul %172, %163, %cst_58 {dimension_numbers = #tpu.dot_dimension_numbers<[1], [0], [0], [1], [0, 0, 1, 1], [], []>} : vector<2x8xf32>, vector<8x32xf32>, vector<2x32xf32> -> vector<2x32xf32>
    %174 = arith.mulf %173, %173 : vector<2x32xf32>
    %cst_59 = arith.constant dense<0.000000e+00> : vector<2xf32>
    %175 = vector.multi_reduction <add>, %174, %cst_59 [1] : vector<2x32xf32> to vector<2xf32>
    %176 = vector.shape_cast %175 : vector<2xf32> to vector<2x1xf32>
    %cst_60 = arith.constant 3.200000e+01 : f32
    %177 = vector.broadcast %cst_60 : f32 to vector<2x1xf32>
    %178 = arith.divf %176, %177 : vector<2x1xf32>
    %cst_61 = arith.constant 9.99999997E-7 : f32
    %179 = vector.broadcast %cst_61 : f32 to vector<2x1xf32>
    %180 = arith.addf %178, %179 : vector<2x1xf32>
    %181 = math.rsqrt %180 : vector<2x1xf32>
    %182 = vector.broadcast %181 : vector<2x1xf32> to vector<2x32xf32>
    %183 = arith.mulf %173, %182 : vector<2x32xf32>
    %c0_62 = arith.constant 0 : index
    %c0_63 = arith.constant 0 : index
    %184 = vector.load %arg10[%c0_62, %c0_63] : memref<32x128xbf16, #tpu.memory_space<vmem>>, vector<32x128xbf16>
    %185 = arith.truncf %183 : vector<2x32xf32> to vector<2x32xbf16>
    %cst_64 = arith.constant dense<0.000000e+00> : vector<2x128xf32>
    %186 = tpu.matmul %185, %184, %cst_64 {dimension_numbers = #tpu.dot_dimension_numbers<[1], [0], [0], [1], [0, 0, 1, 1], [], []>} : vector<2x32xbf16>, vector<32x128xbf16>, vector<2x128xf32> -> vector<2x128xf32>
    %c0_65 = arith.constant 0 : index
    %c0_66 = arith.constant 0 : index
    %187 = vector.load %arg11[%c0_65, %c0_66] : memref<1x128xf32, #tpu.memory_space<vmem>>, vector<1x128xf32>
    %188 = vector.broadcast %187 : vector<1x128xf32> to vector<2x128xf32>
    %189 = arith.addf %186, %188 : vector<2x128xf32>
    %190 = vector.shape_cast %189 : vector<2x128xf32> to vector<1x2x128xf32>
    %c0_67 = arith.constant 0 : index
    %c0_68 = arith.constant 0 : index
    %c0_69 = arith.constant 0 : index
    %191 = vector.load %arg12[%c0_67, %c0_68, %c0_69] : memref<1x2x128xf32, #tpu.memory_space<vmem>>, vector<1x2x128xf32>
    tpu.vector_store %arg12[%c0_67, %c0_68, %c0_69], %190 {strides = array<i32>} : memref<1x2x128xf32, #tpu.memory_space<vmem>>, vector<1x2x128xf32>,
    %192 = tpu.iota {dimensions = array<i32: 1>} : vector<2x128xi32>
    %cst_70 = arith.constant dense<0xFF800000> : vector<2xf32>
    %193 = vector.multi_reduction <maximumf>, %189, %cst_70 [1] : vector<2x128xf32> to vector<2xf32>
    %194 = vector.shape_cast %193 : vector<2xf32> to vector<2x1xf32>
    %195 = vector.broadcast %194 : vector<2x1xf32> to vector<2x128xf32>
    %196 = arith.cmpf oeq, %189, %195 : vector<2x128xf32>
    %c128_i32 = arith.constant 128 : i32
    %197 = vector.broadcast %c128_i32 : i32 to vector<2x128xi32>
    %198 = arith.select %196, %192, %197 : vector<2x128xi1>, vector<2x128xi32>
    %cst_71 = arith.constant dense<2147483647> : vector<2xi32>
    %199 = vector.multi_reduction <minsi>, %198, %cst_71 [1] : vector<2x128xi32> to vector<2xi32>
    %200 = vector.shape_cast %199 : vector<2xi32> to vector<2x1xi32>
    %201 = vector.shape_cast %200 : vector<2x1xi32> to vector<1x2x1xi32>
    %c0_72 = arith.constant 0 : index
    %c0_73 = arith.constant 0 : index
    %c0_74 = arith.constant 0 : index
    %202 = vector.load %arg13[%c0_72, %c0_73, %c0_74] : memref<1x2x1xi32, #tpu.memory_space<vmem>>, vector<1x2x1xi32>
    tpu.vector_store %arg13[%c0_72, %c0_73, %c0_74], %201 {strides = array<i32>} : memref<1x2x1xi32, #tpu.memory_space<vmem>>, vector<1x2x1xi32>,
    %c1_i32 = arith.constant 1 : i32
    %203 = arith.addi %arg0, %c1_i32 : i32
    %c4_i32_75 = arith.constant 4 : i32
    %204 = arith.cmpi slt, %203, %c4_i32_75 : i32
    %205 = arith.extui %204 : i1 to i32
    %c0_i32_76 = arith.constant 0 : i32
    %206 = arith.cmpi ne, %205, %c0_i32_76 : i32
    scf.if %206 {
      %207 = vector.broadcast %200 : vector<2x1xi32> to vector<2x128xi32>
      %208 = arith.cmpi eq, %192, %207 : vector<2x128xi32>
      %209 = arith.extui %208 : vector<2x128xi1> to vector<2x128xi32>
      %210 = arith.sitofp %209 : vector<2x128xi32> to vector<2x128xf32>
      %c0_77 = arith.constant 0 : index
      %c0_78 = arith.constant 0 : index
      %211 = vector.load %arg3[%c0_77, %c0_78] : memref<128x32xf32, #tpu.memory_space<vmem>>, vector<128x32xf32>
      %cst_79 = arith.constant dense<0.000000e+00> : vector<2x32xf32>
      %212 = tpu.matmul %210, %211, %cst_79 {dimension_numbers = #tpu.dot_dimension_numbers<[1], [0], [0], [1], [0, 0, 1, 1], [], []>} : vector<2x128xf32>, vector<128x32xf32>, vector<2x32xf32> -> vector<2x32xf32>
      %213 = vector.extract_strided_slice %212 {offsets = [0, 0], sizes = [1, 32], strides = [1, 1]} : vector<2x32xf32> to vector<1x32xf32>
      %c0_i32_80 = arith.constant 0 : i32
      %214 = arith.addi %c0_i32_80, %arg0 : i32
      %c1_i32_81 = arith.constant 1 : i32
      %215 = arith.addi %214, %c1_i32_81 : i32
      %216 = arith.index_cast %215 : i32 to index
      %c0_82 = arith.constant 0 : index
      %217 = vector.load %arg14[%216, %c0_82] : memref<8x32xf32, #tpu.memory_space<vmem>>, vector<1x32xf32>
      tpu.vector_store %arg14[%216, %c0_82], %213 {strides = array<i32>} : memref<8x32xf32, #tpu.memory_space<vmem>>, vector<1x32xf32>,
      %218 = vector.extract_strided_slice %212 {offsets = [1, 0], sizes = [1, 32], strides = [1, 1]} : vector<2x32xf32> to vector<1x32xf32>
      %c4_i32_83 = arith.constant 4 : i32
      %219 = arith.addi %c4_i32_83, %arg0 : i32
      %c1_i32_84 = arith.constant 1 : i32
      %220 = arith.addi %219, %c1_i32_84 : i32
      %221 = arith.index_cast %220 : i32 to index
      %c0_85 = arith.constant 0 : index
      %222 = vector.load %arg14[%221, %c0_85] : memref<8x32xf32, #tpu.memory_space<vmem>>, vector<1x32xf32>
      tpu.vector_store %arg14[%221, %c0_85], %218 {strides = array<i32>} : memref<8x32xf32, #tpu.memory_space<vmem>>, vector<1x32xf32>,
    } else {
    }
    return
  }
  func.func @transform_0(%arg0: i32) -> (i32, i32, i32) {
    %c0_i32 = arith.constant 0 : i32
    %c0_i32_0 = arith.constant 0 : i32
    %c0_i32_1 = arith.constant 0 : i32
    %c0_i32_2 = arith.constant 0 : i32
    return %c0_i32, %c0_i32_0, %c0_i32_1 : i32, i32, i32
  }
  func.func @transform_1(%arg0: i32) -> (i32, i32, i32, i32) {
    %c0_i32 = arith.constant 0 : i32
    %c0_i32_0 = arith.constant 0 : i32
    %c0_i32_1 = arith.constant 0 : i32
    %c0_i32_2 = arith.constant 0 : i32
    %c0_i32_3 = arith.constant 0 : i32
    return %c0_i32, %c0_i32_0, %c0_i32_1, %c0_i32_2 : i32, i32, i32, i32
  }
  func.func @transform_2(%arg0: i32) -> (i32, i32) {
    %c0_i32 = arith.constant 0 : i32
    %c0_i32_0 = arith.constant 0 : i32
    %c0_i32_1 = arith.constant 0 : i32
    return %c0_i32, %c0_i32_0 : i32, i32
  }
  func.func @transform_3(%arg0: i32) -> (i32, i32, i32) {
    %c0_i32 = arith.constant 0 : i32
    %c0_i32_0 = arith.constant 0 : i32
    %c0_i32_1 = arith.constant 0 : i32
    %c0_i32_2 = arith.constant 0 : i32
    return %c0_i32, %c0_i32_0, %c0_i32_1 : i32, i32, i32
  }
  func.func @transform_4(%arg0: i32) -> (i32, i32, i32) {
    %c0_i32 = arith.constant 0 : i32
    %c0_i32_0 = arith.constant 0 : i32
    %c0_i32_1 = arith.constant 0 : i32
    %c0_i32_2 = arith.constant 0 : i32
    return %c0_i32, %c0_i32_0, %c0_i32_1 : i32, i32, i32
  }
  func.func @transform_5(%arg0: i32) -> (i32, i32, i32) {
    %c0_i32 = arith.constant 0 : i32
    %c0_i32_0 = arith.constant 0 : i32
    %c0_i32_1 = arith.constant 0 : i32
    %c0_i32_2 = arith.constant 0 : i32
    return %c0_i32, %c0_i32_0, %c0_i32_1 : i32, i32, i32
  }
  func.func @transform_6(%arg0: i32) -> (i32, i32, i32) {
    %c0_i32 = arith.constant 0 : i32
    %c0_i32_0 = arith.constant 0 : i32
    %c0_i32_1 = arith.constant 0 : i32
    %c0_i32_2 = arith.constant 0 : i32
    return %c0_i32, %c0_i32_0, %c0_i32_1 : i32, i32, i32
  }
  func.func @transform_7(%arg0: i32) -> (i32, i32, i32) {
    %c0_i32 = arith.constant 0 : i32
    %c0_i32_0 = arith.constant 0 : i32
    %c0_i32_1 = arith.constant 0 : i32
    %c0_i32_2 = arith.constant 0 : i32
    return %c0_i32, %c0_i32_0, %c0_i32_1 : i32, i32, i32
  }
  func.func @transform_8(%arg0: i32) -> (i32, i32, i32) {
    %c0_i32 = arith.constant 0 : i32
    %c0_i32_0 = arith.constant 0 : i32
    %c0_i32_1 = arith.constant 0 : i32
    %c0_i32_2 = arith.constant 0 : i32
    return %c0_i32, %c0_i32_0, %c0_i32_1 : i32, i32, i32
  }
  func.func @transform_9(%arg0: i32) -> (i32, i32) {
    %c0_i32 = arith.constant 0 : i32
    %c0_i32_0 = arith.constant 0 : i32
    %c0_i32_1 = arith.constant 0 : i32
    return %c0_i32, %c0_i32_0 : i32, i32
  }
  func.func @transform_10(%arg0: i32) -> (i32, i32) {
    %c0_i32 = arith.constant 0 : i32
    %c0_i32_0 = arith.constant 0 : i32
    %c0_i32_1 = arith.constant 0 : i32
    return %c0_i32, %c0_i32_0 : i32, i32
  }
  func.func @transform_11(%arg0: i32) -> (i32, i32, i32) {
    %c0_i32 = arith.constant 0 : i32
    %c0_i32_0 = arith.constant 0 : i32
    %c0_i32_1 = arith.constant 0 : i32
    return %arg0, %c0_i32, %c0_i32_0 : i32, i32, i32
  }
  func.func @transform_12(%arg0: i32) -> (i32, i32, i32) {
    %c0_i32 = arith.constant 0 : i32
    %c0_i32_0 = arith.constant 0 : i32
    %c0_i32_1 = arith.constant 0 : i32
    return %arg0, %c0_i32, %c0_i32_0 : i32, i32, i32
  }
}

</mosaic_0001>

<llo_original>
// kernel: forward.2
$region0: #{forward.2}
  #allocation0 [shape = 'u32[]', space=smem, size = 0x4, offset = 0x4, fixed_abs, tag = 'smem constant byte address 0x4 - core index']
  #allocation1 [shape = 'u32[72,128]{1,0:T(1,128)}', space=vmem, size = 0x9000, scoped, tag = 'internal scratch']
  %s0 = inlined_call_operand.vmem [shape: f32[2,8,32], index: 0, kind: input, shape index: {}]
  %s1 = inlined_call_operand.vmem [shape: f32[2,8,8], index: 1, kind: input, shape index: {}]
  %s2 = inlined_call_operand.vmem [shape: bf16[1,32,128], index: 2, kind: input, shape index: {}]
  %s3 = inlined_call_operand.vmem [shape: bf16[1,32,32], index: 3, kind: input, shape index: {}]
  %s4 = inlined_call_operand.vmem [shape: bf16[1,32,128], index: 4, kind: input, shape index: {}]
  %s5 = inlined_call_operand.vmem [shape: bf16[1,128,32], index: 5, kind: input, shape index: {}]
  %s6 = inlined_call_operand.vmem [shape: bf16[1,32,64], index: 6, kind: input, shape index: {}]
  %s7 = inlined_call_operand.vmem [shape: f32[1,2,8,64], index: 7, kind: output, shape index: {}]
  %s8 = sld [smem:[#allocation0]]
  $region61: #{forward.2} parent=0
    _
  %s10 = ssub.s32 1, %s8
  %s11 = scalar_select 0, %s10, %s8
  loop: start=0, step=1, limit=4
  $region2: #{forward.2} parent=0 // loop_pre_header
    _
  $region3: #{forward.2} parent=0 // loop_header
    %s13 = sphi 0, %s17
    %p14 = scmp.ge.s32.totalorder %s13, 4
    %s23 = sphi 0, %s25
    %s26 = sphi 0, %s23
    %s27 = sphi 0, %s26
    %s43 = sphi 0, %s27
    %s47 = sphi 0, %s47
    %s49 = sphi 0, %s47
    %s50 = sphi 0, %s49
    %s64 = sphi 0, %s50
    %s68 = sphi 0, %s68
    %s70 = sphi 0, %s68
    %s71 = sphi 0, %s70
    %s85 = sphi 0, %s71
    %s89 = sphi 0, %s89
    %s91 = sphi 0, %s89
    %s92 = sphi 0, %s91
    %s106 = sphi 0, %s92
    %s110 = sphi 0, %s110
    %s112 = sphi 0, %s110
    %s113 = sphi 0, %s112
    %s127 = sphi 0, %s113
    %s131 = sphi 0, %s131
    %s133 = sphi 0, %s131
    %s134 = sphi 0, %s133
    %s148 = sphi 0, %s134
    %s152 = sphi 0, %s152
    %s154 = sphi 0, %s152
    %s155 = sphi 0, %s154
    %s169 = sphi 0, %s155
    %s175 = sphi 0, %s177
    %s178 = sphi 0, %s175
    %s179 = sphi 0, %s178
    %s195 = sphi 0, %s179
  $region4: #{forward.2} parent=0 // loop_header_branch
    %16 = sbr.rel (%p14) target = $region8
  $region5: #{forward.2} parent=0 // loop_body
    %s18 = ssub.s32 %s13, 1
    %s19 = ssub.s32 %s13, 2
    %s20 = sadd.s32 %s13, 1
    %s21 = ssub.s32 %s13, %s20
    %p22 = scmp.eq.s32.totalorder %s21, 0
    %s24 = sadd.s32 %s23, 1
    %s25 = scalar_select %p22, %s23, %s24
    %p28 = pneg %p22
    %p29 = scmp.eq.s32.totalorder %s13, 1
    %p30 = por %p28, %p29
    %p31 = scmp.ne.s32.totalorder %s23, %s26
    %p32 = scmp.eq.s32.totalorder %s13, 0
    %p33 = por %p31, %p32
    %p34 = scmp.ne.s32.totalorder %s23, %s26
    %p35 = scmp.eq.s32.totalorder %s18, 1
    %p36 = por %p34, %p35
    %p37 = scmp.ne.s32.totalorder %s26, %s27
    %p38 = scmp.eq.s32.totalorder %s18, 0
    %p39 = por %p37, %p38
    %p40 = scmp.ne.s32.totalorder %s26, %s27
    %p41 = scmp.eq.s32.totalorder %s19, 1
    %p42 = por %p40, %p41
    %p44 = scmp.ne.s32.totalorder %s27, %s43
    %p45 = scmp.eq.s32.totalorder %s19, 0
    %p46 = por %p44, %p45
    %s48 = sadd.s32 %s47, 1
    %p51 = scmp.eq.s32.totalorder %s13, 1
    %p52 = scmp.ne.s32.totalorder %s47, %s49
    %p53 = scmp.eq.s32.totalorder %s13, 0
    %p54 = por %p52, %p53
    %p55 = scmp.ne.s32.totalorder %s47, %s49
    %p56 = scmp.eq.s32.totalorder %s18, 1
    %p57 = por %p55, %p56
    %p58 = scmp.ne.s32.totalorder %s49, %s50
    %p59 = scmp.eq.s32.totalorder %s18, 0
    %p60 = por %p58, %p59
    %p61 = scmp.ne.s32.totalorder %s49, %s50
    %p62 = scmp.eq.s32.totalorder %s19, 1
    %p63 = por %p61, %p62
    %p65 = scmp.ne.s32.totalorder %s50, %s64
    %p66 = scmp.eq.s32.totalorder %s19, 0
    %p67 = por %p65, %p66
    %s69 = sadd.s32 %s68, 1
    %p72 = scmp.eq.s32.totalorder %s13, 1
    %p73 = scmp.ne.s32.totalorder %s68, %s70
    %p74 = scmp.eq.s32.totalorder %s13, 0
    %p75 = por %p73, %p74
    %p76 = scmp.ne.s32.totalorder %s68, %s70
    %p77 = scmp.eq.s32.totalorder %s18, 1
    %p78 = por %p76, %p77
    %p79 = scmp.ne.s32.totalorder %s70, %s71
    %p80 = scmp.eq.s32.totalorder %s18, 0
    %p81 = por %p79, %p80
    %p82 = scmp.ne.s32.totalorder %s70, %s71
    %p83 = scmp.eq.s32.totalorder %s19, 1
    %p84 = por %p82, %p83
    %p86 = scmp.ne.s32.totalorder %s71, %s85
    %p87 = scmp.eq.s32.totalorder %s19, 0
    %p88 = por %p86, %p87
    %s90 = sadd.s32 %s89, 1
    %p93 = scmp.eq.s32.totalorder %s13, 1
    %p94 = scmp.ne.s32.totalorder %s89, %s91
    %p95 = scmp.eq.s32.totalorder %s13, 0
    %p96 = por %p94, %p95
    %p97 = scmp.ne.s32.totalorder %s89, %s91
    %p98 = scmp.eq.s32.totalorder %s18, 1
    %p99 = por %p97, %p98
    %p100 = scmp.ne.s32.totalorder %s91, %s92
    %p101 = scmp.eq.s32.totalorder %s18, 0
    %p102 = por %p100, %p101
    %p103 = scmp.ne.s32.totalorder %s91, %s92
    %p104 = scmp.eq.s32.totalorder %s19, 1
    %p105 = por %p103, %p104
    %p107 = scmp.ne.s32.totalorder %s92, %s106
    %p108 = scmp.eq.s32.totalorder %s19, 0
    %p109 = por %p107, %p108
    %s111 = sadd.s32 %s110, 1
    %p114 = scmp.eq.s32.totalorder %s13, 1
    %p115 = scmp.ne.s32.totalorder %s110, %s112
    %p116 = scmp.eq.s32.totalorder %s13, 0
    %p117 = por %p115, %p116
    %p118 = scmp.ne.s32.totalorder %s110, %s112
    %p119 = scmp.eq.s32.totalorder %s18, 1
    %p120 = por %p118, %p119
    %p121 = scmp.ne.s32.totalorder %s112, %s113
    %p122 = scmp.eq.s32.totalorder %s18, 0
    %p123 = por %p121, %p122
    %p124 = scmp.ne.s32.totalorder %s112, %s113
    %p125 = scmp.eq.s32.totalorder %s19, 1
    %p126 = por %p124, %p125
    %p128 = scmp.ne.s32.totalorder %s113, %s127
    %p129 = scmp.eq.s32.totalorder %s19, 0
    %p130 = por %p128, %p129
    %s132 = sadd.s32 %s131, 1
    %p135 = scmp.eq.s32.totalorder %s13, 1
    %p136 = scmp.ne.s32.totalorder %s131, %s133
    %p137 = scmp.eq.s32.totalorder %s13, 0
    %p138 = por %p136, %p137
    %p139 = scmp.ne.s32.totalorder %s131, %s133
    %p140 = scmp.eq.s32.totalorder %s18, 1
    %p141 = por %p139, %p140
    %p142 = scmp.ne.s32.totalorder %s133, %s134
    %p143 = scmp.eq.s32.totalorder %s18, 0
    %p144 = por %p142, %p143
    %p145 = scmp.ne.s32.totalorder %s133, %s134
    %p146 = scmp.eq.s32.totalorder %s19, 1
    %p147 = por %p145, %p146
    %p149 = scmp.ne.s32.totalorder %s134, %s148
    %p150 = scmp.eq.s32.totalorder %s19, 0
    %p151 = por %p149, %p150
    %s153 = sadd.s32 %s152, 1
    %p156 = scmp.eq.s32.totalorder %s13, 1
    %p157 = scmp.ne.s32.totalorder %s152, %s154
    %p158 = scmp.eq.s32.totalorder %s13, 0
    %p159 = por %p157, %p158
    %p160 = scmp.ne.s32.totalorder %s152, %s154
    %p161 = scmp.eq.s32.totalorder %s18, 1
    %p162 = por %p160, %p161
    %p163 = scmp.ne.s32.totalorder %s154, %s155
    %p164 = scmp.eq.s32.totalorder %s18, 0
    %p165 = por %p163, %p164
    %p166 = scmp.ne.s32.totalorder %s154, %s155
    %p167 = scmp.eq.s32.totalorder %s19, 1
    %p168 = por %p166, %p167
    %p170 = scmp.ne.s32.totalorder %s155, %s169
    %p171 = scmp.eq.s32.totalorder %s19, 0
    %p172 = por %p170, %p171
    %s173 = ssub.s32 %s13, %s20
    %p174 = scmp.eq.s32.totalorder %s173, 0
    %s176 = sadd.s32 %s175, 1
    %s177 = scalar_select %p174, %s175, %s176
    %p180 = pneg %p174
    %p181 = scmp.eq.s32.totalorder %s13, 1
    %p182 = por %p180, %p181
    %p183 = scmp.ne.s32.totalorder %s175, %s178
    %p184 = scmp.eq.s32.totalorder %s13, 0
    %p185 = por %p183, %p184
    %p186 = scmp.ne.s32.totalorder %s175, %s178
    %p187 = scmp.eq.s32.totalorder %s18, 1
    %p188 = por %p186, %p187
    %p189 = scmp.ne.s32.totalorder %s178, %s179
    %p190 = scmp.eq.s32.totalorder %s18, 0
    %p191 = por %p189, %p190
    %p192 = scmp.ne.s32.totalorder %s178, %s179
    %p193 = scmp.eq.s32.totalorder %s19, 1
    %p194 = por %p192, %p193
    %p196 = scmp.ne.s32.totalorder %s179, %s195
    %p197 = scmp.eq.s32.totalorder %s19, 0
    %p198 = por %p196, %p197
    %p199 = scmp.le.s32.totalorder 1, %s13
    %p200 = scmp.lt.s32.totalorder %s13, 3
    %p201 = pnand %p199, %p200
    %p202 = pneg %p201
    // Predicated region
    $region9: #{forward.2} parent=5 // pred_check
      _
    $region10: #{forward.2} parent=5 // pred_check_branch
      %204 = sbr.rel (%p201) target = $region12
    $region11: #{forward.2} parent=5 // pred_region
      %s205 = ssub.s32 %s13, 1
      // Predicated region
      $region13: #{forward.2} parent=11 // pred_check
        %p206 = pneg %p60
      $region14: #{forward.2} parent=11 // pred_check_branch
        %208 = sbr.rel (%p206) target = $region16
      $region15: #{forward.2} parent=11 // pred_region
        _
      $region16: #{forward.2} parent=11 // pred_fallthru
        _
      // Predicated region
      $region17: #{forward.2} parent=11 // pred_check
        %p209 = pneg %p81
      $region18: #{forward.2} parent=11 // pred_check_branch
        %211 = sbr.rel (%p209) target = $region20
      $region19: #{forward.2} parent=11 // pred_region
        _
      $region20: #{forward.2} parent=11 // pred_fallthru
        _
      // Predicated region
      $region21: #{forward.2} parent=11 // pred_check
        %p212 = pneg %p102
      $region22: #{forward.2} parent=11 // pred_check_branch
        %214 = sbr.rel (%p212) target = $region24
      $region23: #{forward.2} parent=11 // pred_region
        _
      $region24: #{forward.2} parent=11 // pred_fallthru
        _
      // Predicated region
      $region25: #{forward.2} parent=11 // pred_check
        %p215 = pneg %p123
      $region26: #{forward.2} parent=11 // pred_check_branch
        %217 = sbr.rel (%p215) target = $region28
      $region27: #{forward.2} parent=11 // pred_region
        _
      $region28: #{forward.2} parent=11 // pred_fallthru
        _
      // Predicated region
      $region29: #{forward.2} parent=11 // pred_check
        %p218 = pneg %p144
      $region30: #{forward.2} parent=11 // pred_check_branch
        %220 = sbr.rel (%p218) target = $region32
      $region31: #{forward.2} parent=11 // pred_region
        _
      $region32: #{forward.2} parent=11 // pred_fallthru
        _
      // Predicated region
      $region33: #{forward.2} parent=11 // pred_check
        %p221 = pneg %p165
      $region34: #{forward.2} parent=11 // pred_check_branch
        %223 = sbr.rel (%p221) target = $region36
      $region35: #{forward.2} parent=11 // pred_region
        _
      $region36: #{forward.2} parent=11 // pred_fallthru
        _
    $region12: #{forward.2} parent=5 // pred_fallthru
      _
    %p224 = scmp.lt.s32.totalorder %s13, 2
    // Predicated region
    $region37: #{forward.2} parent=5 // pred_check
      %p225 = pneg %p224
    $region38: #{forward.2} parent=5 // pred_check_branch
      %227 = sbr.rel (%p225) target = $region40
    $region39: #{forward.2} parent=5 // pred_region
      // Predicated region
      $region41: #{forward.2} parent=39 // pred_check
        %p228 = pneg %p33
      $region42: #{forward.2} parent=39 // pred_check_branch
        %230 = sbr.rel (%p228) target = $region44
      $region43: #{forward.2} parent=39 // pred_region
        %p231 = scmp.lt.s32.totalorder %s13, 1
        %s232 = scalar_select %p231, %s13, 1
        %s233 = smul.addr %s232, 8
        %s234 = scalar_lea.vmem %s0, %s233
      $region44: #{forward.2} parent=39 // pred_fallthru
        _
    $region40: #{forward.2} parent=5 // pred_fallthru
      _
    %p235 = scmp.le.s32.totalorder 1, %s13
    %p236 = scmp.lt.s32.totalorder %s13, 3
    %p237 = pnand %p235, %p236
    %p238 = pneg %p237
    // Predicated region
    $region45: #{forward.2} parent=5 // pred_check
      _
    $region46: #{forward.2} parent=5 // pred_check_branch
      %240 = sbr.rel (%p237) target = $region48
    $region47: #{forward.2} parent=5 // pred_region
      %s241 = ssub.s32 %s13, 1
      %p242 = scmp.lt.s32.totalorder %s18, 1
      %s243 = scalar_select %p242, %s18, 1
      %s244 = smul.addr %s243, 8
      %s245 = scalar_lea.vmem %s0, %s244
      %p246 = pneg %p39
      %p247 = pneg %p36
      %p248 = pneg %p60
      %p249 = pneg %p57
      %p250 = pneg %p81
      %p251 = pneg %p78
      %p252 = pneg %p102
      %p253 = pneg %p99
      %p254 = pneg %p123
      %p255 = pneg %p120
      %p256 = pneg %p144
      %p257 = pneg %p141
      %p258 = pneg %p165
      %p259 = pneg %p162
      %p260 = pneg %p191
      %p261 = pneg %p188
      %p262 = scmp.lt.s32.totalorder %s18, 1
      %s263 = scalar_select %p262, %s18, 1
      %s264 = smul.addr %s263, 8
      %s265 = scalar_lea.vmem %s7, %s264
      %p266 = scmp.lt.s32.totalorder %s18, 1
      %s267 = scalar_select %p266, %s18, 1
      %s268 = smul.addr %s267, 8
      %s269 = scalar_lea.vmem %s0, %s268
      %p270 = scmp.lt.s32.totalorder %s18, 1
      %s271 = scalar_select %p270, %s18, 1
      %s272 = smul.addr %s271, 8
      %s273 = scalar_lea.vmem %s7, %s272
      %v275 = vld [vmem:[%s269] sm:$0xff]
      %v276 = vld [vmem:[%s1] sm:$0xff]
      %v277 = vld [vmem:[%s1 + $0x8] sm:$0xff]
      %v278 = vmul.f32 %v275, %v275
      %vm279 = vcmask 261120
      %v280 = vsel %vm279, %v278, 0.0
      %281 = vadd.xlane.f32.xlu0 %v280
      %v282 = vpop.xlane.xlu0 %281
      %v283 = vrcp.pop 32.0
      %v284 = vmul.f32 32.0, %v283
      %v285 = vsub.f32 1.0, %v284
      %v286 = vmul.f32 %v283, %v285
      %v287 = vadd.f32 %v283, %v286
      %vm288 = vweird.f32 %v283
      %v289 = vsel %vm288, %v283, %v287
      %v290 = vmul.f32 %v282, %v289
      %v291 = vadd.f32 %v290, 1e-06
      %v292 = vrsqrt.pop %v291
      %v293 = vmul.f32 %v292, %v291
      %v294 = vmul.f32 %v293, %v292
      %v295 = vmul.f32 0.5, %v294
      %v296 = vsub.f32 1.5, %v295
      %v297 = vmul.f32 %v292, %v296
      %vm298 = vweird.f32 %v291
      %vm299 = vweird.f32 %v292
      %vm300 = vmor %vm298, %vm299
      %v301 = vsel %vm300, %v292, %v297
      %v302 = vmul.f32 %v275, %v301
      %v303 = vld [vmem:[%s2] sm:$0xf]
      %v304 = vld [vmem:[%s2 + $0x4] sm:$0xf]
      %v305 = vld [vmem:[%s2 + $0x8] sm:$0xf]
      %v306 = vld [vmem:[%s2 + $0xc] sm:$0xf]
      %v307 = vpack.c.bf16 %v302, %v302
      %v312 = vunpack.c.l.b16 %v303
      %v313 = vunpack.c.l.b16 %v304
      %v314 = vunpack.c.l.b16 %v305
      %v315 = vunpack.c.l.b16 %v306
      %v316 = vpack.c.b16 %v313, %v312
      %v317 = vpack.c.b16 %v315, %v314
      %v321 = vsel %vm279, %v307, 0
      %323 = vmatpush.bf16.msra.mxu0 0
      %324 = vmatpush.bf16.msra.mxu0 0
      %325 = vmatpush.bf16.msra.mxu0 0
      %326 = vmatpush.bf16.msra.mxu0 0
      %327 = vmatpush.bf16.msra.mxu0 0
      %328 = vmatpush.bf16.msra.mxu0 0
      %329 = vmatpush.bf16.msra.mxu0 %v317
      %330 = vmatpush.bf16.msra.mxu0 %v316
      %331 = vmatmul.bf16.gmra.mxu0 %v321
      %v332 = vpop.f32.mrf.mxu0
      %v333 = vadd.f32 0.0, %v332
      %v334 = vpop.f32.mrf.mxu0
      %335 = vdwg.mxu0
      %v336 = vpack.c.bf16 %v333, %v333
      %338 = vrot.lane.b32.xlu0 %v336, 96
      %v339 = vpop.permute.xlu0 %338
      %vm340 = vcmask 130048
      %v342 = vsel %vm340, %v336, 0
      %v345 = vsel %vm340, %v339, 0
      %347 = vmatpush.bf16.xpose.msra.mxu0 0
      %348 = vmatpush.bf16.xpose.msra.mxu0 0
      %349 = vmatpush.bf16.xpose.msra.mxu0 0
      %350 = vmatpush.bf16.xpose.msra.mxu0 0
      %351 = vmatpush.bf16.xpose.msra.mxu0 0
      %352 = vmatpush.bf16.xpose.msra.mxu0 0
      %353 = vmatpush.bf16.xpose.msra.mxu0 0
      %354 = vmatpush.bf16.xpose.msra.mxu0 %v345
      %355 = vmatmul.bf16.gmra.mxu0 %v342
      %v356 = vpop.f32.mrf.mxu0
      %v357 = vadd.f32 %v276, %v356
      %v358 = vpop.f32.mrf.mxu0
      %359 = vdwg.mxu0
      %vm360 = vcmask 64512
      %v361 = vsel %vm360, %v357, -inf
      %362 = vmax.xlane.f32.xlu0 %v361
      %v363 = vpop.xlane.xlu0 %362
      %v364 = vsub.f32 %v357, %v363
      %v365 = vmul.f32 %v364, 1.442695
      %v366 = vpow.pop %v365
      %v367 = vsel %vm360, %v366, 0.0
      %368 = vadd.xlane.f32.xlu0 %v367
      %v369 = vpop.xlane.xlu0 %368
      %v370 = vrcp.pop %v369
      %v371 = vmul.f32 %v369, %v370
      %v372 = vsub.f32 1.0, %v371
      %v373 = vmul.f32 %v370, %v372
      %v374 = vadd.f32 %v370, %v373
      %vm375 = vweird.f32 %v369
      %vm376 = vweird.f32 %v370
      %vm377 = vmor %vm375, %vm376
      %v378 = vsel %vm377, %v370, %v374
      %v379 = vand.u32 2147483647, %v369
      %vm380 = vcmp.eq.f32.partialorder %v379, 8.507059e+37
      %v381 = vand.u32 %v369, 2147483648
      %v382 = vor.u32 1.1754944e-38, %v381
      %v383 = vsel %vm380, %v382, %v378
      %v384 = vmul.f32 %v366, %v383
      %v385 = vpack.c.bf16 %v384, %v384
      %386 = vrot.lane.b32.xlu0 %v336, 64
      %v387 = vpop.permute.xlu0 %386
      %v389 = vsel %vm360, %v385, 0
      %vm391 = vcmask 1043456
      %v393 = vsel %vm391, %v387, 0
      %395 = vmatpush.bf16.msra.mxu0 0
      %396 = vmatpush.bf16.msra.mxu0 0
      %397 = vmatpush.bf16.msra.mxu0 0
      %398 = vmatpush.bf16.msra.mxu0 0
      %399 = vmatpush.bf16.msra.mxu0 0
      %400 = vmatpush.bf16.msra.mxu0 0
      %401 = vmatpush.bf16.msra.mxu0 0
      %402 = vmatpush.bf16.msra.mxu0 %v393
      %403 = vmatmul.bf16.gmra.mxu0 %v389
      %v404 = vpop.f32.mrf.mxu0
      %v405 = vadd.f32 0.0, %v404
      %v406 = vpop.f32.mrf.mxu0
      %407 = vdwg.mxu0
      %408 = vrot.lane.b32.xlu0 %v336, 112
      %v409 = vpop.permute.xlu0 %408
      %410 = vrot.lane.b32.xlu0 %v336, 80
      %v411 = vpop.permute.xlu0 %410
      %v413 = vsel %vm340, %v409, 0
      %v416 = vsel %vm340, %v411, 0
      %418 = vmatpush.bf16.xpose.msra.mxu0 0
      %419 = vmatpush.bf16.xpose.msra.mxu0 0
      %420 = vmatpush.bf16.xpose.msra.mxu0 0
      %421 = vmatpush.bf16.xpose.msra.mxu0 0
      %422 = vmatpush.bf16.xpose.msra.mxu0 0
      %423 = vmatpush.bf16.xpose.msra.mxu0 0
      %424 = vmatpush.bf16.xpose.msra.mxu0 0
      %425 = vmatpush.bf16.xpose.msra.mxu0 %v416
      %426 = vmatmul.bf16.gmra.mxu0 %v413
      %v427 = vpop.f32.mrf.mxu0
      %v428 = vadd.f32 %v277, %v427
      %v429 = vpop.f32.mrf.mxu0
      %430 = vdwg.mxu0
      %v431 = vsel %vm360, %v428, -inf
      %432 = vmax.xlane.f32.xlu0 %v431
      %v433 = vpop.xlane.xlu0 %432
      %v434 = vsub.f32 %v428, %v433
      %v435 = vmul.f32 %v434, 1.442695
      %v436 = vpow.pop %v435
      %v437 = vsel %vm360, %v436, 0.0
      %438 = vadd.xlane.f32.xlu0 %v437
      %v439 = vpop.xlane.xlu0 %438
      %v440 = vrcp.pop %v439
      %v441 = vmul.f32 %v439, %v440
      %v442 = vsub.f32 1.0, %v441
      %v443 = vmul.f32 %v440, %v442
      %v444 = vadd.f32 %v440, %v443
      %vm445 = vweird.f32 %v439
      %vm446 = vweird.f32 %v440
      %vm447 = vmor %vm445, %vm446
      %v448 = vsel %vm447, %v440, %v444
      %v449 = vand.u32 2147483647, %v439
      %vm450 = vcmp.eq.f32.partialorder %v449, 8.507059e+37
      %v451 = vand.u32 %v439, 2147483648
      %v452 = vor.u32 1.1754944e-38, %v451
      %v453 = vsel %vm450, %v452, %v448
      %v454 = vmul.f32 %v436, %v453
      %v455 = vpack.c.bf16 %v454, %v454
      %456 = vrot.lane.b32.xlu0 %v336, 48
      %v457 = vpop.permute.xlu0 %456
      %v459 = vsel %vm360, %v455, 0
      %v462 = vsel %vm391, %v457, 0
      %464 = vmatpush.bf16.msra.mxu0 0
      %465 = vmatpush.bf16.msra.mxu0 0
      %466 = vmatpush.bf16.msra.mxu0 0
      %467 = vmatpush.bf16.msra.mxu0 0
      %468 = vmatpush.bf16.msra.mxu0 0
      %469 = vmatpush.bf16.msra.mxu0 0
      %470 = vmatpush.bf16.msra.mxu0 0
      %471 = vmatpush.bf16.msra.mxu0 %v462
      %472 = vmatmul.bf16.gmra.mxu0 %v459
      %v473 = vpop.f32.mrf.mxu0
      %v474 = vadd.f32 0.0, %v473
      %v475 = vpop.f32.mrf.mxu0
      %476 = vdwg.mxu0
      %478 = vrot.lane.b32.xlu0 %v474, 16
      %v479 = vpop.permute.xlu0 %478
      %v481 = vsel %vm340, %v405, %v479
      %v482 = vld [vmem:[%s3] sm:$0xf]
      %v483 = vld [vmem:[%s3 + $0x4] sm:$0xf]
      %v484 = vld [vmem:[%s3 + $0x8] sm:$0xf]
      %v485 = vld [vmem:[%s3 + $0xc] sm:$0xf]
      %v486 = vpack.c.bf16 %v481, %v481
      %v491 = vunpack.c.l.b16 %v482
      %v492 = vunpack.c.l.b16 %v483
      %v493 = vunpack.c.l.b16 %v484
      %v494 = vunpack.c.l.b16 %v485
      %v495 = vpack.c.b16 %v492, %v491
      %v496 = vpack.c.b16 %v494, %v493
      %v500 = vsel %vm279, %v486, 0
      %502 = vmatpush.bf16.msra.mxu0 0
      %503 = vmatpush.bf16.msra.mxu0 0
      %504 = vmatpush.bf16.msra.mxu0 0
      %505 = vmatpush.bf16.msra.mxu0 0
      %506 = vmatpush.bf16.msra.mxu0 0
      %507 = vmatpush.bf16.msra.mxu0 0
      %508 = vmatpush.bf16.msra.mxu0 %v496
      %509 = vmatpush.bf16.msra.mxu0 %v495
      %510 = vmatmul.bf16.gmra.mxu0 %v500
      %v511 = vpop.f32.mrf.mxu0
      %v512 = vadd.f32 0.0, %v511
      %v513 = vpop.f32.mrf.mxu0
      %514 = vdwg.mxu0
      %v515 = vadd.f32 %v275, %v512
      %v516 = vmul.f32 %v515, %v515
      %v517 = vsel %vm279, %v516, 0.0
      %518 = vadd.xlane.f32.xlu0 %v517
      %v519 = vpop.xlane.xlu0 %518
      %v520 = vmul.f32 %v519, %v289
      %v521 = vadd.f32 %v520, 1e-06
      %v522 = vrsqrt.pop %v521
      %v523 = vmul.f32 %v522, %v521
      %v524 = vmul.f32 %v523, %v522
      %v525 = vmul.f32 0.5, %v524
      %v526 = vsub.f32 1.5, %v525
      %v527 = vmul.f32 %v522, %v526
      %vm528 = vweird.f32 %v521
      %vm529 = vweird.f32 %v522
      %vm530 = vmor %vm528, %vm529
      %v531 = vsel %vm530, %v522, %v527
      %v532 = vmul.f32 %v515, %v531
      %v533 = vld [vmem:[%s4] sm:$0xf]
      %v534 = vld [vmem:[%s4 + $0x4] sm:$0xf]
      %v535 = vld [vmem:[%s4 + $0x8] sm:$0xf]
      %v536 = vld [vmem:[%s4 + $0xc] sm:$0xf]
      %v537 = vpack.c.bf16 %v532, %v532
      %v542 = vunpack.c.l.b16 %v533
      %v543 = vunpack.c.l.b16 %v534
      %v544 = vunpack.c.l.b16 %v535
      %v545 = vunpack.c.l.b16 %v536
      %v546 = vpack.c.b16 %v543, %v542
      %v547 = vpack.c.b16 %v545, %v544
      %v551 = vsel %vm279, %v537, 0
      %553 = vmatpush.bf16.msra.mxu0 0
      %554 = vmatpush.bf16.msra.mxu0 0
      %555 = vmatpush.bf16.msra.mxu0 0
      %556 = vmatpush.bf16.msra.mxu0 0
      %557 = vmatpush.bf16.msra.mxu0 0
      %558 = vmatpush.bf16.msra.mxu0 0
      %559 = vmatpush.bf16.msra.mxu0 %v547
      %560 = vmatpush.bf16.msra.mxu0 %v546
      %561 = vmatmul.bf16.gmra.mxu0 %v551
      %v562 = vpop.f32.mrf.mxu0
      %v563 = vadd.f32 0.0, %v562
      %v564 = vpop.f32.mrf.mxu0
      %565 = vdwg.mxu0
      %v566 = vmax.f32 %v563, 0.0
      %v567 = vld [vmem:[%s5] sm:$0xf]
      %v568 = vld [vmem:[%s5 + $0x4] sm:$0xf]
      %v569 = vld [vmem:[%s5 + $0x8] sm:$0xf]
      %v570 = vld [vmem:[%s5 + $0xc] sm:$0xf]
      %v571 = vld [vmem:[%s5 + $0x10] sm:$0xf]
      %v572 = vld [vmem:[%s5 + $0x14] sm:$0xf]
      %v573 = vld [vmem:[%s5 + $0x18] sm:$0xf]
      %v574 = vld [vmem:[%s5 + $0x1c] sm:$0xf]
      %v575 = vld [vmem:[%s5 + $0x20] sm:$0xf]
      %v576 = vld [vmem:[%s5 + $0x24] sm:$0xf]
      %v577 = vld [vmem:[%s5 + $0x28] sm:$0xf]
      %v578 = vld [vmem:[%s5 + $0x2c] sm:$0xf]
      %v579 = vld [vmem:[%s5 + $0x30] sm:$0xf]
      %v580 = vld [vmem:[%s5 + $0x34] sm:$0xf]
      %v581 = vld [vmem:[%s5 + $0x38] sm:$0xf]
      %v582 = vld [vmem:[%s5 + $0x3c] sm:$0xf]
      %v583 = vpack.c.bf16 %v566, %v566
      %v600 = vunpack.c.l.b16 %v567
      %v601 = vunpack.c.l.b16 %v568
      %v602 = vunpack.c.l.b16 %v569
      %v603 = vunpack.c.l.b16 %v570
      %v604 = vunpack.c.l.b16 %v571
      %v605 = vunpack.c.l.b16 %v572
      %v606 = vunpack.c.l.b16 %v573
      %v607 = vunpack.c.l.b16 %v574
      %v608 = vunpack.c.l.b16 %v575
      %v609 = vunpack.c.l.b16 %v576
      %v610 = vunpack.c.l.b16 %v577
      %v611 = vunpack.c.l.b16 %v578
      %v612 = vunpack.c.l.b16 %v579
      %v613 = vunpack.c.l.b16 %v580
      %v614 = vunpack.c.l.b16 %v581
      %v615 = vunpack.c.l.b16 %v582
      %v616 = vpack.c.b16 %v601, %v600
      %v617 = vpack.c.b16 %v603, %v602
      %v618 = vpack.c.b16 %v605, %v604
      %v619 = vpack.c.b16 %v607, %v606
      %v620 = vpack.c.b16 %v609, %v608
      %v621 = vpack.c.b16 %v611, %v610
      %v622 = vpack.c.b16 %v613, %v612
      %v623 = vpack.c.b16 %v615, %v614
      %632 = vmatpush.bf16.msra.mxu0 %v623
      %633 = vmatpush.bf16.msra.mxu0 %v622
      %634 = vmatpush.bf16.msra.mxu0 %v621
      %635 = vmatpush.bf16.msra.mxu0 %v620
      %636 = vmatpush.bf16.msra.mxu0 %v619
      %637 = vmatpush.bf16.msra.mxu0 %v618
      %638 = vmatpush.bf16.msra.mxu0 %v617
      %639 = vmatpush.bf16.msra.mxu0 %v616
      %640 = vmatmul.bf16.gmra.mxu0 %v583
      %v641 = vpop.f32.mrf.mxu0
      %v642 = vadd.f32 0.0, %v641
      %v643 = vpop.f32.mrf.mxu0
      %644 = vdwg.mxu0
      %v645 = vadd.f32 %v515, %v642
      %v646 = vmul.f32 %v645, %v645
      %v647 = vsel %vm279, %v646, 0.0
      %648 = vadd.xlane.f32.xlu0 %v647
      %v649 = vpop.xlane.xlu0 %648
      %v650 = vmul.f32 %v649, %v289
      %v651 = vadd.f32 %v650, 1e-06
      %v652 = vrsqrt.pop %v651
      %v653 = vmul.f32 %v652, %v651
      %v654 = vmul.f32 %v653, %v652
      %v655 = vmul.f32 0.5, %v654
      %v656 = vsub.f32 1.5, %v655
      %v657 = vmul.f32 %v652, %v656
      %vm658 = vweird.f32 %v651
      %vm659 = vweird.f32 %v652
      %vm660 = vmor %vm658, %vm659
      %v661 = vsel %vm660, %v652, %v657
      %v662 = vmul.f32 %v645, %v661
      %v663 = vld [vmem:[%s6] sm:$0xf]
      %v664 = vld [vmem:[%s6 + $0x4] sm:$0xf]
      %v665 = vld [vmem:[%s6 + $0x8] sm:$0xf]
      %v666 = vld [vmem:[%s6 + $0xc] sm:$0xf]
      %v667 = vpack.c.bf16 %v662, %v662
      %v672 = vunpack.c.l.b16 %v663
      %v673 = vunpack.c.l.b16 %v664
      %v674 = vunpack.c.l.b16 %v665
      %v675 = vunpack.c.l.b16 %v666
      %v676 = vpack.c.b16 %v673, %v672
      %v677 = vpack.c.b16 %v675, %v674
      %v681 = vsel %vm279, %v667, 0
      %683 = vmatpush.bf16.msra.mxu0 0
      %684 = vmatpush.bf16.msra.mxu0 0
      %685 = vmatpush.bf16.msra.mxu0 0
      %686 = vmatpush.bf16.msra.mxu0 0
      %687 = vmatpush.bf16.msra.mxu0 0
      %688 = vmatpush.bf16.msra.mxu0 0
      %689 = vmatpush.bf16.msra.mxu0 %v677
      %690 = vmatpush.bf16.msra.mxu0 %v676
      %691 = vmatmul.bf16.gmra.mxu0 %v681
      %v692 = vpop.f32.mrf.mxu0
      %v693 = vadd.f32 0.0, %v692
      %v694 = vpop.f32.mrf.mxu0
      %695 = vdwg.mxu0
      %vm696 = vcmask 523264
      %697 = vst.msk [vmem:[%s273] sm:$0xff] %vm696, %v693
      %p698 = scmp.lt.s32.totalorder %s18, 1
      %s699 = scalar_select %p698, %s18, 1
      %s700 = smul.addr %s699, 8
      %s701 = scalar_lea.vmem %s7, %s700
      // Predicated region
      $region49: #{forward.2} parent=47 // pred_check
        %p702 = pneg %p188
      $region50: #{forward.2} parent=47 // pred_check_branch
        %704 = sbr.rel (%p702) target = $region52
      $region51: #{forward.2} parent=47 // pred_region
        _
      $region52: #{forward.2} parent=47 // pred_fallthru
        _
    $region48: #{forward.2} parent=5 // pred_fallthru
      _
    %p705 = scmp.le.s32.totalorder 2, %s13
    // Predicated region
    $region53: #{forward.2} parent=5 // pred_check
      %p706 = pneg %p705
    $region54: #{forward.2} parent=5 // pred_check_branch
      %708 = sbr.rel (%p706) target = $region56
    $region55: #{forward.2} parent=5 // pred_region
      %s709 = ssub.s32 %s13, 2
      // Predicated region
      $region57: #{forward.2} parent=55 // pred_check
        %p710 = pneg %p194
      $region58: #{forward.2} parent=55 // pred_check_branch
        %712 = sbr.rel (%p710) target = $region60
      $region59: #{forward.2} parent=55 // pred_region
        %p713 = scmp.lt.s32.totalorder %s19, 1
        %s714 = scalar_select %p713, %s19, 1
        %s715 = smul.addr %s714, 8
        %s716 = scalar_lea.vmem %s7, %s715
      $region60: #{forward.2} parent=55 // pred_fallthru
        _
    $region56: #{forward.2} parent=5 // pred_fallthru
      _
  $region6: #{forward.2} parent=0 // loop_footer
    %s17 = sadd.s32 1, %s13
  $region7: #{forward.2} parent=0 // loop_footer_branch
    %12 = sbr.rel target = $region3
  $region8: #{forward.2} parent=0 // loop_exit
    _

// kernel: forward.3
$region0: #{forward.3}
  #allocation0 [shape = 'u32[]', space=smem, size = 0x4, offset = 0x4, fixed_abs, tag = 'smem constant byte address 0x4 - core index']
  #allocation1 [shape = 'u32[72,128]{1,0:T(1,128)}', space=vmem, size = 0x9000, scoped, tag = 'internal scratch']
  #allocation2 [shape = 'f32[8,32]{1,0:T(8,128)}', space=vmem, size = 0x1000, scoped, tag = 'scratch operand']
  %s0 = inlined_call_operand.vmem [shape: f32[2,4,4], index: 0, kind: input, shape index: {}]
  %s1 = inlined_call_operand.vmem [shape: f32[1,2,8,64], index: 1, kind: input, shape index: {}]
  %s2 = inlined_call_operand.vmem [shape: f32[128,32], index: 2, kind: input, shape index: {}]
  %s3 = inlined_call_operand.vmem [shape: bf16[1,32,128], index: 3, kind: input, shape index: {}]
  %s4 = inlined_call_operand.vmem [shape: bf16[1,32,32], index: 4, kind: input, shape index: {}]
  %s5 = inlined_call_operand.vmem [shape: bf16[1,32,32], index: 5, kind: input, shape index: {}]
  %s6 = inlined_call_operand.vmem [shape: bf16[1,32,32], index: 6, kind: input, shape index: {}]
  %s7 = inlined_call_operand.vmem [shape: bf16[1,32,128], index: 7, kind: input, shape index: {}]
  %s8 = inlined_call_operand.vmem [shape: bf16[1,128,32], index: 8, kind: input, shape index: {}]
  %s9 = inlined_call_operand.vmem [shape: bf16[32,128], index: 9, kind: input, shape index: {}]
  %s10 = inlined_call_operand.vmem [shape: f32[1,128], index: 10, kind: input, shape index: {}]
  %s11 = inlined_call_operand.hbm [shape: f32[4,2,128], index: 11, kind: output, shape index: {0}]
  %s12 = inlined_call_operand.vmem [shape: s32[4,2,1], index: 12, kind: output, shape index: {1}]
  %13 = xla_tuple %s11, %s12
  %s14 = sld [smem:[#allocation0]]
  $region93: #{forward.3} parent=0
    _
  %s16 = ssub.s32 1, %s14
  %s17 = scalar_select 0, %s16, %s14
  $region1: #{forward.3} parent=0
    #allocation3 [shape = 'u8[2048]{0}', space=vmem, size = 0x800, scoped, tag = 'output window, operand 0']
    #allocation4 [shape = 's32[2]{0}', space=sflag, size = 0x8, scoped, tag = 'scoped memory for forward.3']
    %18 = vsyncpa [#allocation4], 0
    %s19 = scalar_lea.sflag [#allocation4], 1
    %20 = vsyncpa %s19, 0
    loop: start=0, step=1, limit=6
    $region2: #{forward.3} parent=1 // loop_pre_header
      _
    $region3: #{forward.3} parent=1 // loop_header
      %s22 = sphi 0, %s26
      %p23 = scmp.ge.s32.totalorder %s22, 6
      %s30 = sphi 0, %s30
      %s32 = sphi 0, %s30
      %s33 = sphi 0, %s32
      %s47 = sphi 0, %s33
      %s51 = sphi 0, %s51
      %s53 = sphi 0, %s51
      %s54 = sphi 0, %s53
      %s68 = sphi 0, %s54
      %s72 = sphi 0, %s72
      %s74 = sphi 0, %s72
      %s75 = sphi 0, %s74
      %s89 = sphi 0, %s75
      %s93 = sphi 0, %s93
      %s95 = sphi 0, %s93
      %s96 = sphi 0, %s95
      %s110 = sphi 0, %s96
      %s114 = sphi 0, %s114
      %s116 = sphi 0, %s114
      %s117 = sphi 0, %s116
      %s131 = sphi 0, %s117
      %s135 = sphi 0, %s135
      %s137 = sphi 0, %s135
      %s138 = sphi 0, %s137
      %s152 = sphi 0, %s138
      %s156 = sphi 0, %s156
      %s158 = sphi 0, %s156
      %s159 = sphi 0, %s158
      %s173 = sphi 0, %s159
      %s177 = sphi 0, %s177
      %s179 = sphi 0, %s177
      %s180 = sphi 0, %s179
      %s194 = sphi 0, %s180
      %s198 = sphi 0, %s198
      %s200 = sphi 0, %s198
      %s201 = sphi 0, %s200
      %s215 = sphi 0, %s201
      %s219 = sphi 0, %s219
      %s221 = sphi 0, %s219
      %s222 = sphi 0, %s221
      %s236 = sphi 0, %s222
      %s240 = sphi 0, %s240
      %s242 = sphi 0, %s240
      %s243 = sphi 0, %s242
      %s257 = sphi 0, %s243
      %s263 = sphi 0, %s265
      %s266 = sphi 0, %s263
      %s267 = sphi 0, %s266
      %s283 = sphi 0, %s267
      %s289 = sphi 0, %s291
      %s292 = sphi 0, %s289
      %s293 = sphi 0, %s292
      %s309 = sphi 0, %s293
    $region4: #{forward.3} parent=1 // loop_header_branch
      %25 = sbr.rel (%p23) target = $region8
    $region5: #{forward.3} parent=1 // loop_body
      %s27 = ssub.s32 %s22, 1
      %s28 = ssub.s32 %s22, 2
      %s29 = sadd.s32 %s22, 1
      %s31 = sadd.s32 %s30, 1
      %p34 = scmp.eq.s32.totalorder %s22, 3
      %p35 = scmp.ne.s32.totalorder %s30, %s32
      %p36 = scmp.eq.s32.totalorder %s22, 0
      %p37 = por %p35, %p36
      %p38 = scmp.ne.s32.totalorder %s30, %s32
      %p39 = scmp.eq.s32.totalorder %s27, 3
      %p40 = por %p38, %p39
      %p41 = scmp.ne.s32.totalorder %s32, %s33
      %p42 = scmp.eq.s32.totalorder %s27, 0
      %p43 = por %p41, %p42
      %p44 = scmp.ne.s32.totalorder %s32, %s33
      %p45 = scmp.eq.s32.totalorder %s28, 3
      %p46 = por %p44, %p45
      %p48 = scmp.ne.s32.totalorder %s33, %s47
      %p49 = scmp.eq.s32.totalorder %s28, 0
      %p50 = por %p48, %p49
      %s52 = sadd.s32 %s51, 1
      %p55 = scmp.eq.s32.totalorder %s22, 3
      %p56 = scmp.ne.s32.totalorder %s51, %s53
      %p57 = scmp.eq.s32.totalorder %s22, 0
      %p58 = por %p56, %p57
      %p59 = scmp.ne.s32.totalorder %s51, %s53
      %p60 = scmp.eq.s32.totalorder %s27, 3
      %p61 = por %p59, %p60
      %p62 = scmp.ne.s32.totalorder %s53, %s54
      %p63 = scmp.eq.s32.totalorder %s27, 0
      %p64 = por %p62, %p63
      %p65 = scmp.ne.s32.totalorder %s53, %s54
      %p66 = scmp.eq.s32.totalorder %s28, 3
      %p67 = por %p65, %p66
      %p69 = scmp.ne.s32.totalorder %s54, %s68
      %p70 = scmp.eq.s32.totalorder %s28, 0
      %p71 = por %p69, %p70
      %s73 = sadd.s32 %s72, 1
      %p76 = scmp.eq.s32.totalorder %s22, 3
      %p77 = scmp.ne.s32.totalorder %s72, %s74
      %p78 = scmp.eq.s32.totalorder %s22, 0
      %p79 = por %p77, %p78
      %p80 = scmp.ne.s32.totalorder %s72, %s74
      %p81 = scmp.eq.s32.totalorder %s27, 3
      %p82 = por %p80, %p81
      %p83 = scmp.ne.s32.totalorder %s74, %s75
      %p84 = scmp.eq.s32.totalorder %s27, 0
      %p85 = por %p83, %p84
      %p86 = scmp.ne.s32.totalorder %s74, %s75
      %p87 = scmp.eq.s32.totalorder %s28, 3
      %p88 = por %p86, %p87
      %p90 = scmp.ne.s32.totalorder %s75, %s89
      %p91 = scmp.eq.s32.totalorder %s28, 0
      %p92 = por %p90, %p91
      %s94 = sadd.s32 %s93, 1
      %p97 = scmp.eq.s32.totalorder %s22, 3
      %p98 = scmp.ne.s32.totalorder %s93, %s95
      %p99 = scmp.eq.s32.totalorder %s22, 0
      %p100 = por %p98, %p99
      %p101 = scmp.ne.s32.totalorder %s93, %s95
      %p102 = scmp.eq.s32.totalorder %s27, 3
      %p103 = por %p101, %p102
      %p104 = scmp.ne.s32.totalorder %s95, %s96
      %p105 = scmp.eq.s32.totalorder %s27, 0
      %p106 = por %p104, %p105
      %p107 = scmp.ne.s32.totalorder %s95, %s96
      %p108 = scmp.eq.s32.totalorder %s28, 3
      %p109 = por %p107, %p108
      %p111 = scmp.ne.s32.totalorder %s96, %s110
      %p112 = scmp.eq.s32.totalorder %s28, 0
      %p113 = por %p111, %p112
      %s115 = sadd.s32 %s114, 1
      %p118 = scmp.eq.s32.totalorder %s22, 3
      %p119 = scmp.ne.s32.totalorder %s114, %s116
      %p120 = scmp.eq.s32.totalorder %s22, 0
      %p121 = por %p119, %p120
      %p122 = scmp.ne.s32.totalorder %s114, %s116
      %p123 = scmp.eq.s32.totalorder %s27, 3
      %p124 = por %p122, %p123
      %p125 = scmp.ne.s32.totalorder %s116, %s117
      %p126 = scmp.eq.s32.totalorder %s27, 0
      %p127 = por %p125, %p126
      %p128 = scmp.ne.s32.totalorder %s116, %s117
      %p129 = scmp.eq.s32.totalorder %s28, 3
      %p130 = por %p128, %p129
      %p132 = scmp.ne.s32.totalorder %s117, %s131
      %p133 = scmp.eq.s32.totalorder %s28, 0
      %p134 = por %p132, %p133
      %s136 = sadd.s32 %s135, 1
      %p139 = scmp.eq.s32.totalorder %s22, 3
      %p140 = scmp.ne.s32.totalorder %s135, %s137
      %p141 = scmp.eq.s32.totalorder %s22, 0
      %p142 = por %p140, %p141
      %p143 = scmp.ne.s32.totalorder %s135, %s137
      %p144 = scmp.eq.s32.totalorder %s27, 3
      %p145 = por %p143, %p144
      %p146 = scmp.ne.s32.totalorder %s137, %s138
      %p147 = scmp.eq.s32.totalorder %s27, 0
      %p148 = por %p146, %p147
      %p149 = scmp.ne.s32.totalorder %s137, %s138
      %p150 = scmp.eq.s32.totalorder %s28, 3
      %p151 = por %p149, %p150
      %p153 = scmp.ne.s32.totalorder %s138, %s152
      %p154 = scmp.eq.s32.totalorder %s28, 0
      %p155 = por %p153, %p154
      %s157 = sadd.s32 %s156, 1
      %p160 = scmp.eq.s32.totalorder %s22, 3
      %p161 = scmp.ne.s32.totalorder %s156, %s158
      %p162 = scmp.eq.s32.totalorder %s22, 0
      %p163 = por %p161, %p162
      %p164 = scmp.ne.s32.totalorder %s156, %s158
      %p165 = scmp.eq.s32.totalorder %s27, 3
      %p166 = por %p164, %p165
      %p167 = scmp.ne.s32.totalorder %s158, %s159
      %p168 = scmp.eq.s32.totalorder %s27, 0
      %p169 = por %p167, %p168
      %p170 = scmp.ne.s32.totalorder %s158, %s159
      %p171 = scmp.eq.s32.totalorder %s28, 3
      %p172 = por %p170, %p171
      %p174 = scmp.ne.s32.totalorder %s159, %s173
      %p175 = scmp.eq.s32.totalorder %s28, 0
      %p176 = por %p174, %p175
      %s178 = sadd.s32 %s177, 1
      %p181 = scmp.eq.s32.totalorder %s22, 3
      %p182 = scmp.ne.s32.totalorder %s177, %s179
      %p183 = scmp.eq.s32.totalorder %s22, 0
      %p184 = por %p182, %p183
      %p185 = scmp.ne.s32.totalorder %s177, %s179
      %p186 = scmp.eq.s32.totalorder %s27, 3
      %p187 = por %p185, %p186
      %p188 = scmp.ne.s32.totalorder %s179, %s180
      %p189 = scmp.eq.s32.totalorder %s27, 0
      %p190 = por %p188, %p189
      %p191 = scmp.ne.s32.totalorder %s179, %s180
      %p192 = scmp.eq.s32.totalorder %s28, 3
      %p193 = por %p191, %p192
      %p195 = scmp.ne.s32.totalorder %s180, %s194
      %p196 = scmp.eq.s32.totalorder %s28, 0
      %p197 = por %p195, %p196
      %s199 = sadd.s32 %s198, 1
      %p202 = scmp.eq.s32.totalorder %s22, 3
      %p203 = scmp.ne.s32.totalorder %s198, %s200
      %p204 = scmp.eq.s32.totalorder %s22, 0
      %p205 = por %p203, %p204
      %p206 = scmp.ne.s32.totalorder %s198, %s200
      %p207 = scmp.eq.s32.totalorder %s27, 3
      %p208 = por %p206, %p207
      %p209 = scmp.ne.s32.totalorder %s200, %s201
      %p210 = scmp.eq.s32.totalorder %s27, 0
      %p211 = por %p209, %p210
      %p212 = scmp.ne.s32.totalorder %s200, %s201
      %p213 = scmp.eq.s32.totalorder %s28, 3
      %p214 = por %p212, %p213
      %p216 = scmp.ne.s32.totalorder %s201, %s215
      %p217 = scmp.eq.s32.totalorder %s28, 0
      %p218 = por %p216, %p217
      %s220 = sadd.s32 %s219, 1
      %p223 = scmp.eq.s32.totalorder %s22, 3
      %p224 = scmp.ne.s32.totalorder %s219, %s221
      %p225 = scmp.eq.s32.totalorder %s22, 0
      %p226 = por %p224, %p225
      %p227 = scmp.ne.s32.totalorder %s219, %s221
      %p228 = scmp.eq.s32.totalorder %s27, 3
      %p229 = por %p227, %p228
      %p230 = scmp.ne.s32.totalorder %s221, %s222
      %p231 = scmp.eq.s32.totalorder %s27, 0
      %p232 = por %p230, %p231
      %p233 = scmp.ne.s32.totalorder %s221, %s222
      %p234 = scmp.eq.s32.totalorder %s28, 3
      %p235 = por %p233, %p234
      %p237 = scmp.ne.s32.totalorder %s222, %s236
      %p238 = scmp.eq.s32.totalorder %s28, 0
      %p239 = por %p237, %p238
      %s241 = sadd.s32 %s240, 1
      %p244 = scmp.eq.s32.totalorder %s22, 3
      %p245 = scmp.ne.s32.totalorder %s240, %s242
      %p246 = scmp.eq.s32.totalorder %s22, 0
      %p247 = por %p245, %p246
      %p248 = scmp.ne.s32.totalorder %s240, %s242
      %p249 = scmp.eq.s32.totalorder %s27, 3
      %p250 = por %p248, %p249
      %p251 = scmp.ne.s32.totalorder %s242, %s243
      %p252 = scmp.eq.s32.totalorder %s27, 0
      %p253 = por %p251, %p252
      %p254 = scmp.ne.s32.totalorder %s242, %s243
      %p255 = scmp.eq.s32.totalorder %s28, 3
      %p256 = por %p254, %p255
      %p258 = scmp.ne.s32.totalorder %s243, %s257
      %p259 = scmp.eq.s32.totalorder %s28, 0
      %p260 = por %p258, %p259
      %s261 = ssub.s32 %s22, %s29
      %p262 = scmp.eq.s32.totalorder %s261, 0
      %s264 = sadd.s32 %s263, 1
      %s265 = scalar_select %p262, %s263, %s264
      %p268 = pneg %p262
      %p269 = scmp.eq.s32.totalorder %s22, 3
      %p270 = por %p268, %p269
      %p271 = scmp.ne.s32.totalorder %s263, %s266
      %p272 = scmp.eq.s32.totalorder %s22, 0
      %p273 = por %p271, %p272
      %p274 = scmp.ne.s32.totalorder %s263, %s266
      %p275 = scmp.eq.s32.totalorder %s27, 3
      %p276 = por %p274, %p275
      %p277 = scmp.ne.s32.totalorder %s266, %s267
      %p278 = scmp.eq.s32.totalorder %s27, 0
      %p279 = por %p277, %p278
      %p280 = scmp.ne.s32.totalorder %s266, %s267
      %p281 = scmp.eq.s32.totalorder %s28, 3
      %p282 = por %p280, %p281
      %p284 = scmp.ne.s32.totalorder %s267, %s283
      %p285 = scmp.eq.s32.totalorder %s28, 0
      %p286 = por %p284, %p285
      %s287 = ssub.s32 %s22, %s29
      %p288 = scmp.eq.s32.totalorder %s287, 0
      %s290 = sadd.s32 %s289, 1
      %s291 = scalar_select %p288, %s289, %s290
      %p294 = pneg %p288
      %p295 = scmp.eq.s32.totalorder %s22, 3
      %p296 = por %p294, %p295
      %p297 = scmp.ne.s32.totalorder %s289, %s292
      %p298 = scmp.eq.s32.totalorder %s22, 0
      %p299 = por %p297, %p298
      %p300 = scmp.ne.s32.totalorder %s289, %s292
      %p301 = scmp.eq.s32.totalorder %s27, 3
      %p302 = por %p300, %p301
      %p303 = scmp.ne.s32.totalorder %s292, %s293
      %p304 = scmp.eq.s32.totalorder %s27, 0
      %p305 = por %p303, %p304
      %p306 = scmp.ne.s32.totalorder %s292, %s293
      %p307 = scmp.eq.s32.totalorder %s28, 3
      %p308 = por %p306, %p307
      %p310 = scmp.ne.s32.totalorder %s293, %s309
      %p311 = scmp.eq.s32.totalorder %s28, 0
      %p312 = por %p310, %p311
      %p313 = scmp.le.s32.totalorder 1, %s22
      %p314 = scmp.lt.s32.totalorder %s22, 5
      %p315 = pnand %p313, %p314
      %p316 = pneg %p315
      // Predicated region
      $region9: #{forward.3} parent=5 // pred_check
        _
      $region10: #{forward.3} parent=5 // pred_check_branch
        %318 = sbr.rel (%p315) target = $region12
      $region11: #{forward.3} parent=5 // pred_region
        %s319 = ssub.s32 %s22, 1
        // Predicated region
        $region13: #{forward.3} parent=11 // pred_check
          %p320 = pneg %p43
        $region14: #{forward.3} parent=11 // pred_check_branch
          %322 = sbr.rel (%p320) target = $region16
        $region15: #{forward.3} parent=11 // pred_region
          _
        $region16: #{forward.3} parent=11 // pred_fallthru
          _
        // Predicated region
        $region17: #{forward.3} parent=11 // pred_check
          %p323 = pneg %p64
        $region18: #{forward.3} parent=11 // pred_check_branch
          %325 = sbr.rel (%p323) target = $region20
        $region19: #{forward.3} parent=11 // pred_region
          _
        $region20: #{forward.3} parent=11 // pred_fallthru
          _
        // Predicated region
        $region21: #{forward.3} parent=11 // pred_check
          %p326 = pneg %p85
        $region22: #{forward.3} parent=11 // pred_check_branch
          %328 = sbr.rel (%p326) target = $region24
        $region23: #{forward.3} parent=11 // pred_region
          _
        $region24: #{forward.3} parent=11 // pred_fallthru
          _
        // Predicated region
        $region25: #{forward.3} parent=11 // pred_check
          %p329 = pneg %p106
        $region26: #{forward.3} parent=11 // pred_check_branch
          %331 = sbr.rel (%p329) target = $region28
        $region27: #{forward.3} parent=11 // pred_region
          _
        $region28: #{forward.3} parent=11 // pred_fallthru
          _
        // Predicated region
        $region29: #{forward.3} parent=11 // pred_check
          %p332 = pneg %p127
        $region30: #{forward.3} parent=11 // pred_check_branch
          %334 = sbr.rel (%p332) target = $region32
        $region31: #{forward.3} parent=11 // pred_region
          _
        $region32: #{forward.3} parent=11 // pred_fallthru
          _
        // Predicated region
        $region33: #{forward.3} parent=11 // pred_check
          %p335 = pneg %p148
        $region34: #{forward.3} parent=11 // pred_check_branch
          %337 = sbr.rel (%p335) target = $region36
        $region35: #{forward.3} parent=11 // pred_region
          _
        $region36: #{forward.3} parent=11 // pred_fallthru
          _
        // Predicated region
        $region37: #{forward.3} parent=11 // pred_check
          %p338 = pneg %p169
        $region38: #{forward.3} parent=11 // pred_check_branch
          %340 = sbr.rel (%p338) target = $region40
        $region39: #{forward.3} parent=11 // pred_region
          _
        $region40: #{forward.3} parent=11 // pred_fallthru
          _
        // Predicated region
        $region41: #{forward.3} parent=11 // pred_check
          %p341 = pneg %p190
        $region42: #{forward.3} parent=11 // pred_check_branch
          %343 = sbr.rel (%p341) target = $region44
        $region43: #{forward.3} parent=11 // pred_region
          _
        $region44: #{forward.3} parent=11 // pred_fallthru
          _
        // Predicated region
        $region45: #{forward.3} parent=11 // pred_check
          %p344 = pneg %p211
        $region46: #{forward.3} parent=11 // pred_check_branch
          %346 = sbr.rel (%p344) target = $region48
        $region47: #{forward.3} parent=11 // pred_region
          _
        $region48: #{forward.3} parent=11 // pred_fallthru
          _
        // Predicated region
        $region49: #{forward.3} parent=11 // pred_check
          %p347 = pneg %p232
        $region50: #{forward.3} parent=11 // pred_check_branch
          %349 = sbr.rel (%p347) target = $region52
        $region51: #{forward.3} parent=11 // pred_region
          _
        $region52: #{forward.3} parent=11 // pred_fallthru
          _
        // Predicated region
        $region53: #{forward.3} parent=11 // pred_check
          %p350 = pneg %p253
        $region54: #{forward.3} parent=11 // pred_check_branch
          %352 = sbr.rel (%p350) target = $region56
        $region55: #{forward.3} parent=11 // pred_region
          _
        $region56: #{forward.3} parent=11 // pred_fallthru
          _
      $region12: #{forward.3} parent=5 // pred_fallthru
        _
      %p353 = scmp.lt.s32.totalorder %s22, 4
      // Predicated region
      $region57: #{forward.3} parent=5 // pred_check
        %p354 = pneg %p353
      $region58: #{forward.3} parent=5 // pred_check_branch
        %356 = sbr.rel (%p354) target = $region60
      $region59: #{forward.3} parent=5 // pred_region
        _
      $region60: #{forward.3} parent=5 // pred_fallthru
        _
      %p357 = scmp.le.s32.totalorder 1, %s22
      %p358 = scmp.lt.s32.totalorder %s22, 5
      %p359 = pnand %p357, %p358
      %p360 = pneg %p359
      // Predicated region
      $region61: #{forward.3} parent=5 // pred_check
        _
      $region62: #{forward.3} parent=5 // pred_check_branch
        %362 = sbr.rel (%p359) target = $region64
      $region63: #{forward.3} parent=5 // pred_region
        %s363 = ssub.s32 %s22, 1
        %p364 = pneg %p43
        %p365 = pneg %p40
        %p366 = pneg %p64
        %p367 = pneg %p61
        %p368 = pneg %p85
        %p369 = pneg %p82
        %p370 = pneg %p106
        %p371 = pneg %p103
        %p372 = pneg %p127
        %p373 = pneg %p124
        %p374 = pneg %p148
        %p375 = pneg %p145
        %p376 = pneg %p169
        %p377 = pneg %p166
        %p378 = pneg %p190
        %p379 = pneg %p187
        %p380 = pneg %p211
        %p381 = pneg %p208
        %p382 = pneg %p232
        %p383 = pneg %p229
        %p384 = pneg %p253
        %p385 = pneg %p250
        %p386 = pneg %p279
        %p387 = pneg %p276
        %s388 = sand.u32 %s266, 1
        %s389 = scalar_lea.sflag [#allocation4], %s388
        %s390 = sand.u32 %s266, 1
        %s391 = smul.addr %s390, 2
        %s392 = scalar_lea.vmem [#allocation3], %s391
        %p393 = pneg %p305
        %p394 = pneg %p302
        %p395 = scmp.lt.s32.totalorder %s27, 3
        %s396 = scalar_select %p395, %s27, 3
        %s397 = smul.addr %s396, 2
        %s398 = scalar_lea.vmem %s12, %s397
        %p399 = scmp.lt.s32.totalorder %s27, 3
        %s400 = scalar_select %p399, %s27, 3
        %s401 = smul.addr %s400, 2
        %s402 = scalar_lea.vmem %s12, %s401
        %p404 = scmp.eq.s32.totalorder %s27, 0
        // Predicated region
        $region65: #{forward.3} parent=63 // pred_check
          %p405 = pneg %p404
        $region66: #{forward.3} parent=63 // pred_check_branch
          %407 = sbr.rel (%p405) target = $region68
        $region67: #{forward.3} parent=63 // pred_region
          %vm408 = vcmask 261120
          %409 = vst.msk [vmem:[#allocation2] sm:$0xff] %vm408, 0.0
          %v410 = vld [vmem:[%s2 + $0x1] sm:$0x1]
          %vm411 = vcmask 253952
          %412 = vst.msk [vmem:[#allocation2] sm:$0x1] %vm411, %v410
          %v413 = vld [vmem:[%s2 + $0x1] sm:$0x1]
          %414 = vst.msk [vmem:[#allocation2 + $0x4] sm:$0x1] %vm411, %v413
        $region68: #{forward.3} parent=63 // pred_fallthru
          _
        %v415 = vld [vmem:[%s0] sm:$0xf]
        %v416 = vld [vmem:[%s0 + $0x4] sm:$0xf]
        %v417 = vld [vmem:[#allocation2] sm:$0xff]
        %v418 = vmul.f32 %v417, %v417
        %vm419 = vcmask 261120
        %v420 = vsel %vm419, %v418, 0.0
        %421 = vadd.xlane.f32.xlu0 %v420
        %v422 = vpop.xlane.xlu0 %421
        %v423 = vrcp.pop 32.0
        %v424 = vmul.f32 32.0, %v423
        %v425 = vsub.f32 1.0, %v424
        %v426 = vmul.f32 %v423, %v425
        %v427 = vadd.f32 %v423, %v426
        %vm428 = vweird.f32 %v423
        %v429 = vsel %vm428, %v423, %v427
        %v430 = vmul.f32 %v422, %v429
        %v431 = vadd.f32 %v430, 1e-06
        %v432 = vrsqrt.pop %v431
        %v433 = vmul.f32 %v432, %v431
        %v434 = vmul.f32 %v433, %v432
        %v435 = vmul.f32 0.5, %v434
        %v436 = vsub.f32 1.5, %v435
        %v437 = vmul.f32 %v432, %v436
        %vm438 = vweird.f32 %v431
        %vm439 = vweird.f32 %v432
        %vm440 = vmor %vm438, %vm439
        %v441 = vsel %vm440, %v432, %v437
        %v442 = vmul.f32 %v417, %v441
        %v443 = vld [vmem:[%s3] sm:$0xf]
        %v444 = vld [vmem:[%s3 + $0x4] sm:$0xf]
        %v445 = vld [vmem:[%s3 + $0x8] sm:$0xf]
        %v446 = vld [vmem:[%s3 + $0xc] sm:$0xf]
        %v447 = vpack.c.bf16 %v442, %v442
        %v452 = vunpack.c.l.b16 %v443
        %v453 = vunpack.c.l.b16 %v444
        %v454 = vunpack.c.l.b16 %v445
        %v455 = vunpack.c.l.b16 %v446
        %v456 = vpack.c.b16 %v453, %v452
        %v457 = vpack.c.b16 %v455, %v454
        %v461 = vsel %vm419, %v447, 0
        %463 = vmatpush.bf16.msra.mxu0 0
        %464 = vmatpush.bf16.msra.mxu0 0
        %465 = vmatpush.bf16.msra.mxu0 0
        %466 = vmatpush.bf16.msra.mxu0 0
        %467 = vmatpush.bf16.msra.mxu0 0
        %468 = vmatpush.bf16.msra.mxu0 0
        %469 = vmatpush.bf16.msra.mxu0 %v457
        %470 = vmatpush.bf16.msra.mxu0 %v456
        %471 = vmatmul.bf16.gmra.mxu0 %v461
        %v472 = vpop.f32.mrf.mxu0
        %v473 = vadd.f32 0.0, %v472
        %v474 = vpop.f32.mrf.mxu0
        %475 = vdwg.mxu0
        %v477 = vrot.slane %v473, 4
        %478 = vst [vmem:[#allocation1] ss:$2 sm:$0xff] %v473
        %v479 = vld.sshfl [vmem:[#allocation1] sm:$0xff pattern:$0x75316420]
        %s480 = scalar_lea.vmem [#allocation1], 16
        %481 = vst [vmem:[%s480] ss:$2 sm:$0xff] %v477
        %v482 = vld.sshfl [vmem:[#allocation1 + $0x10] sm:$0xff pattern:$0x75316420]
        %483 = vrot.lane.b32.xlu0 %v479, 96
        %v484 = vpop.permute.xlu0 %483
        %485 = vrot.lane.b32.xlu0 %v482, 96
        %v486 = vpop.permute.xlu0 %485
        %489 = vst [vmem:[#allocation1] ss:$2 sm:$0xff] %v473
        %v490 = vld.sshfl [vmem:[#allocation1] sm:$0xff pattern:$0x75316420]
        %s491 = scalar_lea.vmem [#allocation1], 16
        %492 = vst [vmem:[%s491] ss:$2 sm:$0xff] %v477
        %v493 = vld.sshfl [vmem:[#allocation1 + $0x10] sm:$0xff pattern:$0x75316420]
        %494 = vrot.lane.b32.xlu0 %v490, 96
        %v495 = vpop.permute.xlu0 %494
        %496 = vrot.lane.b32.xlu0 %v493, 96
        %v497 = vpop.permute.xlu0 %496
        %v500 = vsel %vm419, %v484, %v495
        %v501 = vsel %vm419, %v486, %v497
        %v503 = vpack.c.bf16 %v473, %v473
        %v504 = vpack.c.bf16 %v477, %v477
        %v505 = vpack.c.bf16 %v500, %v500
        %v506 = vpack.c.bf16 %v501, %v501
        %vm507 = vcmask 130048
        %v509 = vsel %vm507, %v503, 0
        %v512 = vsel %vm507, %v505, 0
        %514 = vmatpush.bf16.xpose.msra.mxu0 0
        %515 = vmatpush.bf16.xpose.msra.mxu0 0
        %516 = vmatpush.bf16.xpose.msra.mxu0 0
        %517 = vmatpush.bf16.xpose.msra.mxu0 0
        %518 = vmatpush.bf16.xpose.msra.mxu0 0
        %519 = vmatpush.bf16.xpose.msra.mxu0 0
        %520 = vmatpush.bf16.xpose.msra.mxu0 0
        %521 = vmatpush.bf16.xpose.msra.mxu0 %v512
        %522 = vmatmul.bf16.gmra.mxu0 %v509
        %v523 = vpop.f32.mrf.mxu0
        %v524 = vadd.f32 %v415, %v523
        %v525 = vpop.f32.mrf.mxu0
        %526 = vdwg.mxu0
        %v528 = vsel %vm507, %v504, 0
        %v531 = vsel %vm507, %v506, 0
        %533 = vmatpush.bf16.xpose.msra.mxu0 0
        %534 = vmatpush.bf16.xpose.msra.mxu0 0
        %535 = vmatpush.bf16.xpose.msra.mxu0 0
        %536 = vmatpush.bf16.xpose.msra.mxu0 0
        %537 = vmatpush.bf16.xpose.msra.mxu0 0
        %538 = vmatpush.bf16.xpose.msra.mxu0 0
        %539 = vmatpush.bf16.xpose.msra.mxu0 0
        %540 = vmatpush.bf16.xpose.msra.mxu0 %v531
        %541 = vmatmul.bf16.gmra.mxu0 %v528
        %v542 = vpop.f32.mrf.mxu0
        %v543 = vadd.f32 %v415, %v542
        %v544 = vpop.f32.mrf.mxu0
        %545 = vdwg.mxu0
        %vm546 = vcmask 27648
        %v547 = vsel %vm546, %v524, -inf
        %548 = vmax.xlane.f32.xlu0 %v547
        %v549 = vpop.xlane.xlu0 %548
        %v550 = vsel %vm546, %v543, -inf
        %551 = vmax.xlane.f32.xlu0 %v550
        %v552 = vpop.xlane.xlu0 %551
        %v553 = vsub.f32 %v524, %v549
        %v554 = vsub.f32 %v543, %v552
        %v555 = vmul.f32 %v553, 1.442695
        %v556 = vpow.pop %v555
        %v557 = vmul.f32 %v554, 1.442695
        %v558 = vpow.pop %v557
        %v559 = vsel %vm546, %v556, 0.0
        %560 = vadd.xlane.f32.xlu0 %v559
        %v561 = vpop.xlane.xlu0 %560
        %v562 = vsel %vm546, %v558, 0.0
        %563 = vadd.xlane.f32.xlu0 %v562
        %v564 = vpop.xlane.xlu0 %563
        %v565 = vrcp.pop %v561
        %v566 = vmul.f32 %v561, %v565
        %v567 = vsub.f32 1.0, %v566
        %v568 = vmul.f32 %v565, %v567
        %v569 = vadd.f32 %v565, %v568
        %vm570 = vweird.f32 %v561
        %vm571 = vweird.f32 %v565
        %vm572 = vmor %vm570, %vm571
        %v573 = vsel %vm572, %v565, %v569
        %v574 = vand.u32 2147483647, %v561
        %vm575 = vcmp.eq.f32.partialorder %v574, 8.507059e+37
        %v576 = vand.u32 %v561, 2147483648
        %v577 = vor.u32 1.1754944e-38, %v576
        %v578 = vsel %vm575, %v577, %v573
        %v579 = vmul.f32 %v556, %v578
        %v580 = vrcp.pop %v564
        %v581 = vmul.f32 %v564, %v580
        %v582 = vsub.f32 1.0, %v581
        %v583 = vmul.f32 %v580, %v582
        %v584 = vadd.f32 %v580, %v583
        %vm585 = vweird.f32 %v564
        %vm586 = vweird.f32 %v580
        %vm587 = vmor %vm585, %vm586
        %v588 = vsel %vm587, %v580, %v584
        %v589 = vand.u32 2147483647, %v564
        %vm590 = vcmp.eq.f32.partialorder %v589, 8.507059e+37
        %v591 = vand.u32 %v564, 2147483648
        %v592 = vor.u32 1.1754944e-38, %v591
        %v593 = vsel %vm590, %v592, %v588
        %v594 = vmul.f32 %v558, %v593
        %v595 = vpack.c.bf16 %v579, %v579
        %v596 = vpack.c.bf16 %v594, %v594
        %v598 = vunpack.c.l.b16 %v505
        %v599 = vpack.c.b16 %v598, %v598
        %600 = vrot.lane.b32.xlu0 %v599, 96
        %v601 = vpop.permute.xlu0 %600
        %vm602 = vcmask 31744
        %v604 = vsel %vm602, %v595, 0
        %vm606 = vcmask 1041408
        %v608 = vsel %vm606, %v601, 0
        %610 = vmatpush.bf16.msra.mxu0 0
        %611 = vmatpush.bf16.msra.mxu0 0
        %612 = vmatpush.bf16.msra.mxu0 0
        %613 = vmatpush.bf16.msra.mxu0 0
        %614 = vmatpush.bf16.msra.mxu0 0
        %615 = vmatpush.bf16.msra.mxu0 0
        %616 = vmatpush.bf16.msra.mxu0 0
        %617 = vmatpush.bf16.msra.mxu0 %v608
        %618 = vmatmul.bf16.gmra.mxu0 %v604
        %v619 = vpop.f32.mrf.mxu0
        %v620 = vadd.f32 0.0, %v619
        %v621 = vpop.f32.mrf.mxu0
        %622 = vdwg.mxu0
        %v624 = vunpack.c.l.b16 %v506
        %v625 = vpack.c.b16 %v624, %v624
        %626 = vrot.lane.b32.xlu0 %v625, 96
        %v627 = vpop.permute.xlu0 %626
        %v629 = vsel %vm602, %v596, 0
        %v632 = vsel %vm606, %v627, 0
        %634 = vmatpush.bf16.msra.mxu0 0
        %635 = vmatpush.bf16.msra.mxu0 0
        %636 = vmatpush.bf16.msra.mxu0 0
        %637 = vmatpush.bf16.msra.mxu0 0
        %638 = vmatpush.bf16.msra.mxu0 0
        %639 = vmatpush.bf16.msra.mxu0 0
        %640 = vmatpush.bf16.msra.mxu0 0
        %641 = vmatpush.bf16.msra.mxu0 %v632
        %642 = vmatmul.bf16.gmra.mxu0 %v629
        %v643 = vpop.f32.mrf.mxu0
        %v644 = vadd.f32 0.0, %v643
        %v645 = vpop.f32.mrf.mxu0
        %646 = vdwg.mxu0
        %v648 = vunpack.c.l.b16 %v503
        %v649 = vpack.c.b16 %v648, %v648
        %650 = vrot.lane.b32.xlu0 %v649, 112
        %v651 = vpop.permute.xlu0 %650
        %652 = vrot.lane.b32.xlu0 %v599, 112
        %v653 = vpop.permute.xlu0 %652
        %v655 = vsel %vm507, %v651, 0
        %v658 = vsel %vm507, %v653, 0
        %660 = vmatpush.bf16.xpose.msra.mxu0 0
        %661 = vmatpush.bf16.xpose.msra.mxu0 0
        %662 = vmatpush.bf16.xpose.msra.mxu0 0
        %663 = vmatpush.bf16.xpose.msra.mxu0 0
        %664 = vmatpush.bf16.xpose.msra.mxu0 0
        %665 = vmatpush.bf16.xpose.msra.mxu0 0
        %666 = vmatpush.bf16.xpose.msra.mxu0 0
        %667 = vmatpush.bf16.xpose.msra.mxu0 %v658
        %668 = vmatmul.bf16.gmra.mxu0 %v655
        %v669 = vpop.f32.mrf.mxu0
        %v670 = vadd.f32 %v416, %v669
        %v671 = vpop.f32.mrf.mxu0
        %672 = vdwg.mxu0
        %v674 = vunpack.c.l.b16 %v504
        %v675 = vpack.c.b16 %v674, %v674
        %676 = vrot.lane.b32.xlu0 %v675, 112
        %v677 = vpop.permute.xlu0 %676
        %678 = vrot.lane.b32.xlu0 %v625, 112
        %v679 = vpop.permute.xlu0 %678
        %v681 = vsel %vm507, %v677, 0
        %v684 = vsel %vm507, %v679, 0
        %686 = vmatpush.bf16.xpose.msra.mxu0 0
        %687 = vmatpush.bf16.xpose.msra.mxu0 0
        %688 = vmatpush.bf16.xpose.msra.mxu0 0
        %689 = vmatpush.bf16.xpose.msra.mxu0 0
        %690 = vmatpush.bf16.xpose.msra.mxu0 0
        %691 = vmatpush.bf16.xpose.msra.mxu0 0
        %692 = vmatpush.bf16.xpose.msra.mxu0 0
        %693 = vmatpush.bf16.xpose.msra.mxu0 %v684
        %694 = vmatmul.bf16.gmra.mxu0 %v681
        %v695 = vpop.f32.mrf.mxu0
        %v696 = vadd.f32 %v416, %v695
        %v697 = vpop.f32.mrf.mxu0
        %698 = vdwg.mxu0
        %v699 = vsel %vm546, %v670, -inf
        %700 = vmax.xlane.f32.xlu0 %v699
        %v701 = vpop.xlane.xlu0 %700
        %v702 = vsel %vm546, %v696, -inf
        %703 = vmax.xlane.f32.xlu0 %v702
        %v704 = vpop.xlane.xlu0 %703
        %v705 = vsub.f32 %v670, %v701
        %v706 = vsub.f32 %v696, %v704
        %v707 = vmul.f32 %v705, 1.442695
        %v708 = vpow.pop %v707
        %v709 = vmul.f32 %v706, 1.442695
        %v710 = vpow.pop %v709
        %v711 = vsel %vm546, %v708, 0.0
        %712 = vadd.xlane.f32.xlu0 %v711
        %v713 = vpop.xlane.xlu0 %712
        %v714 = vsel %vm546, %v710, 0.0
        %715 = vadd.xlane.f32.xlu0 %v714
        %v716 = vpop.xlane.xlu0 %715
        %v717 = vrcp.pop %v713
        %v718 = vmul.f32 %v713, %v717
        %v719 = vsub.f32 1.0, %v718
        %v720 = vmul.f32 %v717, %v719
        %v721 = vadd.f32 %v717, %v720
        %vm722 = vweird.f32 %v713
        %vm723 = vweird.f32 %v717
        %vm724 = vmor %vm722, %vm723
        %v725 = vsel %vm724, %v717, %v721
        %v726 = vand.u32 2147483647, %v713
        %vm727 = vcmp.eq.f32.partialorder %v726, 8.507059e+37
        %v728 = vand.u32 %v713, 2147483648
        %v729 = vor.u32 1.1754944e-38, %v728
        %v730 = vsel %vm727, %v729, %v725
        %v731 = vmul.f32 %v708, %v730
        %v732 = vrcp.pop %v716
        %v733 = vmul.f32 %v716, %v732
        %v734 = vsub.f32 1.0, %v733
        %v735 = vmul.f32 %v732, %v734
        %v736 = vadd.f32 %v732, %v735
        %vm737 = vweird.f32 %v716
        %vm738 = vweird.f32 %v732
        %vm739 = vmor %vm737, %vm738
        %v740 = vsel %vm739, %v732, %v736
        %v741 = vand.u32 2147483647, %v716
        %vm742 = vcmp.eq.f32.partialorder %v741, 8.507059e+37
        %v743 = vand.u32 %v716, 2147483648
        %v744 = vor.u32 1.1754944e-38, %v743
        %v745 = vsel %vm742, %v744, %v740
        %v746 = vmul.f32 %v710, %v745
        %v747 = vpack.c.bf16 %v731, %v731
        %v748 = vpack.c.bf16 %v746, %v746
        %749 = vrot.lane.b32.xlu0 %v599, 80
        %v750 = vpop.permute.xlu0 %749
        %v752 = vsel %vm602, %v747, 0
        %v755 = vsel %vm606, %v750, 0
        %757 = vmatpush.bf16.msra.mxu0 0
        %758 = vmatpush.bf16.msra.mxu0 0
        %759 = vmatpush.bf16.msra.mxu0 0
        %760 = vmatpush.bf16.msra.mxu0 0
        %761 = vmatpush.bf16.msra.mxu0 0
        %762 = vmatpush.bf16.msra.mxu0 0
        %763 = vmatpush.bf16.msra.mxu0 0
        %764 = vmatpush.bf16.msra.mxu0 %v755
        %765 = vmatmul.bf16.gmra.mxu0 %v752
        %v766 = vpop.f32.mrf.mxu0
        %v767 = vadd.f32 0.0, %v766
        %v768 = vpop.f32.mrf.mxu0
        %769 = vdwg.mxu0
        %770 = vrot.lane.b32.xlu0 %v625, 80
        %v771 = vpop.permute.xlu0 %770
        %v773 = vsel %vm602, %v748, 0
        %v776 = vsel %vm606, %v771, 0
        %778 = vmatpush.bf16.msra.mxu0 0
        %779 = vmatpush.bf16.msra.mxu0 0
        %780 = vmatpush.bf16.msra.mxu0 0
        %781 = vmatpush.bf16.msra.mxu0 0
        %782 = vmatpush.bf16.msra.mxu0 0
        %783 = vmatpush.bf16.msra.mxu0 0
        %784 = vmatpush.bf16.msra.mxu0 0
        %785 = vmatpush.bf16.msra.mxu0 %v776
        %786 = vmatmul.bf16.gmra.mxu0 %v773
        %v787 = vpop.f32.mrf.mxu0
        %v788 = vadd.f32 0.0, %v787
        %v789 = vpop.f32.mrf.mxu0
        %790 = vdwg.mxu0
        %793 = vst [vmem:[#allocation1] ss:$2 sm:$0xff] %v620
        %s794 = scalar_lea.vmem [#allocation1], 1
        %795 = vst [vmem:[%s794] ss:$2 sm:$0xff] %v644
        %v796 = vld.sshfl [vmem:[#allocation1] sm:$0xff pattern:$0x75316420]
        %800 = vst [vmem:[#allocation1] ss:$2 sm:$0xff] %v767
        %s801 = scalar_lea.vmem [#allocation1], 1
        %802 = vst [vmem:[%s801] ss:$2 sm:$0xff] %v788
        %v803 = vld.sshfl [vmem:[#allocation1] sm:$0xff pattern:$0x75316420]
        %804 = vrot.lane.b32.xlu0 %v803, 16
        %v805 = vpop.permute.xlu0 %804
        %v807 = vsel %vm507, %v796, %v805
        %v808 = vld [vmem:[%s4] sm:$0xf]
        %v809 = vld [vmem:[%s4 + $0x4] sm:$0xf]
        %v810 = vld [vmem:[%s4 + $0x8] sm:$0xf]
        %v811 = vld [vmem:[%s4 + $0xc] sm:$0xf]
        %v812 = vpack.c.bf16 %v807, %v807
        %v817 = vunpack.c.l.b16 %v808
        %v818 = vunpack.c.l.b16 %v809
        %v819 = vunpack.c.l.b16 %v810
        %v820 = vunpack.c.l.b16 %v811
        %v821 = vpack.c.b16 %v818, %v817
        %v822 = vpack.c.b16 %v820, %v819
        %v826 = vsel %vm419, %v812, 0
        %828 = vmatpush.bf16.msra.mxu0 0
        %829 = vmatpush.bf16.msra.mxu0 0
        %830 = vmatpush.bf16.msra.mxu0 0
        %831 = vmatpush.bf16.msra.mxu0 0
        %832 = vmatpush.bf16.msra.mxu0 0
        %833 = vmatpush.bf16.msra.mxu0 0
        %834 = vmatpush.bf16.msra.mxu0 %v822
        %835 = vmatpush.bf16.msra.mxu0 %v821
        %836 = vmatmul.bf16.gmra.mxu0 %v826
        %v837 = vpop.f32.mrf.mxu0
        %v838 = vadd.f32 0.0, %v837
        %v839 = vpop.f32.mrf.mxu0
        %840 = vdwg.mxu0
        %v841 = vadd.f32 %v417, %v838
        %v842 = vmul.f32 %v841, %v841
        %v843 = vsel %vm419, %v842, 0.0
        %844 = vadd.xlane.f32.xlu0 %v843
        %v845 = vpop.xlane.xlu0 %844
        %v846 = vmul.f32 %v845, %v429
        %v847 = vadd.f32 %v846, 1e-06
        %v848 = vrsqrt.pop %v847
        %v849 = vmul.f32 %v848, %v847
        %v850 = vmul.f32 %v849, %v848
        %v851 = vmul.f32 0.5, %v850
        %v852 = vsub.f32 1.5, %v851
        %v853 = vmul.f32 %v848, %v852
        %vm854 = vweird.f32 %v847
        %vm855 = vweird.f32 %v848
        %vm856 = vmor %vm854, %vm855
        %v857 = vsel %vm856, %v848, %v853
        %v858 = vmul.f32 %v841, %v857
        %v859 = vld [vmem:[%s5] sm:$0xf]
        %v860 = vld [vmem:[%s5 + $0x4] sm:$0xf]
        %v861 = vld [vmem:[%s5 + $0x8] sm:$0xf]
        %v862 = vld [vmem:[%s5 + $0xc] sm:$0xf]
        %v863 = vpack.c.bf16 %v858, %v858
        %v868 = vunpack.c.l.b16 %v859
        %v869 = vunpack.c.l.b16 %v860
        %v870 = vunpack.c.l.b16 %v861
        %v871 = vunpack.c.l.b16 %v862
        %v872 = vpack.c.b16 %v869, %v868
        %v873 = vpack.c.b16 %v871, %v870
        %v877 = vsel %vm419, %v863, 0
        %879 = vmatpush.bf16.msra.mxu0 0
        %880 = vmatpush.bf16.msra.mxu0 0
        %881 = vmatpush.bf16.msra.mxu0 0
        %882 = vmatpush.bf16.msra.mxu0 0
        %883 = vmatpush.bf16.msra.mxu0 0
        %884 = vmatpush.bf16.msra.mxu0 0
        %885 = vmatpush.bf16.msra.mxu0 %v873
        %886 = vmatpush.bf16.msra.mxu0 %v872
        %887 = vmatmul.bf16.gmra.mxu0 %v877
        %v888 = vpop.f32.mrf.mxu0
        %v889 = vadd.f32 0.0, %v888
        %v890 = vpop.f32.mrf.mxu0
        %891 = vdwg.mxu0
        %v892 = vld [vmem:[%s1] sm:$0xff]
        %v893 = vld [vmem:[%s1 + $0x8] sm:$0xff]
        %v895 = vrot.slane %v889, 4
        %v897 = vpack.c.bf16 %v889, %v889
        %v898 = vpack.c.bf16 %v895, %v895
        %v899 = vpack.c.bf16 %v892, %v892
        %v900 = vpack.c.bf16 %v893, %v893
        %v902 = vsel %vm507, %v897, 0
        %v905 = vsel %vm507, %v899, 0
        %907 = vmatpush.bf16.xpose.msra.mxu0 0
        %908 = vmatpush.bf16.xpose.msra.mxu0 0
        %909 = vmatpush.bf16.xpose.msra.mxu0 0
        %910 = vmatpush.bf16.xpose.msra.mxu0 0
        %911 = vmatpush.bf16.xpose.msra.mxu0 0
        %912 = vmatpush.bf16.xpose.msra.mxu0 0
        %913 = vmatpush.bf16.xpose.msra.mxu0 0
        %914 = vmatpush.bf16.xpose.msra.mxu0 %v905
        %915 = vmatmul.bf16.gmra.mxu0 %v902
        %v916 = vpop.f32.mrf.mxu0
        %v917 = vadd.f32 0.0, %v916
        %v918 = vpop.f32.mrf.mxu0
        %919 = vdwg.mxu0
        %v921 = vsel %vm507, %v898, 0
        %v924 = vsel %vm507, %v900, 0
        %926 = vmatpush.bf16.xpose.msra.mxu0 0
        %927 = vmatpush.bf16.xpose.msra.mxu0 0
        %928 = vmatpush.bf16.xpose.msra.mxu0 0
        %929 = vmatpush.bf16.xpose.msra.mxu0 0
        %930 = vmatpush.bf16.xpose.msra.mxu0 0
        %931 = vmatpush.bf16.xpose.msra.mxu0 0
        %932 = vmatpush.bf16.xpose.msra.mxu0 0
        %933 = vmatpush.bf16.xpose.msra.mxu0 %v924
        %934 = vmatmul.bf16.gmra.mxu0 %v921
        %v935 = vpop.f32.mrf.mxu0
        %v936 = vadd.f32 0.0, %v935
        %v937 = vpop.f32.mrf.mxu0
        %938 = vdwg.mxu0
        %vm939 = vcmask 60416
        %v940 = vsel %vm939, %v917, -inf
        %941 = vmax.xlane.f32.xlu0 %v940
        %v942 = vpop.xlane.xlu0 %941
        %v943 = vsel %vm939, %v936, -inf
        %944 = vmax.xlane.f32.xlu0 %v943
        %v945 = vpop.xlane.xlu0 %944
        %v946 = vsub.f32 %v917, %v942
        %v947 = vsub.f32 %v936, %v945
        %v948 = vmul.f32 %v946, 1.442695
        %v949 = vpow.pop %v948
        %v950 = vmul.f32 %v947, 1.442695
        %v951 = vpow.pop %v950
        %v952 = vsel %vm939, %v949, 0.0
        %953 = vadd.xlane.f32.xlu0 %v952
        %v954 = vpop.xlane.xlu0 %953
        %v955 = vsel %vm939, %v951, 0.0
        %956 = vadd.xlane.f32.xlu0 %v955
        %v957 = vpop.xlane.xlu0 %956
        %v958 = vrcp.pop %v954
        %v959 = vmul.f32 %v954, %v958
        %v960 = vsub.f32 1.0, %v959
        %v961 = vmul.f32 %v958, %v960
        %v962 = vadd.f32 %v958, %v961
        %vm963 = vweird.f32 %v954
        %vm964 = vweird.f32 %v958
        %vm965 = vmor %vm963, %vm964
        %v966 = vsel %vm965, %v958, %v962
        %v967 = vand.u32 2147483647, %v954
        %vm968 = vcmp.eq.f32.partialorder %v967, 8.507059e+37
        %v969 = vand.u32 %v954, 2147483648
        %v970 = vor.u32 1.1754944e-38, %v969
        %v971 = vsel %vm968, %v970, %v966
        %v972 = vmul.f32 %v949, %v971
        %v973 = vrcp.pop %v957
        %v974 = vmul.f32 %v957, %v973
        %v975 = vsub.f32 1.0, %v974
        %v976 = vmul.f32 %v973, %v975
        %v977 = vadd.f32 %v973, %v976
        %vm978 = vweird.f32 %v957
        %vm979 = vweird.f32 %v973
        %vm980 = vmor %vm978, %vm979
        %v981 = vsel %vm980, %v973, %v977
        %v982 = vand.u32 2147483647, %v957
        %vm983 = vcmp.eq.f32.partialorder %v982, 8.507059e+37
        %v984 = vand.u32 %v957, 2147483648
        %v985 = vor.u32 1.1754944e-38, %v984
        %v986 = vsel %vm983, %v985, %v981
        %v987 = vmul.f32 %v951, %v986
        %v988 = vpack.c.bf16 %v972, %v972
        %v989 = vpack.c.bf16 %v987, %v987
        %v991 = vunpack.c.l.b16 %v899
        %v992 = vpack.c.b16 %v991, %v991
        %993 = vrot.lane.b32.xlu0 %v992, 96
        %v994 = vpop.permute.xlu0 %993
        %vm995 = vcmask 64512
        %v997 = vsel %vm995, %v988, 0
        %vm999 = vcmask 1043456
        %v1001 = vsel %vm999, %v994, 0
        %1003 = vmatpush.bf16.msra.mxu0 0
        %1004 = vmatpush.bf16.msra.mxu0 0
        %1005 = vmatpush.bf16.msra.mxu0 0
        %1006 = vmatpush.bf16.msra.mxu0 0
        %1007 = vmatpush.bf16.msra.mxu0 0
        %1008 = vmatpush.bf16.msra.mxu0 0
        %1009 = vmatpush.bf16.msra.mxu0 0
        %1010 = vmatpush.bf16.msra.mxu0 %v1001
        %1011 = vmatmul.bf16.gmra.mxu0 %v997
        %v1012 = vpop.f32.mrf.mxu0
        %v1013 = vadd.f32 0.0, %v1012
        %v1014 = vpop.f32.mrf.mxu0
        %1015 = vdwg.mxu0
        %v1017 = vunpack.c.l.b16 %v900
        %v1018 = vpack.c.b16 %v1017, %v1017
        %1019 = vrot.lane.b32.xlu0 %v1018, 96
        %v1020 = vpop.permute.xlu0 %1019
        %v1022 = vsel %vm995, %v989, 0
        %v1025 = vsel %vm999, %v1020, 0
        %1027 = vmatpush.bf16.msra.mxu0 0
        %1028 = vmatpush.bf16.msra.mxu0 0
        %1029 = vmatpush.bf16.msra.mxu0 0
        %1030 = vmatpush.bf16.msra.mxu0 0
        %1031 = vmatpush.bf16.msra.mxu0 0
        %1032 = vmatpush.bf16.msra.mxu0 0
        %1033 = vmatpush.bf16.msra.mxu0 0
        %1034 = vmatpush.bf16.msra.mxu0 %v1025
        %1035 = vmatmul.bf16.gmra.mxu0 %v1022
        %v1036 = vpop.f32.mrf.mxu0
        %v1037 = vadd.f32 0.0, %v1036
        %v1038 = vpop.f32.mrf.mxu0
        %1039 = vdwg.mxu0
        %v1041 = vunpack.c.l.b16 %v897
        %v1042 = vpack.c.b16 %v1041, %v1041
        %1043 = vrot.lane.b32.xlu0 %v1042, 112
        %v1044 = vpop.permute.xlu0 %1043
        %1045 = vrot.lane.b32.xlu0 %v992, 112
        %v1046 = vpop.permute.xlu0 %1045
        %v1048 = vsel %vm507, %v1044, 0
        %v1051 = vsel %vm507, %v1046, 0
        %1053 = vmatpush.bf16.xpose.msra.mxu0 0
        %1054 = vmatpush.bf16.xpose.msra.mxu0 0
        %1055 = vmatpush.bf16.xpose.msra.mxu0 0
        %1056 = vmatpush.bf16.xpose.msra.mxu0 0
        %1057 = vmatpush.bf16.xpose.msra.mxu0 0
        %1058 = vmatpush.bf16.xpose.msra.mxu0 0
        %1059 = vmatpush.bf16.xpose.msra.mxu0 0
        %1060 = vmatpush.bf16.xpose.msra.mxu0 %v1051
        %1061 = vmatmul.bf16.gmra.mxu0 %v1048
        %v1062 = vpop.f32.mrf.mxu0
        %v1063 = vadd.f32 0.0, %v1062
        %v1064 = vpop.f32.mrf.mxu0
        %1065 = vdwg.mxu0
        %v1067 = vunpack.c.l.b16 %v898
        %v1068 = vpack.c.b16 %v1067, %v1067
        %1069 = vrot.lane.b32.xlu0 %v1068, 112
        %v1070 = vpop.permute.xlu0 %1069
        %1071 = vrot.lane.b32.xlu0 %v1018, 112
        %v1072 = vpop.permute.xlu0 %1071
        %v1074 = vsel %vm507, %v1070, 0
        %v1077 = vsel %vm507, %v1072, 0
        %1079 = vmatpush.bf16.xpose.msra.mxu0 0
        %1080 = vmatpush.bf16.xpose.msra.mxu0 0
        %1081 = vmatpush.bf16.xpose.msra.mxu0 0
        %1082 = vmatpush.bf16.xpose.msra.mxu0 0
        %1083 = vmatpush.bf16.xpose.msra.mxu0 0
        %1084 = vmatpush.bf16.xpose.msra.mxu0 0
        %1085 = vmatpush.bf16.xpose.msra.mxu0 0
        %1086 = vmatpush.bf16.xpose.msra.mxu0 %v1077
        %1087 = vmatmul.bf16.gmra.mxu0 %v1074
        %v1088 = vpop.f32.mrf.mxu0
        %v1089 = vadd.f32 0.0, %v1088
        %v1090 = vpop.f32.mrf.mxu0
        %1091 = vdwg.mxu0
        %v1092 = vsel %vm939, %v1063, -inf
        %1093 = vmax.xlane.f32.xlu0 %v1092
        %v1094 = vpop.xlane.xlu0 %1093
        %v1095 = vsel %vm939, %v1089, -inf
        %1096 = vmax.xlane.f32.xlu0 %v1095
        %v1097 = vpop.xlane.xlu0 %1096
        %v1098 = vsub.f32 %v1063, %v1094
        %v1099 = vsub.f32 %v1089, %v1097
        %v1100 = vmul.f32 %v1098, 1.442695
        %v1101 = vpow.pop %v1100
        %v1102 = vmul.f32 %v1099, 1.442695
        %v1103 = vpow.pop %v1102
        %v1104 = vsel %vm939, %v1101, 0.0
        %1105 = vadd.xlane.f32.xlu0 %v1104
        %v1106 = vpop.xlane.xlu0 %1105
        %v1107 = vsel %vm939, %v1103, 0.0
        %1108 = vadd.xlane.f32.xlu0 %v1107
        %v1109 = vpop.xlane.xlu0 %1108
        %v1110 = vrcp.pop %v1106
        %v1111 = vmul.f32 %v1106, %v1110
        %v1112 = vsub.f32 1.0, %v1111
        %v1113 = vmul.f32 %v1110, %v1112
        %v1114 = vadd.f32 %v1110, %v1113
        %vm1115 = vweird.f32 %v1106
        %vm1116 = vweird.f32 %v1110
        %vm1117 = vmor %vm1115, %vm1116
        %v1118 = vsel %vm1117, %v1110, %v1114
        %v1119 = vand.u32 2147483647, %v1106
        %vm1120 = vcmp.eq.f32.partialorder %v1119, 8.507059e+37
        %v1121 = vand.u32 %v1106, 2147483648
        %v1122 = vor.u32 1.1754944e-38, %v1121
        %v1123 = vsel %vm1120, %v1122, %v1118
        %v1124 = vmul.f32 %v1101, %v1123
        %v1125 = vrcp.pop %v1109
        %v1126 = vmul.f32 %v1109, %v1125
        %v1127 = vsub.f32 1.0, %v1126
        %v1128 = vmul.f32 %v1125, %v1127
        %v1129 = vadd.f32 %v1125, %v1128
        %vm1130 = vweird.f32 %v1109
        %vm1131 = vweird.f32 %v1125
        %vm1132 = vmor %vm1130, %vm1131
        %v1133 = vsel %vm1132, %v1125, %v1129
        %v1134 = vand.u32 2147483647, %v1109
        %vm1135 = vcmp.eq.f32.partialorder %v1134, 8.507059e+37
        %v1136 = vand.u32 %v1109, 2147483648
        %v1137 = vor.u32 1.1754944e-38, %v1136
        %v1138 = vsel %vm1135, %v1137, %v1133
        %v1139 = vmul.f32 %v1103, %v1138
        %v1140 = vpack.c.bf16 %v1124, %v1124
        %v1141 = vpack.c.bf16 %v1139, %v1139
        %1142 = vrot.lane.b32.xlu0 %v992, 80
        %v1143 = vpop.permute.xlu0 %1142
        %v1145 = vsel %vm995, %v1140, 0
        %v1148 = vsel %vm999, %v1143, 0
        %1150 = vmatpush.bf16.msra.mxu0 0
        %1151 = vmatpush.bf16.msra.mxu0 0
        %1152 = vmatpush.bf16.msra.mxu0 0
        %1153 = vmatpush.bf16.msra.mxu0 0
        %1154 = vmatpush.bf16.msra.mxu0 0
        %1155 = vmatpush.bf16.msra.mxu0 0
        %1156 = vmatpush.bf16.msra.mxu0 0
        %1157 = vmatpush.bf16.msra.mxu0 %v1148
        %1158 = vmatmul.bf16.gmra.mxu0 %v1145
        %v1159 = vpop.f32.mrf.mxu0
        %v1160 = vadd.f32 0.0, %v1159
        %v1161 = vpop.f32.mrf.mxu0
        %1162 = vdwg.mxu0
        %1163 = vrot.lane.b32.xlu0 %v1018, 80
        %v1164 = vpop.permute.xlu0 %1163
        %v1166 = vsel %vm995, %v1141, 0
        %v1169 = vsel %vm999, %v1164, 0
        %1171 = vmatpush.bf16.msra.mxu0 0
        %1172 = vmatpush.bf16.msra.mxu0 0
        %1173 = vmatpush.bf16.msra.mxu0 0
        %1174 = vmatpush.bf16.msra.mxu0 0
        %1175 = vmatpush.bf16.msra.mxu0 0
        %1176 = vmatpush.bf16.msra.mxu0 0
        %1177 = vmatpush.bf16.msra.mxu0 0
        %1178 = vmatpush.bf16.msra.mxu0 %v1169
        %1179 = vmatmul.bf16.gmra.mxu0 %v1166
        %v1180 = vpop.f32.mrf.mxu0
        %v1181 = vadd.f32 0.0, %v1180
        %v1182 = vpop.f32.mrf.mxu0
        %1183 = vdwg.mxu0
        %1186 = vst [vmem:[#allocation1] ss:$2 sm:$0xff] %v1013
        %s1187 = scalar_lea.vmem [#allocation1], 1
        %1188 = vst [vmem:[%s1187] ss:$2 sm:$0xff] %v1037
        %v1189 = vld.sshfl [vmem:[#allocation1] sm:$0xff pattern:$0x75316420]
        %1193 = vst [vmem:[#allocation1] ss:$2 sm:$0xff] %v1160
        %s1194 = scalar_lea.vmem [#allocation1], 1
        %1195 = vst [vmem:[%s1194] ss:$2 sm:$0xff] %v1181
        %v1196 = vld.sshfl [vmem:[#allocation1] sm:$0xff pattern:$0x75316420]
        %1197 = vrot.lane.b32.xlu0 %v1196, 16
        %v1198 = vpop.permute.xlu0 %1197
        %v1200 = vsel %vm507, %v1189, %v1198
        %v1201 = vld [vmem:[%s6] sm:$0xf]
        %v1202 = vld [vmem:[%s6 + $0x4] sm:$0xf]
        %v1203 = vld [vmem:[%s6 + $0x8] sm:$0xf]
        %v1204 = vld [vmem:[%s6 + $0xc] sm:$0xf]
        %v1205 = vpack.c.bf16 %v1200, %v1200
        %v1210 = vunpack.c.l.b16 %v1201
        %v1211 = vunpack.c.l.b16 %v1202
        %v1212 = vunpack.c.l.b16 %v1203
        %v1213 = vunpack.c.l.b16 %v1204
        %v1214 = vpack.c.b16 %v1211, %v1210
        %v1215 = vpack.c.b16 %v1213, %v1212
        %v1219 = vsel %vm419, %v1205, 0
        %1221 = vmatpush.bf16.msra.mxu0 0
        %1222 = vmatpush.bf16.msra.mxu0 0
        %1223 = vmatpush.bf16.msra.mxu0 0
        %1224 = vmatpush.bf16.msra.mxu0 0
        %1225 = vmatpush.bf16.msra.mxu0 0
        %1226 = vmatpush.bf16.msra.mxu0 0
        %1227 = vmatpush.bf16.msra.mxu0 %v1215
        %1228 = vmatpush.bf16.msra.mxu0 %v1214
        %1229 = vmatmul.bf16.gmra.mxu0 %v1219
        %v1230 = vpop.f32.mrf.mxu0
        %v1231 = vadd.f32 0.0, %v1230
        %v1232 = vpop.f32.mrf.mxu0
        %1233 = vdwg.mxu0
        %v1234 = vadd.f32 %v841, %v1231
        %v1235 = vmul.f32 %v1234, %v1234
        %v1236 = vsel %vm419, %v1235, 0.0
        %1237 = vadd.xlane.f32.xlu0 %v1236
        %v1238 = vpop.xlane.xlu0 %1237
        %v1239 = vmul.f32 %v1238, %v429
        %v1240 = vadd.f32 %v1239, 1e-06
        %v1241 = vrsqrt.pop %v1240
        %v1242 = vmul.f32 %v1241, %v1240
        %v1243 = vmul.f32 %v1242, %v1241
        %v1244 = vmul.f32 0.5, %v1243
        %v1245 = vsub.f32 1.5, %v1244
        %v1246 = vmul.f32 %v1241, %v1245
        %vm1247 = vweird.f32 %v1240
        %vm1248 = vweird.f32 %v1241
        %vm1249 = vmor %vm1247, %vm1248
        %v1250 = vsel %vm1249, %v1241, %v1246
        %v1251 = vmul.f32 %v1234, %v1250
        %v1252 = vld [vmem:[%s7] sm:$0xf]
        %v1253 = vld [vmem:[%s7 + $0x4] sm:$0xf]
        %v1254 = vld [vmem:[%s7 + $0x8] sm:$0xf]
        %v1255 = vld [vmem:[%s7 + $0xc] sm:$0xf]
        %v1256 = vpack.c.bf16 %v1251, %v1251
        %v1261 = vunpack.c.l.b16 %v1252
        %v1262 = vunpack.c.l.b16 %v1253
        %v1263 = vunpack.c.l.b16 %v1254
        %v1264 = vunpack.c.l.b16 %v1255
        %v1265 = vpack.c.b16 %v1262, %v1261
        %v1266 = vpack.c.b16 %v1264, %v1263
        %v1270 = vsel %vm419, %v1256, 0
        %1272 = vmatpush.bf16.msra.mxu0 0
        %1273 = vmatpush.bf16.msra.mxu0 0
        %1274 = vmatpush.bf16.msra.mxu0 0
        %1275 = vmatpush.bf16.msra.mxu0 0
        %1276 = vmatpush.bf16.msra.mxu0 0
        %1277 = vmatpush.bf16.msra.mxu0 0
        %1278 = vmatpush.bf16.msra.mxu0 %v1266
        %1279 = vmatpush.bf16.msra.mxu0 %v1265
        %1280 = vmatmul.bf16.gmra.mxu0 %v1270
        %v1281 = vpop.f32.mrf.mxu0
        %v1282 = vadd.f32 0.0, %v1281
        %v1283 = vpop.f32.mrf.mxu0
        %1284 = vdwg.mxu0
        %v1285 = vmax.f32 %v1282, 0.0
        %v1286 = vld [vmem:[%s8] sm:$0xf]
        %v1287 = vld [vmem:[%s8 + $0x4] sm:$0xf]
        %v1288 = vld [vmem:[%s8 + $0x8] sm:$0xf]
        %v1289 = vld [vmem:[%s8 + $0xc] sm:$0xf]
        %v1290 = vld [vmem:[%s8 + $0x10] sm:$0xf]
        %v1291 = vld [vmem:[%s8 + $0x14] sm:$0xf]
        %v1292 = vld [vmem:[%s8 + $0x18] sm:$0xf]
        %v1293 = vld [vmem:[%s8 + $0x1c] sm:$0xf]
        %v1294 = vld [vmem:[%s8 + $0x20] sm:$0xf]
        %v1295 = vld [vmem:[%s8 + $0x24] sm:$0xf]
        %v1296 = vld [vmem:[%s8 + $0x28] sm:$0xf]
        %v1297 = vld [vmem:[%s8 + $0x2c] sm:$0xf]
        %v1298 = vld [vmem:[%s8 + $0x30] sm:$0xf]
        %v1299 = vld [vmem:[%s8 + $0x34] sm:$0xf]
        %v1300 = vld [vmem:[%s8 + $0x38] sm:$0xf]
        %v1301 = vld [vmem:[%s8 + $0x3c] sm:$0xf]
        %v1302 = vpack.c.bf16 %v1285, %v1285
        %v1319 = vunpack.c.l.b16 %v1286
        %v1320 = vunpack.c.l.b16 %v1287
        %v1321 = vunpack.c.l.b16 %v1288
        %v1322 = vunpack.c.l.b16 %v1289
        %v1323 = vunpack.c.l.b16 %v1290
        %v1324 = vunpack.c.l.b16 %v1291
        %v1325 = vunpack.c.l.b16 %v1292
        %v1326 = vunpack.c.l.b16 %v1293
        %v1327 = vunpack.c.l.b16 %v1294
        %v1328 = vunpack.c.l.b16 %v1295
        %v1329 = vunpack.c.l.b16 %v1296
        %v1330 = vunpack.c.l.b16 %v1297
        %v1331 = vunpack.c.l.b16 %v1298
        %v1332 = vunpack.c.l.b16 %v1299
        %v1333 = vunpack.c.l.b16 %v1300
        %v1334 = vunpack.c.l.b16 %v1301
        %v1335 = vpack.c.b16 %v1320, %v1319
        %v1336 = vpack.c.b16 %v1322, %v1321
        %v1337 = vpack.c.b16 %v1324, %v1323
        %v1338 = vpack.c.b16 %v1326, %v1325
        %v1339 = vpack.c.b16 %v1328, %v1327
        %v1340 = vpack.c.b16 %v1330, %v1329
        %v1341 = vpack.c.b16 %v1332, %v1331
        %v1342 = vpack.c.b16 %v1334, %v1333
        %1351 = vmatpush.bf16.msra.mxu0 %v1342
        %1352 = vmatpush.bf16.msra.mxu0 %v1341
        %1353 = vmatpush.bf16.msra.mxu0 %v1340
        %1354 = vmatpush.bf16.msra.mxu0 %v1339
        %1355 = vmatpush.bf16.msra.mxu0 %v1338
        %1356 = vmatpush.bf16.msra.mxu0 %v1337
        %1357 = vmatpush.bf16.msra.mxu0 %v1336
        %1358 = vmatpush.bf16.msra.mxu0 %v1335
        %1359 = vmatmul.bf16.gmra.mxu0 %v1302
        %v1360 = vpop.f32.mrf.mxu0
        %v1361 = vadd.f32 0.0, %v1360
        %v1362 = vpop.f32.mrf.mxu0
        %1363 = vdwg.mxu0
        %v1364 = vadd.f32 %v1234, %v1361
        %v1365 = vlaneseq
        %v1366 = vshrl.u32 %v1365, 7
        %v1367 = vlaneseq
        %v1368 = vand.u32 %v1367, 127
        %v1369 = vmul.u32 %v1366, 4
        %v1370 = vstv %s27
        %v1371 = vadd.s32 %v1369, %v1370
        %vm1372 = vcmp.eq.s32.totalorder %v1368, %v1371
        %v1373 = vsel %vm1372, 1, 0
        %v1374 = vcvt.s32.f32 %v1373
        %v1376 = vsel %vm995, %v1374, 0
        %1378 = vmatpush.msra.mxu0 0.0
        %1379 = vmatpush.msra.mxu0 0.0
        %1380 = vmatpush.msra.mxu0 0.0
        %1381 = vmatpush.msra.mxu0 0.0
        %1382 = vmatpush.msra.mxu0 0.0
        %1383 = vmatpush.msra.mxu0 0.0
        %1384 = vmatpush.msra.mxu0 0.0
        %1385 = vmatpush.msra.mxu0 0.0
        %1386 = vmatpush.msra.mxu0 0.0
        %1387 = vmatpush.msra.mxu0 0.0
        %1388 = vmatpush.msra.mxu0 0.0
        %1389 = vmatpush.msra.mxu0 0.0
        %1390 = vmatpush.msra.mxu0 0.0
        %1391 = vmatpush.msra.mxu0 0.0
        %1392 = vmatpush.msra.mxu0 0.0
        %1393 = vmatpush.msra.mxu0 %v1364
        %1394 = vmatmul.f32.gmra.mxu0 %v1376
        %v1395 = vpop.f32.mrf.mxu0
        %v1396 = vadd.f32 0.0, %v1395
        %1397 = vdwg.mxu0
        %v1398 = vmul.f32 %v1396, %v1396
        %vm1399 = vcmask 254976
        %v1400 = vsel %vm1399, %v1398, 0.0
        %1401 = vadd.xlane.f32.xlu0 %v1400
        %v1402 = vpop.xlane.xlu0 %1401
        %v1403 = vmul.f32 %v1402, %v429
        %v1404 = vadd.f32 %v1403, 1e-06
        %v1405 = vrsqrt.pop %v1404
        %v1406 = vmul.f32 %v1405, %v1404
        %v1407 = vmul.f32 %v1406, %v1405
        %v1408 = vmul.f32 0.5, %v1407
        %v1409 = vsub.f32 1.5, %v1408
        %v1410 = vmul.f32 %v1405, %v1409
        %vm1411 = vweird.f32 %v1404
        %vm1412 = vweird.f32 %v1405
        %vm1413 = vmor %vm1411, %vm1412
        %v1414 = vsel %vm1413, %v1405, %v1410
        %v1415 = vmul.f32 %v1396, %v1414
        %v1416 = vld [vmem:[%s9] sm:$0xf]
        %v1417 = vld [vmem:[%s9 + $0x4] sm:$0xf]
        %v1418 = vld [vmem:[%s9 + $0x8] sm:$0xf]
        %v1419 = vld [vmem:[%s9 + $0xc] sm:$0xf]
        %v1420 = vpack.c.bf16 %v1415, %v1415
        %v1421 = vld [vmem:[%s10] sm:$0x1]
        %v1423 = vperm.slane %v1421, 0
        %v1429 = vunpack.c.l.b16 %v1416
        %v1430 = vunpack.c.l.b16 %v1417
        %v1431 = vunpack.c.l.b16 %v1418
        %v1432 = vunpack.c.l.b16 %v1419
        %v1433 = vpack.c.b16 %v1430, %v1429
        %v1434 = vpack.c.b16 %v1432, %v1431
        %v1438 = vsel %vm419, %v1420, 0
        %1440 = vmatpush.bf16.msra.mxu0 0
        %1441 = vmatpush.bf16.msra.mxu0 0
        %1442 = vmatpush.bf16.msra.mxu0 0
        %1443 = vmatpush.bf16.msra.mxu0 0
        %1444 = vmatpush.bf16.msra.mxu0 0
        %1445 = vmatpush.bf16.msra.mxu0 0
        %1446 = vmatpush.bf16.msra.mxu0 %v1434
        %1447 = vmatpush.bf16.msra.mxu0 %v1433
        %1448 = vmatmul.bf16.gmra.mxu0 %v1438
        %v1449 = vpop.f32.mrf.mxu0
        %v1450 = vadd.f32 %v1423, %v1449
        %v1451 = vpop.f32.mrf.mxu0
        %1452 = vdwg.mxu0
        %1453 = vst [vmem:[%s392] sm:$0x3] %v1450
        %v1454 = vsel %vm606, %v1450, -inf
        %1455 = vmax.xlane.f32.xlu0 %v1454
        %v1456 = vpop.xlane.xlu0 %1455
        %vm1457 = vcmp.eq.f32.partialorder %v1450, %v1456
        %v1458 = vsel %vm1457, %v1368, 128
        %v1459 = vsel %vm606, %v1458, 2147483647
        %v1460 = vand.u32 %v1459, 65535
        %v1461 = vshra.s32 %v1459, 16
        %v1462 = vcvt.s32.f32 %v1460
        %v1463 = vcvt.s32.f32 %v1461
        %1464 = vmin.xlane.f32.xlu0 %v1463
        %v1465 = vpop.xlane.xlu0 %1464
        %vm1466 = vcmp.eq.f32.partialorder %v1463, %v1465
        %v1467 = vsel %vm1466, %v1462, inf
        %1468 = vmin.xlane.f32.xlu0 %v1467
        %v1469 = vpop.xlane.xlu0 %1468
        %v1470 = vcvt.f32.s32 %v1469
        %v1471 = vcvt.f32.s32 %v1465
        %v1472 = vshll.u32 %v1471, 16
        %v1473 = vadd.s32 %v1472, %v1470
        %vm1474 = vcmask 1024
        %1475 = vst.msk [vmem:[%s402] sm:$0x3] %vm1474, %v1473
        %s1476 = sadd.s32 %s27, 1
        %p1477 = scmp.lt.s32.totalorder %s1476, 4
        // Predicated region
        $region69: #{forward.3} parent=63 // pred_check
          %p1478 = pneg %p1477
        $region70: #{forward.3} parent=63 // pred_check_branch
          %1480 = sbr.rel (%p1478) target = $region72
        $region71: #{forward.3} parent=63 // pred_region
          %vm1481 = vcmp.eq.s32.totalorder %v1368, %v1473
          %v1482 = vsel %vm1481, 1, 0
          %v1483 = vcvt.s32.f32 %v1482
          %v1484 = vld [vmem:[%s2] sm:$0xff]
          %v1485 = vld [vmem:[%s2 + $0x8] sm:$0xff]
          %v1486 = vld [vmem:[%s2 + $0x10] sm:$0xff]
          %v1487 = vld [vmem:[%s2 + $0x18] sm:$0xff]
          %v1488 = vld [vmem:[%s2 + $0x20] sm:$0xff]
          %v1489 = vld [vmem:[%s2 + $0x28] sm:$0xff]
          %v1490 = vld [vmem:[%s2 + $0x30] sm:$0xff]
          %v1491 = vld [vmem:[%s2 + $0x38] sm:$0xff]
          %v1492 = vld [vmem:[%s2 + $0x40] sm:$0xff]
          %v1493 = vld [vmem:[%s2 + $0x48] sm:$0xff]
          %v1494 = vld [vmem:[%s2 + $0x50] sm:$0xff]
          %v1495 = vld [vmem:[%s2 + $0x58] sm:$0xff]
          %v1496 = vld [vmem:[%s2 + $0x60] sm:$0xff]
          %v1497 = vld [vmem:[%s2 + $0x68] sm:$0xff]
          %v1498 = vld [vmem:[%s2 + $0x70] sm:$0xff]
          %v1499 = vld [vmem:[%s2 + $0x78] sm:$0xff]
          %1500 = vmatpush.msra.mxu0 %v1499
          %1501 = vmatpush.msra.mxu0 %v1498
          %1502 = vmatpush.msra.mxu0 %v1497
          %1503 = vmatpush.msra.mxu0 %v1496
          %1504 = vmatpush.msra.mxu0 %v1495
          %1505 = vmatpush.msra.mxu0 %v1494
          %1506 = vmatpush.msra.mxu0 %v1493
          %1507 = vmatpush.msra.mxu0 %v1492
          %1508 = vmatpush.msra.mxu0 %v1491
          %1509 = vmatpush.msra.mxu0 %v1490
          %1510 = vmatpush.msra.mxu0 %v1489
          %1511 = vmatpush.msra.mxu0 %v1488
          %1512 = vmatpush.msra.mxu0 %v1487
          %1513 = vmatpush.msra.mxu0 %v1486
          %1514 = vmatpush.msra.mxu0 %v1485
          %1515 = vmatpush.msra.mxu0 %v1484
          %1516 = vmatmul.f32.gmra.mxu0 %v1483
          %v1517 = vpop.f32.mrf.mxu0
          %v1518 = vadd.f32 0.0, %v1517
          %1519 = vdwg.mxu0
          %s1520 = scalar_lea.vmem [#allocation2], %s1476
          %vm1521 = vcmask 253952
          %1522 = vst.msk [vmem:[%s1520] sm:$0x1] %vm1521, %v1518
          %s1523 = sadd.s32 %s27, 5
          %s1524 = scalar_lea.vmem [#allocation2], %s1523
          %vm1525 = vcmask 254977
          %1526 = vst.msk [vmem:[%s1524 - $0x1] sm:$0x2] %vm1525, %v1518
        $region72: #{forward.3} parent=63 // pred_fallthru
          _
        %s1527 = sand.u32 %s266, 1
        %s1528 = scalar_lea.sflag [#allocation4], %s1527
        %s1529 = sand.u32 %s266, 1
        %s1530 = smul.addr %s1529, 2
        %s1531 = scalar_lea.vmem [#allocation3], %s1530
        %p1532 = scmp.lt.s32.totalorder %s27, 3
        %s1533 = scalar_select %p1532, %s27, 3
        %s1534 = smul.addr %s1533, 2
        %s1535 = scalar_lea.vmem %s12, %s1534
        // Predicated region
        $region73: #{forward.3} parent=63 // pred_check
          %p1536 = pneg %p276
        $region74: #{forward.3} parent=63 // pred_check_branch
          %1538 = sbr.rel (%p1536) target = $region76
        $region75: #{forward.3} parent=63 // pred_region
          %1540 = vsyncadd %s1528, 0
          %s1541 = smul.addr %s27, 2
          %s1542 = scalar_lea.hbm %s11, %s1541
          %s1544 = sshll.u32 %s1531, 4
          %s1545 = int_to_ptr.vmem [resolvable:$true] %s1544
          %s1546 = sshll.u32 %s1542, 4
          %s1547 = int_to_ptr.hbm [resolvable:$true] %s1546
          %1549 = dma.vmem_to_hbm [thread:$0]  %s1545, 32, %s1547, %s1528
        $region76: #{forward.3} parent=63 // pred_fallthru
          _
        // Predicated region
        $region77: #{forward.3} parent=63 // pred_check
          %p1550 = pneg %p302
        $region78: #{forward.3} parent=63 // pred_check_branch
          %1552 = sbr.rel (%p1550) target = $region80
        $region79: #{forward.3} parent=63 // pred_region
          _
        $region80: #{forward.3} parent=63 // pred_fallthru
          _
      $region64: #{forward.3} parent=5 // pred_fallthru
        _
      %p1553 = scmp.le.s32.totalorder 2, %s22
      // Predicated region
      $region81: #{forward.3} parent=5 // pred_check
        %p1554 = pneg %p1553
      $region82: #{forward.3} parent=5 // pred_check_branch
        %1556 = sbr.rel (%p1554) target = $region84
      $region83: #{forward.3} parent=5 // pred_region
        %s1557 = ssub.s32 %s22, 2
        // Predicated region
        $region85: #{forward.3} parent=83 // pred_check
          %p1558 = pneg %p282
        $region86: #{forward.3} parent=83 // pred_check_branch
          %1560 = sbr.rel (%p1558) target = $region88
        $region87: #{forward.3} parent=83 // pred_region
          %s1561 = sand.u32 %s267, 1
          %s1562 = scalar_lea.sflag [#allocation4], %s1561
          %s1563 = sand.u32 %s267, 1
          %s1564 = smul.addr %s1563, 2
          %s1565 = scalar_lea.vmem [#allocation3], %s1564
          %1567 = dma.done %s1562, 32
        $region88: #{forward.3} parent=83 // pred_fallthru
          _
        // Predicated region
        $region89: #{forward.3} parent=83 // pred_check
          %p1568 = pneg %p308
        $region90: #{forward.3} parent=83 // pred_check_branch
          %1570 = sbr.rel (%p1568) target = $region92
        $region91: #{forward.3} parent=83 // pred_region
          %p1571 = scmp.lt.s32.totalorder %s28, 3
          %s1572 = scalar_select %p1571, %s28, 3
          %s1573 = smul.addr %s1572, 2
          %s1574 = scalar_lea.vmem %s12, %s1573
        $region92: #{forward.3} parent=83 // pred_fallthru
          _
      $region84: #{forward.3} parent=5 // pred_fallthru
        _
    $region6: #{forward.3} parent=1 // loop_footer
      %s26 = sadd.s32 1, %s22
    $region7: #{forward.3} parent=1 // loop_footer_branch
      %21 = sbr.rel target = $region3
    $region8: #{forward.3} parent=1 // loop_exit
      _
    %1575 = vsyncpa [#allocation4], 1
    %s1576 = scalar_lea.sflag [#allocation4], 1
    %1577 = vsyncpa %s1576, 1

</llo_original>
